<compile_context>
chip_gen: v7x
topology: tpu7x:2x2x1
jax: 0.10.0
libtpu: 0.0.40
codegen_flags: <defaults>
</compile_context>

<pallas_src>
import functools
import math

import jax
import jax.numpy as jnp
from jax.experimental import pallas as pl
from jax.experimental.pallas import tpu as pltpu


# ----------------------------------------------------------------------------
# Tiling helpers.
# ----------------------------------------------------------------------------
def _pick_tm(hout, wout, m_target=512):
    """Row-tile size TM so each MXU call sees M = TM*Wout rows.

    Only row-block when Wout is a multiple of 16 (bf16 sublane tile) so the
    in-kernel (TM, Wout, Cin) -> (TM*Wout, Cin) collapse is pure tile
    re-indexing (no relayout); otherwise fall back to per-row (TM=1).
    """
    if wout % 16 != 0:
        return 1
    best = 1
    for tm in range(1, hout + 1):
        if hout % tm == 0 and tm * wout <= m_target:
            best = tm
    return best


def _vmem_limit(*nbytes):
    # Explicit scoped-VMEM budget: ~3x the live blocks (double-buffer + slack),
    # floored at 16 MiB, capped at 48 MiB so it also fits v7x's 64 MiB VMEM.
    need = 3 * sum(int(b) for b in nbytes) + (2 << 20)
    return int(min(max(need, 16 << 20), 48 << 20))


# ----------------------------------------------------------------------------
# Pallas conv kernels (NHWC, stride 1, bias, optional LeakyReLU).
# ----------------------------------------------------------------------------
def _conv_kernel(x_ref, w_ref, b_ref, o_ref, *, kh, kw, lrelu, slope):
    # x_ref: (1, Hp, Wp, Cin)    padded image (bf16), resident across row tiles
    # w_ref: (kh*kw, Cin, Cout)  bf16 taps
    # b_ref: (1, Cout)           f32
    # o_ref: (1, TM, Wout, Cout) current output row tile
    tm = o_ref.shape[1]
    wout = o_ref.shape[2]
    cin = x_ref.shape[3]
    cout = o_ref.shape[3]
    r0 = pl.multiple_of(pl.program_id(1) * tm, tm)
    bias = b_ref[...]                               # hoisted: one load per tile
    acc = jnp.zeros((tm * wout, cout), jnp.float32)
    for t in range(kh * kw):                        # static unroll over taps
        dy, dx = t // kw, t % kw
        patch = x_ref[0, pl.ds(r0 + dy, tm), pl.ds(dx, wout), :]
        acc = acc + jnp.dot(patch.reshape(tm * wout, cin), w_ref[t],
                            preferred_element_type=jnp.float32)
    acc = acc + bias
    if lrelu:
        acc = jnp.where(acc >= 0, acc, slope * acc)
    o_ref[...] = acc.reshape(1, tm, wout, cout).astype(o_ref.dtype)


def _conv_concat_kernel(xa_ref, xb_ref, wa_ref, wb_ref, b_ref, o_ref, *,
                        kh, kw, lrelu, slope):
    # conv(concat([xa, xb], channel)) fused: two matmuls per tap, no HBM concat.
    tm = o_ref.shape[1]
    wout = o_ref.shape[2]
    ca = xa_ref.shape[3]
    cb = xb_ref.shape[3]
    cout = o_ref.shape[3]
    r0 = pl.multiple_of(pl.program_id(1) * tm, tm)
    bias = b_ref[...]
    acc = jnp.zeros((tm * wout, cout), jnp.float32)
    for t in range(kh * kw):
        dy, dx = t // kw, t % kw
        pa = xa_ref[0, pl.ds(r0 + dy, tm), pl.ds(dx, wout), :]
        acc = acc + jnp.dot(pa.reshape(tm * wout, ca), wa_ref[t],
                            preferred_element_type=jnp.float32)
        pb = xb_ref[0, pl.ds(r0 + dy, tm), pl.ds(dx, wout), :]
        acc = acc + jnp.dot(pb.reshape(tm * wout, cb), wb_ref[t],
                            preferred_element_type=jnp.float32)
    acc = acc + bias
    if lrelu:
        acc = jnp.where(acc >= 0, acc, slope * acc)
    o_ref[...] = acc.reshape(1, tm, wout, cout).astype(o_ref.dtype)


def conv2d_pallas(x, weight, bias, *, ksize, pad, lrelu, slope=0.2,
                  out_dtype=jnp.bfloat16):
    """NHWC stride-1 conv (+bias, optional LeakyReLU); bf16 MXU, f32 accum."""
    n, h, w, cin = x.shape
    cout = weight.shape[-1]
    x = x.astype(jnp.bfloat16)
    if pad:
        # TODO(synk): keep activations stored with a 1-px halo between layers
        # instead of a full-array jnp.pad copy before every conv.
        x = jnp.pad(x, ((0, 0), (pad, pad), (pad, pad), (0, 0)))
    hp, wp = h + 2 * pad, w + 2 * pad
    hout, wout = hp - ksize + 1, wp - ksize + 1
    tm = _pick_tm(hout, wout)
    rt = hout // tm
    weight = weight.astype(jnp.bfloat16)
    bias2 = bias.reshape(1, cout).astype(jnp.float32)
    kernel = functools.partial(_conv_kernel, kh=ksize, kw=ksize,
                               lrelu=lrelu, slope=slope)
    vmem = _vmem_limit(hp * wp * cin * 2, ksize * ksize * cin * cout * 2,
                       tm * wout * cout * 4)
    return pl.pallas_call(
        kernel,
        out_shape=jax.ShapeDtypeStruct((n, hout, wout, cout), out_dtype),
        grid=(n, rt),
        in_specs=[
            pl.BlockSpec((1, hp, wp, cin), lambda b, r: (b, 0, 0, 0)),
            pl.BlockSpec((ksize * ksize, cin, cout), lambda b, r: (0, 0, 0)),
            pl.BlockSpec((1, cout), lambda b, r: (0, 0)),
        ],
        out_specs=pl.BlockSpec((1, tm, wout, cout), lambda b, r: (b, r, 0, 0)),
        compiler_params=pltpu.CompilerParams(
            dimension_semantics=("parallel", "parallel"),
            vmem_limit_bytes=vmem),
    )(x, weight, bias2)


def conv2d_concat_pallas(xa, xb, wa, wb, bias, *, lrelu, slope=0.2,
                         out_dtype=jnp.bfloat16):
    """3x3 conv over concat([xa, xb], channel) without materializing the concat."""
    n, h, w, ca = xa.shape
    cb = xb.shape[3]
    cout = wa.shape[-1]
    xa = jnp.pad(xa.astype(jnp.bfloat16), ((0, 0), (1, 1), (1, 1), (0, 0)))
    xb = jnp.pad(xb.astype(jnp.bfloat16), ((0, 0), (1, 1), (1, 1), (0, 0)))
    hp, wp = h + 2, w + 2
    hout, wout = h, w
    tm = _pick_tm(hout, wout)
    rt = hout // tm
    wa = wa.astype(jnp.bfloat16)
    wb = wb.astype(jnp.bfloat16)
    bias2 = bias.reshape(1, cout).astype(jnp.float32)
    kernel = functools.partial(_conv_concat_kernel, kh=3, kw=3,
                               lrelu=lrelu, slope=slope)
    vmem = _vmem_limit(hp * wp * ca * 2, hp * wp * cb * 2,
                       9 * ca * cout * 2, 9 * cb * cout * 2,
                       tm * wout * cout * 4)
    return pl.pallas_call(
        kernel,
        out_shape=jax.ShapeDtypeStruct((n, hout, wout, cout), out_dtype),
        grid=(n, rt),
        in_specs=[
            pl.BlockSpec((1, hp, wp, ca), lambda b, r: (b, 0, 0, 0)),
            pl.BlockSpec((1, hp, wp, cb), lambda b, r: (b, 0, 0, 0)),
            pl.BlockSpec((9, ca, cout), lambda b, r: (0, 0, 0)),
            pl.BlockSpec((9, cb, cout), lambda b, r: (0, 0, 0)),
            pl.BlockSpec((1, cout), lambda b, r: (0, 0)),
        ],
        out_specs=pl.BlockSpec((1, tm, wout, cout), lambda b, r: (b, r, 0, 0)),
        compiler_params=pltpu.CompilerParams(
            dimension_semantics=("parallel", "parallel"),
            vmem_limit_bytes=vmem),
    )(xa, xb, wa, wb, bias2)


def conv_transpose2x2_pallas(x, w4, b4):
    """ConvTranspose2d(k=2, s=2) == per-pixel 1x1 matmul to 4*Cout (Pallas) +
    pixel interleave (plain-JAX data movement)."""
    # TODO(synk): fuse the 2x2 pixel interleave into the kernel's store.
    y = conv2d_pallas(x, w4, b4, ksize=1, pad=0, lrelu=False)
    n, h, w, c4 = y.shape
    cout = c4 // 4
    y = y.reshape(n, h, w, 2, 2, cout)
    y = y.transpose(0, 1, 3, 2, 4, 5).reshape(n, 2 * h, 2 * w, cout)
    return y


def avg_pool2(x):
    # F.avg_pool2d(x, 2): cheap reduction kept as plain-JAX glue.
    n, h, w, c = x.shape
    return x.reshape(n, h // 2, 2, w // 2, 2, c).mean(axis=(2, 4)).astype(x.dtype)


def center_crop(layer, th, tw):
    h, w = layer.shape[1], layer.shape[2]
    dy = (h - th) // 2
    dx = (w - tw) // 2
    return layer[:, dy:dy + th, dx:dx + tw, :]


# ----------------------------------------------------------------------------
# Deterministic parameter construction (matches PyTorch layer shapes).
# ----------------------------------------------------------------------------
def _keys(seed):
    base = jax.random.PRNGKey(seed)
    i = 0
    while True:
        yield jax.random.fold_in(base, i)
        i += 1


def conv3x3_params(key, cin, cout):
    k1, k2 = jax.random.split(key)
    w = jax.random.normal(k1, (cout, cin, 3, 3), jnp.float32) / math.sqrt(cin * 9)
    b = 0.01 * jax.random.normal(k2, (cout,), jnp.float32)
    wk = jnp.transpose(w, (2, 3, 1, 0)).reshape(9, cin, cout)  # (taps, Cin, Cout)
    return wk.astype(jnp.bfloat16), b


def convT2x2_params(key, cin, cout):
    k1, k2 = jax.random.split(key)
    w = jax.random.normal(k1, (cin, cout, 2, 2), jnp.float32) / math.sqrt(cin * 4)
    b = 0.01 * jax.random.normal(k2, (cout,), jnp.float32)
    # (Cin, Cout, 2, 2) -> (1, Cin, 4*Cout) laid out as (di, dj, cout)
    w4 = jnp.transpose(w, (0, 2, 3, 1)).reshape(1, cin, 4 * cout)
    b4 = jnp.tile(b, 4)
    return w4.astype(jnp.bfloat16), b4


def init_vdn_params(in_channels, wf=64, dep_S=5, dep_U=4, seed=0):
    ks = _keys(seed)
    # head: conv(in, wf), then 4 x [conv(wf, wf) + LeakyReLU]
    head = [conv3x3_params(next(ks), in_channels, wf)]
    for _ in range(4):
        head.append(conv3x3_params(next(ks), wf, wf))
    # DNet: UNet(wf -> in_channels)
    down, prev = [], wf
    for i in range(dep_U):
        ch = (2 ** i) * wf
        down.append((conv3x3_params(next(ks), prev, ch),
                     conv3x3_params(next(ks), ch, ch)))
        prev = ch
    up = []
    for i in reversed(range(dep_U - 1)):
        ch = (2 ** i) * wf
        t = convT2x2_params(next(ks), prev, ch)
        wa_full, ba = conv3x3_params(next(ks), prev, ch)  # concat: ch + ch = prev
        cb = conv3x3_params(next(ks), ch, ch)
        up.append({"t": t,
                   "a1": wa_full[:, :ch, :],   # half applied to the upsampled path
                   "a2": wa_full[:, ch:, :],   # half applied to the skip bridge
                   "ab": ba,
                   "b": cb})
        prev = ch
    last = conv3x3_params(next(ks), prev, in_channels)
    # SNet: DnCNN(wf -> in_channels), num_filters=64
    nf = 64
    dn = [conv3x3_params(next(ks), wf, nf)]
    for _ in range(dep_S - 2):
        dn.append(conv3x3_params(next(ks), nf, nf))
    dn.append(conv3x3_params(next(ks), nf, in_channels))
    return {"head": head,
            "unet": {"down": down, "up": up, "last": last},
            "dncnn": dn}


# ----------------------------------------------------------------------------
# Forward passes.
# ----------------------------------------------------------------------------
def unet_forward(p, x, slope):
    blocks = []
    depth = len(p["down"])
    for i, (ca, cb) in enumerate(p["down"]):
        x = conv2d_pallas(x, *ca, ksize=3, pad=1, lrelu=True, slope=slope)
        x = conv2d_pallas(x, *cb, ksize=3, pad=1, lrelu=True, slope=slope)
        if i != depth - 1:
            blocks.append(x)
            x = avg_pool2(x)
    for i, ub in enumerate(p["up"]):
        up_x = conv_transpose2x2_pallas(x, *ub["t"])
        bridge = center_crop(blocks[-i - 1], up_x.shape[1], up_x.shape[2])
        # skip-concat fused into the conv kernel (no HBM concat round trip)
        x = conv2d_concat_pallas(up_x, bridge, ub["a1"], ub["a2"], ub["ab"],
                                 lrelu=True, slope=slope)
        x = conv2d_pallas(x, *ub["b"], ksize=3, pad=1, lrelu=True, slope=slope)
    return conv2d_pallas(x, *p["last"], ksize=3, pad=1, lrelu=False, slope=slope)


def dncnn_forward(p, x, slope):
    x = conv2d_pallas(x, *p[0], ksize=3, pad=1, lrelu=True, slope=slope)
    for wb in p[1:-1]:
        x = conv2d_pallas(x, *wb, ksize=3, pad=1, lrelu=True, slope=slope)
    return conv2d_pallas(x, *p[-1], ksize=3, pad=1, lrelu=False, slope=slope)


def vdn_forward(params, x_nchw, mode="train", slope=0.2):
    x = jnp.transpose(x_nchw, (0, 2, 3, 1)).astype(jnp.bfloat16)  # NCHW -> NHWC
    # head layer: first conv has no activation (matches the PyTorch Sequential)
    w, b = params["head"][0]
    x = conv2d_pallas(x, w, b, ksize=3, pad=1, lrelu=False, slope=slope)
    for w, b in params["head"][1:]:
        x = conv2d_pallas(x, w, b, ksize=3, pad=1, lrelu=True, slope=slope)
    phi_U = unet_forward(params["unet"], x, slope)
    phi_n = dncnn_forward(params["dncnn"], x, slope)
    phi_n = jnp.transpose(phi_n, (0, 3, 1, 2)).astype(jnp.float32)  # back to NCHW
    phi_U = jnp.transpose(phi_U, (0, 3, 1, 2)).astype(jnp.float32)
    if mode.lower() == "train":
        return phi_n, phi_U
    elif mode.lower() == "test":
        return phi_n, phi_U


if __name__ == "__main__":
    in_channels, wf = 4, 16
    batch, spatial = 2, 16
    x = jax.random.normal(jax.random.PRNGKey(0),
                          (batch, in_channels, spatial, spatial), jnp.float32)
    params = init_vdn_params(in_channels, wf=wf, dep_S=5, dep_U=4, seed=0)
    phi_n, phi_U = vdn_forward(params, x, mode="train", slope=0.2)
    jax.block_until_ready((phi_n, phi_U))
    assert phi_n.shape == (batch, in_channels, spatial, spatial)
    assert phi_U.shape == (batch, in_channels, spatial, spatial)
    assert phi_n.dtype == jnp.float32 and phi_U.dtype == jnp.float32
    print("KERNEL_OK")
</pallas_src>

<mosaic_0001>
module attributes {stable_mosaic.version = 11 : i64} {
  func.func @_conv_kernel(%arg0: i32, %arg1: i32, %arg2: memref<1x18x18x4xbf16, #tpu.memory_space<vmem>>, %arg3: memref<9x4x16xbf16, #tpu.memory_space<vmem>>, %arg4: memref<1x16xf32, #tpu.memory_space<vmem>>, %arg5: memref<1x16x16x16xbf16, #tpu.memory_space<vmem>>) attributes {dimension_semantics = [#tpu.dimension_semantics<parallel>, #tpu.dimension_semantics<parallel>], iteration_bounds = array<i64: 2, 1>, scalar_prefetch = 0 : i64, scratch_operands = 0 : i64, tpu.core_type = #tpu.core_type<tc>, window_params = [{transform_indices = @transform_0, window_bounds = array<i64: 1, 18, 18, 4>}, {pipeline_mode = #tpu.pipeline_mode<synchronous>, transform_indices = @transform_1, window_bounds = array<i64: 9, 4, 16>}, {pipeline_mode = #tpu.pipeline_mode<synchronous>, transform_indices = @transform_2, window_bounds = array<i64: 1, 16>}, {transform_indices = @transform_3, window_bounds = array<i64: 1, 16, 16, 16>}]} {
    %c16_i32 = arith.constant 16 : i32
    %0 = arith.muli %arg1, %c16_i32 : i32
    %1 = tpu.assume_multiple %0, 16 : i32
    %c0 = arith.constant 0 : index
    %c0_0 = arith.constant 0 : index
    %2 = vector.load %arg4[%c0, %c0_0] : memref<1x16xf32, #tpu.memory_space<vmem>>, vector<1x16xf32>
    %cst = arith.constant 0.000000e+00 : f32
    %3 = vector.broadcast %cst : f32 to vector<256x16xf32>
    %c0_i32 = arith.constant 0 : i32
    %4 = arith.addi %1, %c0_i32 : i32
    %c0_1 = arith.constant 0 : index
    %5 = arith.index_cast %4 : i32 to index
    %c0_2 = arith.constant 0 : index
    %c0_3 = arith.constant 0 : index
    %6 = vector.load %arg2[%c0_1, %5, %c0_2, %c0_3] : memref<1x18x18x4xbf16, #tpu.memory_space<vmem>>, vector<1x16x16x4xbf16>
    %7 = vector.shape_cast %6 : vector<1x16x16x4xbf16> to vector<16x16x4xbf16>
    %8 = vector.shape_cast %7 : vector<16x16x4xbf16> to vector<256x4xbf16>
    %c0_4 = arith.constant 0 : index
    %c0_5 = arith.constant 0 : index
    %c0_6 = arith.constant 0 : index
    %9 = vector.load %arg3[%c0_4, %c0_5, %c0_6] : memref<9x4x16xbf16, #tpu.memory_space<vmem>>, vector<1x4x16xbf16>
    %10 = vector.shape_cast %9 : vector<1x4x16xbf16> to vector<4x16xbf16>
    %cst_7 = arith.constant dense<0.000000e+00> : vector<256x16xf32>
    %11 = tpu.matmul %8, %10, %cst_7 {dimension_numbers = #tpu.dot_dimension_numbers<[1], [0], [0], [1], [0, 0, 1, 1], [], []>} : vector<256x4xbf16>, vector<4x16xbf16>, vector<256x16xf32> -> vector<256x16xf32>
    %12 = arith.addf %3, %11 : vector<256x16xf32>
    %c0_i32_8 = arith.constant 0 : i32
    %13 = arith.addi %1, %c0_i32_8 : i32
    %c0_9 = arith.constant 0 : index
    %14 = arith.index_cast %13 : i32 to index
    %c1 = arith.constant 1 : index
    %c0_10 = arith.constant 0 : index
    %15 = vector.load %arg2[%c0_9, %14, %c1, %c0_10] : memref<1x18x18x4xbf16, #tpu.memory_space<vmem>>, vector<1x16x16x4xbf16>
    %16 = vector.shape_cast %15 : vector<1x16x16x4xbf16> to vector<16x16x4xbf16>
    %17 = vector.shape_cast %16 : vector<16x16x4xbf16> to vector<256x4xbf16>
    %c1_11 = arith.constant 1 : index
    %c0_12 = arith.constant 0 : index
    %c0_13 = arith.constant 0 : index
    %18 = vector.load %arg3[%c1_11, %c0_12, %c0_13] : memref<9x4x16xbf16, #tpu.memory_space<vmem>>, vector<1x4x16xbf16>
    %19 = vector.shape_cast %18 : vector<1x4x16xbf16> to vector<4x16xbf16>
    %cst_14 = arith.constant dense<0.000000e+00> : vector<256x16xf32>
    %20 = tpu.matmul %17, %19, %cst_14 {dimension_numbers = #tpu.dot_dimension_numbers<[1], [0], [0], [1], [0, 0, 1, 1], [], []>} : vector<256x4xbf16>, vector<4x16xbf16>, vector<256x16xf32> -> vector<256x16xf32>
    %21 = arith.addf %12, %20 : vector<256x16xf32>
    %c0_i32_15 = arith.constant 0 : i32
    %22 = arith.addi %1, %c0_i32_15 : i32
    %c0_16 = arith.constant 0 : index
    %23 = arith.index_cast %22 : i32 to index
    %c2 = arith.constant 2 : index
    %c0_17 = arith.constant 0 : index
    %24 = vector.load %arg2[%c0_16, %23, %c2, %c0_17] : memref<1x18x18x4xbf16, #tpu.memory_space<vmem>>, vector<1x16x16x4xbf16>
    %25 = vector.shape_cast %24 : vector<1x16x16x4xbf16> to vector<16x16x4xbf16>
    %26 = vector.shape_cast %25 : vector<16x16x4xbf16> to vector<256x4xbf16>
    %c2_18 = arith.constant 2 : index
    %c0_19 = arith.constant 0 : index
    %c0_20 = arith.constant 0 : index
    %27 = vector.load %arg3[%c2_18, %c0_19, %c0_20] : memref<9x4x16xbf16, #tpu.memory_space<vmem>>, vector<1x4x16xbf16>
    %28 = vector.shape_cast %27 : vector<1x4x16xbf16> to vector<4x16xbf16>
    %cst_21 = arith.constant dense<0.000000e+00> : vector<256x16xf32>
    %29 = tpu.matmul %26, %28, %cst_21 {dimension_numbers = #tpu.dot_dimension_numbers<[1], [0], [0], [1], [0, 0, 1, 1], [], []>} : vector<256x4xbf16>, vector<4x16xbf16>, vector<256x16xf32> -> vector<256x16xf32>
    %30 = arith.addf %21, %29 : vector<256x16xf32>
    %c1_i32 = arith.constant 1 : i32
    %31 = arith.addi %1, %c1_i32 : i32
    %c0_22 = arith.constant 0 : index
    %32 = arith.index_cast %31 : i32 to index
    %c0_23 = arith.constant 0 : index
    %c0_24 = arith.constant 0 : index
    %33 = vector.load %arg2[%c0_22, %32, %c0_23, %c0_24] : memref<1x18x18x4xbf16, #tpu.memory_space<vmem>>, vector<1x16x16x4xbf16>
    %34 = vector.shape_cast %33 : vector<1x16x16x4xbf16> to vector<16x16x4xbf16>
    %35 = vector.shape_cast %34 : vector<16x16x4xbf16> to vector<256x4xbf16>
    %c3 = arith.constant 3 : index
    %c0_25 = arith.constant 0 : index
    %c0_26 = arith.constant 0 : index
    %36 = vector.load %arg3[%c3, %c0_25, %c0_26] : memref<9x4x16xbf16, #tpu.memory_space<vmem>>, vector<1x4x16xbf16>
    %37 = vector.shape_cast %36 : vector<1x4x16xbf16> to vector<4x16xbf16>
    %cst_27 = arith.constant dense<0.000000e+00> : vector<256x16xf32>
    %38 = tpu.matmul %35, %37, %cst_27 {dimension_numbers = #tpu.dot_dimension_numbers<[1], [0], [0], [1], [0, 0, 1, 1], [], []>} : vector<256x4xbf16>, vector<4x16xbf16>, vector<256x16xf32> -> vector<256x16xf32>
    %39 = arith.addf %30, %38 : vector<256x16xf32>
    %c1_i32_28 = arith.constant 1 : i32
    %40 = arith.addi %1, %c1_i32_28 : i32
    %c0_29 = arith.constant 0 : index
    %41 = arith.index_cast %40 : i32 to index
    %c1_30 = arith.constant 1 : index
    %c0_31 = arith.constant 0 : index
    %42 = vector.load %arg2[%c0_29, %41, %c1_30, %c0_31] : memref<1x18x18x4xbf16, #tpu.memory_space<vmem>>, vector<1x16x16x4xbf16>
    %43 = vector.shape_cast %42 : vector<1x16x16x4xbf16> to vector<16x16x4xbf16>
    %44 = vector.shape_cast %43 : vector<16x16x4xbf16> to vector<256x4xbf16>
    %c4 = arith.constant 4 : index
    %c0_32 = arith.constant 0 : index
    %c0_33 = arith.constant 0 : index
    %45 = vector.load %arg3[%c4, %c0_32, %c0_33] : memref<9x4x16xbf16, #tpu.memory_space<vmem>>, vector<1x4x16xbf16>
    %46 = vector.shape_cast %45 : vector<1x4x16xbf16> to vector<4x16xbf16>
    %cst_34 = arith.constant dense<0.000000e+00> : vector<256x16xf32>
    %47 = tpu.matmul %44, %46, %cst_34 {dimension_numbers = #tpu.dot_dimension_numbers<[1], [0], [0], [1], [0, 0, 1, 1], [], []>} : vector<256x4xbf16>, vector<4x16xbf16>, vector<256x16xf32> -> vector<256x16xf32>
    %48 = arith.addf %39, %47 : vector<256x16xf32>
    %c1_i32_35 = arith.constant 1 : i32
    %49 = arith.addi %1, %c1_i32_35 : i32
    %c0_36 = arith.constant 0 : index
    %50 = arith.index_cast %49 : i32 to index
    %c2_37 = arith.constant 2 : index
    %c0_38 = arith.constant 0 : index
    %51 = vector.load %arg2[%c0_36, %50, %c2_37, %c0_38] : memref<1x18x18x4xbf16, #tpu.memory_space<vmem>>, vector<1x16x16x4xbf16>
    %52 = vector.shape_cast %51 : vector<1x16x16x4xbf16> to vector<16x16x4xbf16>
    %53 = vector.shape_cast %52 : vector<16x16x4xbf16> to vector<256x4xbf16>
    %c5 = arith.constant 5 : index
    %c0_39 = arith.constant 0 : index
    %c0_40 = arith.constant 0 : index
    %54 = vector.load %arg3[%c5, %c0_39, %c0_40] : memref<9x4x16xbf16, #tpu.memory_space<vmem>>, vector<1x4x16xbf16>
    %55 = vector.shape_cast %54 : vector<1x4x16xbf16> to vector<4x16xbf16>
    %cst_41 = arith.constant dense<0.000000e+00> : vector<256x16xf32>
    %56 = tpu.matmul %53, %55, %cst_41 {dimension_numbers = #tpu.dot_dimension_numbers<[1], [0], [0], [1], [0, 0, 1, 1], [], []>} : vector<256x4xbf16>, vector<4x16xbf16>, vector<256x16xf32> -> vector<256x16xf32>
    %57 = arith.addf %48, %56 : vector<256x16xf32>
    %c2_i32 = arith.constant 2 : i32
    %58 = arith.addi %1, %c2_i32 : i32
    %c0_42 = arith.constant 0 : index
    %59 = arith.index_cast %58 : i32 to index
    %c0_43 = arith.constant 0 : index
    %c0_44 = arith.constant 0 : index
    %60 = vector.load %arg2[%c0_42, %59, %c0_43, %c0_44] : memref<1x18x18x4xbf16, #tpu.memory_space<vmem>>, vector<1x16x16x4xbf16>
    %61 = vector.shape_cast %60 : vector<1x16x16x4xbf16> to vector<16x16x4xbf16>
    %62 = vector.shape_cast %61 : vector<16x16x4xbf16> to vector<256x4xbf16>
    %c6 = arith.constant 6 : index
    %c0_45 = arith.constant 0 : index
    %c0_46 = arith.constant 0 : index
    %63 = vector.load %arg3[%c6, %c0_45, %c0_46] : memref<9x4x16xbf16, #tpu.memory_space<vmem>>, vector<1x4x16xbf16>
    %64 = vector.shape_cast %63 : vector<1x4x16xbf16> to vector<4x16xbf16>
    %cst_47 = arith.constant dense<0.000000e+00> : vector<256x16xf32>
    %65 = tpu.matmul %62, %64, %cst_47 {dimension_numbers = #tpu.dot_dimension_numbers<[1], [0], [0], [1], [0, 0, 1, 1], [], []>} : vector<256x4xbf16>, vector<4x16xbf16>, vector<256x16xf32> -> vector<256x16xf32>
    %66 = arith.addf %57, %65 : vector<256x16xf32>
    %c2_i32_48 = arith.constant 2 : i32
    %67 = arith.addi %1, %c2_i32_48 : i32
    %c0_49 = arith.constant 0 : index
    %68 = arith.index_cast %67 : i32 to index
    %c1_50 = arith.constant 1 : index
    %c0_51 = arith.constant 0 : index
    %69 = vector.load %arg2[%c0_49, %68, %c1_50, %c0_51] : memref<1x18x18x4xbf16, #tpu.memory_space<vmem>>, vector<1x16x16x4xbf16>
    %70 = vector.shape_cast %69 : vector<1x16x16x4xbf16> to vector<16x16x4xbf16>
    %71 = vector.shape_cast %70 : vector<16x16x4xbf16> to vector<256x4xbf16>
    %c7 = arith.constant 7 : index
    %c0_52 = arith.constant 0 : index
    %c0_53 = arith.constant 0 : index
    %72 = vector.load %arg3[%c7, %c0_52, %c0_53] : memref<9x4x16xbf16, #tpu.memory_space<vmem>>, vector<1x4x16xbf16>
    %73 = vector.shape_cast %72 : vector<1x4x16xbf16> to vector<4x16xbf16>
    %cst_54 = arith.constant dense<0.000000e+00> : vector<256x16xf32>
    %74 = tpu.matmul %71, %73, %cst_54 {dimension_numbers = #tpu.dot_dimension_numbers<[1], [0], [0], [1], [0, 0, 1, 1], [], []>} : vector<256x4xbf16>, vector<4x16xbf16>, vector<256x16xf32> -> vector<256x16xf32>
    %75 = arith.addf %66, %74 : vector<256x16xf32>
    %c2_i32_55 = arith.constant 2 : i32
    %76 = arith.addi %1, %c2_i32_55 : i32
    %c0_56 = arith.constant 0 : index
    %77 = arith.index_cast %76 : i32 to index
    %c2_57 = arith.constant 2 : index
    %c0_58 = arith.constant 0 : index
    %78 = vector.load %arg2[%c0_56, %77, %c2_57, %c0_58] : memref<1x18x18x4xbf16, #tpu.memory_space<vmem>>, vector<1x16x16x4xbf16>
    %79 = vector.shape_cast %78 : vector<1x16x16x4xbf16> to vector<16x16x4xbf16>
    %80 = vector.shape_cast %79 : vector<16x16x4xbf16> to vector<256x4xbf16>
    %c8 = arith.constant 8 : index
    %c0_59 = arith.constant 0 : index
    %c0_60 = arith.constant 0 : index
    %81 = vector.load %arg3[%c8, %c0_59, %c0_60] : memref<9x4x16xbf16, #tpu.memory_space<vmem>>, vector<1x4x16xbf16>
    %82 = vector.shape_cast %81 : vector<1x4x16xbf16> to vector<4x16xbf16>
    %cst_61 = arith.constant dense<0.000000e+00> : vector<256x16xf32>
    %83 = tpu.matmul %80, %82, %cst_61 {dimension_numbers = #tpu.dot_dimension_numbers<[1], [0], [0], [1], [0, 0, 1, 1], [], []>} : vector<256x4xbf16>, vector<4x16xbf16>, vector<256x16xf32> -> vector<256x16xf32>
    %84 = arith.addf %75, %83 : vector<256x16xf32>
    %85 = vector.broadcast %2 : vector<1x16xf32> to vector<256x16xf32>
    %86 = arith.addf %84, %85 : vector<256x16xf32>
    %87 = vector.shape_cast %86 : vector<256x16xf32> to vector<1x16x16x16xf32>
    %88 = arith.truncf %87 : vector<1x16x16x16xf32> to vector<1x16x16x16xbf16>
    %c0_62 = arith.constant 0 : index
    %c0_63 = arith.constant 0 : index
    %c0_64 = arith.constant 0 : index
    %c0_65 = arith.constant 0 : index
    %89 = vector.load %arg5[%c0_62, %c0_63, %c0_64, %c0_65] : memref<1x16x16x16xbf16, #tpu.memory_space<vmem>>, vector<1x16x16x16xbf16>
    tpu.vector_store %arg5[%c0_62, %c0_63, %c0_64, %c0_65], %88 {strides = array<i32>} : memref<1x16x16x16xbf16, #tpu.memory_space<vmem>>, vector<1x16x16x16xbf16>,
    return
  }
  func.func @transform_0(%arg0: i32, %arg1: i32) -> (i32, i32, i32, i32) {
    %c0_i32 = arith.constant 0 : i32
    %c0_i32_0 = arith.constant 0 : i32
    %c0_i32_1 = arith.constant 0 : i32
    %c0_i32_2 = arith.constant 0 : i32
    return %arg0, %c0_i32, %c0_i32_0, %c0_i32_1 : i32, i32, i32, i32
  }
  func.func @transform_1(%arg0: i32, %arg1: i32) -> (i32, i32, i32) {
    %c0_i32 = arith.constant 0 : i32
    %c0_i32_0 = arith.constant 0 : i32
    %c0_i32_1 = arith.constant 0 : i32
    %c0_i32_2 = arith.constant 0 : i32
    return %c0_i32, %c0_i32_0, %c0_i32_1 : i32, i32, i32
  }
  func.func @transform_2(%arg0: i32, %arg1: i32) -> (i32, i32) {
    %c0_i32 = arith.constant 0 : i32
    %c0_i32_0 = arith.constant 0 : i32
    %c0_i32_1 = arith.constant 0 : i32
    return %c0_i32, %c0_i32_0 : i32, i32
  }
  func.func @transform_3(%arg0: i32, %arg1: i32) -> (i32, i32, i32, i32) {
    %c0_i32 = arith.constant 0 : i32
    %c0_i32_0 = arith.constant 0 : i32
    %c0_i32_1 = arith.constant 0 : i32
    return %arg0, %arg1, %c0_i32, %c0_i32_0 : i32, i32, i32, i32
  }
}

</mosaic_0001>

<llo_original>
// kernel: tpu_custom_call.1
$region0: #{tpu_custom_call.1}
  #allocation0 [shape = 'u32[]', space=smem, size = 0x4, offset = 0x4, fixed_abs, tag = 'smem constant byte address 0x4 - core index']
  #allocation1 [shape = 'u32[144,128]{1,0:T(1,128)}', space=vmem, size = 0x12000, scoped, tag = 'internal scratch']
  %s0 = inlined_call_operand.vmem [shape: bf16[2,18,18,4], index: 0, kind: input, shape index: {}]
  %s1 = inlined_call_operand.vmem [shape: bf16[9,4,16], index: 1, kind: input, shape index: {}]
  %s2 = inlined_call_operand.vmem [shape: f32[1,16], index: 2, kind: input, shape index: {}]
  %s3 = inlined_call_operand.hbm [shape: bf16[2,16,16,16], index: 3, kind: output, shape index: {}]
  %s4 = sld [smem:[#allocation0]]
  $region45: #{tpu_custom_call.1} parent=0
    _
  %s6 = ssub.s32 1, %s4
  %s7 = scalar_select 0, %s6, %s4
  $region1: #{tpu_custom_call.1} parent=0
    #allocation2 [shape = 'u8[131072]{0}', space=vmem, size = 0x20000, scoped, tag = 'output window, operand 0']
    #allocation3 [shape = 's32[2]{0}', space=sflag, size = 0x8, scoped, tag = 'scoped memory for tpu_custom_call.1']
    %8 = vsyncpa [#allocation3], 0
    %s9 = scalar_lea.sflag [#allocation3], 1
    %10 = vsyncpa %s9, 0
    loop: start=0, step=1, limit=4
    $region2: #{tpu_custom_call.1} parent=1 // loop_pre_header
      _
    $region3: #{tpu_custom_call.1} parent=1 // loop_header
      %s12 = sphi 0, %s16
      %p13 = scmp.ge.s32.totalorder %s12, 4
      %s19 = sphi 0, %s31
      %s20 = sphi 0, %s27
      %s21 = sphi 0, %s19
      %s22 = sphi 0, %s20
      %s23 = sphi 0, %s21
      %s24 = sphi 0, %s22
      %s34 = sphi 0, %s36
      %s37 = sphi 0, %s34
      %s38 = sphi 0, %s37
      %s54 = sphi 0, %s38
      %s58 = sphi 0, %s58
      %s60 = sphi 0, %s58
      %s61 = sphi 0, %s60
      %s75 = sphi 0, %s61
      %s79 = sphi 0, %s79
      %s81 = sphi 0, %s79
      %s82 = sphi 0, %s81
      %s96 = sphi 0, %s82
      %s104 = sphi 0, %s106
      %s107 = sphi 0, %s104
      %s108 = sphi 0, %s107
      %s124 = sphi 0, %s108
    $region4: #{tpu_custom_call.1} parent=1 // loop_header_branch
      %15 = sbr.rel (%p13) target = $region8
    $region5: #{tpu_custom_call.1} parent=1 // loop_body
      %s17 = ssub.s32 %s12, 1
      %s18 = ssub.s32 %s12, 2
      %s25 = sadd.s32 1, %s20
      %p26 = scmp.ge.s32.totalorder %s25, 1
      %s27 = scalar_select %p26, 0, %s25
      %s28 = sadd.s32 1, %s19
      %s29 = scalar_select %p26, %s28, %s19
      %p30 = scmp.ge.s32.totalorder %s29, 2
      %s31 = scalar_select %p30, 0, %s29
      %s32 = ssub.s32 %s19, %s31
      %p33 = scmp.eq.s32.totalorder %s32, 0
      %s35 = sadd.s32 %s34, 1
      %s36 = scalar_select %p33, %s34, %s35
      %p39 = pneg %p33
      %p40 = scmp.eq.s32.totalorder %s12, 1
      %p41 = por %p39, %p40
      %p42 = scmp.ne.s32.totalorder %s34, %s37
      %p43 = scmp.eq.s32.totalorder %s12, 0
      %p44 = por %p42, %p43
      %p45 = scmp.ne.s32.totalorder %s34, %s37
      %p46 = scmp.eq.s32.totalorder %s17, 1
      %p47 = por %p45, %p46
      %p48 = scmp.ne.s32.totalorder %s37, %s38
      %p49 = scmp.eq.s32.totalorder %s17, 0
      %p50 = por %p48, %p49
      %p51 = scmp.ne.s32.totalorder %s37, %s38
      %p52 = scmp.eq.s32.totalorder %s18, 1
      %p53 = por %p51, %p52
      %p55 = scmp.ne.s32.totalorder %s38, %s54
      %p56 = scmp.eq.s32.totalorder %s18, 0
      %p57 = por %p55, %p56
      %s59 = sadd.s32 %s58, 1
      %p62 = scmp.eq.s32.totalorder %s12, 1
      %p63 = scmp.ne.s32.totalorder %s58, %s60
      %p64 = scmp.eq.s32.totalorder %s12, 0
      %p65 = por %p63, %p64
      %p66 = scmp.ne.s32.totalorder %s58, %s60
      %p67 = scmp.eq.s32.totalorder %s17, 1
      %p68 = por %p66, %p67
      %p69 = scmp.ne.s32.totalorder %s60, %s61
      %p70 = scmp.eq.s32.totalorder %s17, 0
      %p71 = por %p69, %p70
      %p72 = scmp.ne.s32.totalorder %s60, %s61
      %p73 = scmp.eq.s32.totalorder %s18, 1
      %p74 = por %p72, %p73
      %p76 = scmp.ne.s32.totalorder %s61, %s75
      %p77 = scmp.eq.s32.totalorder %s18, 0
      %p78 = por %p76, %p77
      %s80 = sadd.s32 %s79, 1
      %p83 = scmp.eq.s32.totalorder %s12, 1
      %p84 = scmp.ne.s32.totalorder %s79, %s81
      %p85 = scmp.eq.s32.totalorder %s12, 0
      %p86 = por %p84, %p85
      %p87 = scmp.ne.s32.totalorder %s79, %s81
      %p88 = scmp.eq.s32.totalorder %s17, 1
      %p89 = por %p87, %p88
      %p90 = scmp.ne.s32.totalorder %s81, %s82
      %p91 = scmp.eq.s32.totalorder %s17, 0
      %p92 = por %p90, %p91
      %p93 = scmp.ne.s32.totalorder %s81, %s82
      %p94 = scmp.eq.s32.totalorder %s18, 1
      %p95 = por %p93, %p94
      %p97 = scmp.ne.s32.totalorder %s82, %s96
      %p98 = scmp.eq.s32.totalorder %s18, 0
      %p99 = por %p97, %p98
      %s100 = ssub.s32 %s19, %s31
      %s101 = ssub.s32 %s20, %s27
      %s102 = sor.u32 %s100, %s101
      %p103 = scmp.eq.s32.totalorder %s102, 0
      %s105 = sadd.s32 %s104, 1
      %s106 = scalar_select %p103, %s104, %s105
      %p109 = pneg %p103
      %p110 = scmp.eq.s32.totalorder %s12, 1
      %p111 = por %p109, %p110
      %p112 = scmp.ne.s32.totalorder %s104, %s107
      %p113 = scmp.eq.s32.totalorder %s12, 0
      %p114 = por %p112, %p113
      %p115 = scmp.ne.s32.totalorder %s104, %s107
      %p116 = scmp.eq.s32.totalorder %s17, 1
      %p117 = por %p115, %p116
      %p118 = scmp.ne.s32.totalorder %s107, %s108
      %p119 = scmp.eq.s32.totalorder %s17, 0
      %p120 = por %p118, %p119
      %p121 = scmp.ne.s32.totalorder %s107, %s108
      %p122 = scmp.eq.s32.totalorder %s18, 1
      %p123 = por %p121, %p122
      %p125 = scmp.ne.s32.totalorder %s108, %s124
      %p126 = scmp.eq.s32.totalorder %s18, 0
      %p127 = por %p125, %p126
      %p128 = scmp.le.s32.totalorder 1, %s12
      %p129 = scmp.lt.s32.totalorder %s12, 3
      %p130 = pnand %p128, %p129
      %p131 = pneg %p130
      // Predicated region
      $region9: #{tpu_custom_call.1} parent=5 // pred_check
        _
      $region10: #{tpu_custom_call.1} parent=5 // pred_check_branch
        %133 = sbr.rel (%p130) target = $region12
      $region11: #{tpu_custom_call.1} parent=5 // pred_region
        %s134 = ssub.s32 %s12, 1
        // Predicated region
        $region13: #{tpu_custom_call.1} parent=11 // pred_check
          %p135 = pneg %p71
        $region14: #{tpu_custom_call.1} parent=11 // pred_check_branch
          %137 = sbr.rel (%p135) target = $region16
        $region15: #{tpu_custom_call.1} parent=11 // pred_region
          _
        $region16: #{tpu_custom_call.1} parent=11 // pred_fallthru
          _
        // Predicated region
        $region17: #{tpu_custom_call.1} parent=11 // pred_check
          %p138 = pneg %p92
        $region18: #{tpu_custom_call.1} parent=11 // pred_check_branch
          %140 = sbr.rel (%p138) target = $region20
        $region19: #{tpu_custom_call.1} parent=11 // pred_region
          _
        $region20: #{tpu_custom_call.1} parent=11 // pred_fallthru
          _
      $region12: #{tpu_custom_call.1} parent=5 // pred_fallthru
        _
      %p141 = scmp.lt.s32.totalorder %s12, 2
      // Predicated region
      $region21: #{tpu_custom_call.1} parent=5 // pred_check
        %p142 = pneg %p141
      $region22: #{tpu_custom_call.1} parent=5 // pred_check_branch
        %144 = sbr.rel (%p142) target = $region24
      $region23: #{tpu_custom_call.1} parent=5 // pred_region
        // Predicated region
        $region25: #{tpu_custom_call.1} parent=23 // pred_check
          %p145 = pneg %p44
        $region26: #{tpu_custom_call.1} parent=23 // pred_check_branch
          %147 = sbr.rel (%p145) target = $region28
        $region27: #{tpu_custom_call.1} parent=23 // pred_region
          %p148 = scmp.lt.s32.totalorder %s19, 1
          %s149 = scalar_select %p148, %s19, 1
          %s150 = smul.addr %s149, 54
          %s151 = smul.addr %s150, 4
          %s152 = scalar_lea.vmem %s0, %s151
        $region28: #{tpu_custom_call.1} parent=23 // pred_fallthru
          _
      $region24: #{tpu_custom_call.1} parent=5 // pred_fallthru
        _
      %p153 = scmp.le.s32.totalorder 1, %s12
      %p154 = scmp.lt.s32.totalorder %s12, 3
      %p155 = pnand %p153, %p154
      %p156 = pneg %p155
      // Predicated region
      $region29: #{tpu_custom_call.1} parent=5 // pred_check
        _
      $region30: #{tpu_custom_call.1} parent=5 // pred_check_branch
        %158 = sbr.rel (%p155) target = $region32
      $region31: #{tpu_custom_call.1} parent=5 // pred_region
        %s159 = ssub.s32 %s12, 1
        %p160 = scmp.lt.s32.totalorder %s21, 1
        %s161 = scalar_select %p160, %s21, 1
        %s162 = smul.addr %s161, 54
        %s163 = smul.addr %s162, 4
        %s164 = scalar_lea.vmem %s0, %s163
        %p165 = pneg %p50
        %p166 = pneg %p47
        %p167 = pneg %p71
        %p168 = pneg %p68
        %p169 = pneg %p92
        %p170 = pneg %p89
        %p171 = pneg %p120
        %p172 = pneg %p117
        %s173 = sand.u32 %s107, 1
        %s174 = scalar_lea.sflag [#allocation3], %s173
        %s175 = sand.u32 %s107, 1
        %s176 = smul.addr %s175, 128
        %s177 = scalar_lea.vmem [#allocation2], %s176
        %p178 = scmp.lt.s32.totalorder %s21, 1
        %s179 = scalar_select %p178, %s21, 1
        %s180 = smul.addr %s179, 54
        %s181 = smul.addr %s180, 4
        %s182 = scalar_lea.vmem %s0, %s181
        %s183 = smul.u32 16, %s22
        %s185 = smul.u32 %s22, 16
        %v186 = vld [vmem:[%s2] sm:$0x1]
        %s187 = smul.u32 %s185, 3
        %s188 = smul.addr %s187, 4
        %s189 = scalar_lea.vmem %s182, %s188
        %v190 = vld [vmem:[%s189] sm:$0xf]
        %v191 = vld [vmem:[%s189 + $0x4] sm:$0xf]
        %v192 = vld [vmem:[%s189 + $0xc] sm:$0xf]
        %v193 = vld [vmem:[%s189 + $0x10] sm:$0xf]
        %v194 = vld [vmem:[%s189 + $0x18] sm:$0xf]
        %v195 = vld [vmem:[%s189 + $0x1c] sm:$0xf]
        %v196 = vld [vmem:[%s189 + $0x24] sm:$0xf]
        %v197 = vld [vmem:[%s189 + $0x28] sm:$0xf]
        %v198 = vld [vmem:[%s189 + $0x30] sm:$0xf]
        %v199 = vld [vmem:[%s189 + $0x34] sm:$0xf]
        %v200 = vld [vmem:[%s189 + $0x3c] sm:$0xf]
        %v201 = vld [vmem:[%s189 + $0x40] sm:$0xf]
        %v202 = vld [vmem:[%s189 + $0x48] sm:$0xf]
        %v203 = vld [vmem:[%s189 + $0x4c] sm:$0xf]
        %v204 = vld [vmem:[%s189 + $0x54] sm:$0xf]
        %v205 = vld [vmem:[%s189 + $0x58] sm:$0xf]
        %v206 = vld [vmem:[%s189 + $0x60] sm:$0xf]
        %v207 = vld [vmem:[%s189 + $0x64] sm:$0xf]
        %v208 = vld [vmem:[%s189 + $0x6c] sm:$0xf]
        %v209 = vld [vmem:[%s189 + $0x70] sm:$0xf]
        %v210 = vld [vmem:[%s189 + $0x78] sm:$0xf]
        %v211 = vld [vmem:[%s189 + $0x7c] sm:$0xf]
        %v212 = vld [vmem:[%s189 + $0x84] sm:$0xf]
        %v213 = vld [vmem:[%s189 + $0x88] sm:$0xf]
        %v214 = vld [vmem:[%s189 + $0x90] sm:$0xf]
        %v215 = vld [vmem:[%s189 + $0x94] sm:$0xf]
        %v216 = vld [vmem:[%s189 + $0x9c] sm:$0xf]
        %v217 = vld [vmem:[%s189 + $0xa0] sm:$0xf]
        %v218 = vld [vmem:[%s189 + $0xa8] sm:$0xf]
        %v219 = vld [vmem:[%s189 + $0xac] sm:$0xf]
        %v220 = vld [vmem:[%s189 + $0xb4] sm:$0xf]
        %v221 = vld [vmem:[%s189 + $0xb8] sm:$0xf]
        %v222 = vld [vmem:[%s1] sm:$0x3]
        %v223 = vld [vmem:[%s189 + $0x8] sm:$0x1]
        %v224 = vld [vmem:[%s189 + $0x14] sm:$0x1]
        %v225 = vld [vmem:[%s189 + $0x20] sm:$0x1]
        %v226 = vld [vmem:[%s189 + $0x2c] sm:$0x1]
        %v227 = vld [vmem:[%s189 + $0x38] sm:$0x1]
        %v228 = vld [vmem:[%s189 + $0x44] sm:$0x1]
        %v229 = vld [vmem:[%s189 + $0x50] sm:$0x1]
        %v230 = vld [vmem:[%s189 + $0x5c] sm:$0x1]
        %v231 = vld [vmem:[%s189 + $0x68] sm:$0x1]
        %v232 = vld [vmem:[%s189 + $0x74] sm:$0x1]
        %v233 = vld [vmem:[%s189 + $0x80] sm:$0x1]
        %v234 = vld [vmem:[%s189 + $0x8c] sm:$0x1]
        %v235 = vld [vmem:[%s189 + $0x98] sm:$0x1]
        %v236 = vld [vmem:[%s189 + $0xa4] sm:$0x1]
        %v237 = vld [vmem:[%s189 + $0xb0] sm:$0x1]
        %v238 = vld [vmem:[%s189 + $0xbc] sm:$0x1]
        %vm239 = vsmask.f32 3328
        %vm240 = vsmask.f32 7440
        %vm241 = vmor %vm239, %vm240
        %v243 = vshrl.u32 %v190, 16
        %v245 = vrot.slane %v243, 4
        %v246 = vshll.u32 %v190, 16
        %v248 = vrot.slane %v246, 5
        %v249 = vor.u32 %v245, %v248
        %v250 = vrot.slane %v249, 4
        %v252 = vshll.u32 %v191, 16
        %v254 = vrot.slane %v252, 5
        %v255 = vsel %vm241, %v250, %v254
        %v256 = vshrl.u32 %v191, 16
        %v258 = vrot.slane %v256, 4
        %v259 = vor.u32 %v258, %v254
        %v260 = vrot.slane %v259, 4
        %v262 = vshll.u32 %v223, 16
        %v264 = vrot.slane %v262, 5
        %v265 = vsel %vm241, %v260, %v264
        %v267 = vshrl.u32 %v192, 16
        %v269 = vrot.slane %v267, 4
        %v270 = vshll.u32 %v192, 16
        %v272 = vrot.slane %v270, 5
        %v273 = vor.u32 %v269, %v272
        %v274 = vrot.slane %v273, 4
        %v276 = vshll.u32 %v193, 16
        %v278 = vrot.slane %v276, 5
        %v279 = vsel %vm241, %v274, %v278
        %v280 = vshrl.u32 %v193, 16
        %v282 = vrot.slane %v280, 4
        %v283 = vor.u32 %v282, %v278
        %v284 = vrot.slane %v283, 4
        %v286 = vshll.u32 %v224, 16
        %v288 = vrot.slane %v286, 5
        %v289 = vsel %vm241, %v284, %v288
        %v291 = vshrl.u32 %v194, 16
        %v293 = vrot.slane %v291, 4
        %v294 = vshll.u32 %v194, 16
        %v296 = vrot.slane %v294, 5
        %v297 = vor.u32 %v293, %v296
        %v298 = vrot.slane %v297, 4
        %v300 = vshll.u32 %v195, 16
        %v302 = vrot.slane %v300, 5
        %v303 = vsel %vm241, %v298, %v302
        %v304 = vshrl.u32 %v195, 16
        %v306 = vrot.slane %v304, 4
        %v307 = vor.u32 %v306, %v302
        %v308 = vrot.slane %v307, 4
        %v310 = vshll.u32 %v225, 16
        %v312 = vrot.slane %v310, 5
        %v313 = vsel %vm241, %v308, %v312
        %v315 = vshrl.u32 %v196, 16
        %v317 = vrot.slane %v315, 4
        %v318 = vshll.u32 %v196, 16
        %v320 = vrot.slane %v318, 5
        %v321 = vor.u32 %v317, %v320
        %v322 = vrot.slane %v321, 4
        %v324 = vshll.u32 %v197, 16
        %v326 = vrot.slane %v324, 5
        %v327 = vsel %vm241, %v322, %v326
        %v328 = vshrl.u32 %v197, 16
        %v330 = vrot.slane %v328, 4
        %v331 = vor.u32 %v330, %v326
        %v332 = vrot.slane %v331, 4
        %v334 = vshll.u32 %v226, 16
        %v336 = vrot.slane %v334, 5
        %v337 = vsel %vm241, %v332, %v336
        %v339 = vshrl.u32 %v198, 16
        %v341 = vrot.slane %v339, 4
        %v342 = vshll.u32 %v198, 16
        %v344 = vrot.slane %v342, 5
        %v345 = vor.u32 %v341, %v344
        %v346 = vrot.slane %v345, 4
        %v348 = vshll.u32 %v199, 16
        %v350 = vrot.slane %v348, 5
        %v351 = vsel %vm241, %v346, %v350
        %v352 = vshrl.u32 %v199, 16
        %v354 = vrot.slane %v352, 4
        %v355 = vor.u32 %v354, %v350
        %v356 = vrot.slane %v355, 4
        %v358 = vshll.u32 %v227, 16
        %v360 = vrot.slane %v358, 5
        %v361 = vsel %vm241, %v356, %v360
        %v363 = vshrl.u32 %v200, 16
        %v365 = vrot.slane %v363, 4
        %v366 = vshll.u32 %v200, 16
        %v368 = vrot.slane %v366, 5
        %v369 = vor.u32 %v365, %v368
        %v370 = vrot.slane %v369, 4
        %v372 = vshll.u32 %v201, 16
        %v374 = vrot.slane %v372, 5
        %v375 = vsel %vm241, %v370, %v374
        %v376 = vshrl.u32 %v201, 16
        %v378 = vrot.slane %v376, 4
        %v379 = vor.u32 %v378, %v374
        %v380 = vrot.slane %v379, 4
        %v382 = vshll.u32 %v228, 16
        %v384 = vrot.slane %v382, 5
        %v385 = vsel %vm241, %v380, %v384
        %v387 = vshrl.u32 %v202, 16
        %v389 = vrot.slane %v387, 4
        %v390 = vshll.u32 %v202, 16
        %v392 = vrot.slane %v390, 5
        %v393 = vor.u32 %v389, %v392
        %v394 = vrot.slane %v393, 4
        %v396 = vshll.u32 %v203, 16
        %v398 = vrot.slane %v396, 5
        %v399 = vsel %vm241, %v394, %v398
        %v400 = vshrl.u32 %v203, 16
        %v402 = vrot.slane %v400, 4
        %v403 = vor.u32 %v402, %v398
        %v404 = vrot.slane %v403, 4
        %v406 = vshll.u32 %v229, 16
        %v408 = vrot.slane %v406, 5
        %v409 = vsel %vm241, %v404, %v408
        %v411 = vshrl.u32 %v204, 16
        %v413 = vrot.slane %v411, 4
        %v414 = vshll.u32 %v204, 16
        %v416 = vrot.slane %v414, 5
        %v417 = vor.u32 %v413, %v416
        %v418 = vrot.slane %v417, 4
        %v420 = vshll.u32 %v205, 16
        %v422 = vrot.slane %v420, 5
        %v423 = vsel %vm241, %v418, %v422
        %v424 = vshrl.u32 %v205, 16
        %v426 = vrot.slane %v424, 4
        %v427 = vor.u32 %v426, %v422
        %v428 = vrot.slane %v427, 4
        %v430 = vshll.u32 %v230, 16
        %v432 = vrot.slane %v430, 5
        %v433 = vsel %vm241, %v428, %v432
        %v435 = vshrl.u32 %v206, 16
        %v437 = vrot.slane %v435, 4
        %v438 = vshll.u32 %v206, 16
        %v440 = vrot.slane %v438, 5
        %v441 = vor.u32 %v437, %v440
        %v442 = vrot.slane %v441, 4
        %v444 = vshll.u32 %v207, 16
        %v446 = vrot.slane %v444, 5
        %v447 = vsel %vm241, %v442, %v446
        %v448 = vshrl.u32 %v207, 16
        %v450 = vrot.slane %v448, 4
        %v451 = vor.u32 %v450, %v446
        %v452 = vrot.slane %v451, 4
        %v454 = vshll.u32 %v231, 16
        %v456 = vrot.slane %v454, 5
        %v457 = vsel %vm241, %v452, %v456
        %v459 = vshrl.u32 %v208, 16
        %v461 = vrot.slane %v459, 4
        %v462 = vshll.u32 %v208, 16
        %v464 = vrot.slane %v462, 5
        %v465 = vor.u32 %v461, %v464
        %v466 = vrot.slane %v465, 4
        %v468 = vshll.u32 %v209, 16
        %v470 = vrot.slane %v468, 5
        %v471 = vsel %vm241, %v466, %v470
        %v472 = vshrl.u32 %v209, 16
        %v474 = vrot.slane %v472, 4
        %v475 = vor.u32 %v474, %v470
        %v476 = vrot.slane %v475, 4
        %v478 = vshll.u32 %v232, 16
        %v480 = vrot.slane %v478, 5
        %v481 = vsel %vm241, %v476, %v480
        %v483 = vshrl.u32 %v210, 16
        %v485 = vrot.slane %v483, 4
        %v486 = vshll.u32 %v210, 16
        %v488 = vrot.slane %v486, 5
        %v489 = vor.u32 %v485, %v488
        %v490 = vrot.slane %v489, 4
        %v492 = vshll.u32 %v211, 16
        %v494 = vrot.slane %v492, 5
        %v495 = vsel %vm241, %v490, %v494
        %v496 = vshrl.u32 %v211, 16
        %v498 = vrot.slane %v496, 4
        %v499 = vor.u32 %v498, %v494
        %v500 = vrot.slane %v499, 4
        %v502 = vshll.u32 %v233, 16
        %v504 = vrot.slane %v502, 5
        %v505 = vsel %vm241, %v500, %v504
        %v507 = vshrl.u32 %v212, 16
        %v509 = vrot.slane %v507, 4
        %v510 = vshll.u32 %v212, 16
        %v512 = vrot.slane %v510, 5
        %v513 = vor.u32 %v509, %v512
        %v514 = vrot.slane %v513, 4
        %v516 = vshll.u32 %v213, 16
        %v518 = vrot.slane %v516, 5
        %v519 = vsel %vm241, %v514, %v518
        %v520 = vshrl.u32 %v213, 16
        %v522 = vrot.slane %v520, 4
        %v523 = vor.u32 %v522, %v518
        %v524 = vrot.slane %v523, 4
        %v526 = vshll.u32 %v234, 16
        %v528 = vrot.slane %v526, 5
        %v529 = vsel %vm241, %v524, %v528
        %v531 = vshrl.u32 %v214, 16
        %v533 = vrot.slane %v531, 4
        %v534 = vshll.u32 %v214, 16
        %v536 = vrot.slane %v534, 5
        %v537 = vor.u32 %v533, %v536
        %v538 = vrot.slane %v537, 4
        %v540 = vshll.u32 %v215, 16
        %v542 = vrot.slane %v540, 5
        %v543 = vsel %vm241, %v538, %v542
        %v544 = vshrl.u32 %v215, 16
        %v546 = vrot.slane %v544, 4
        %v547 = vor.u32 %v546, %v542
        %v548 = vrot.slane %v547, 4
        %v550 = vshll.u32 %v235, 16
        %v552 = vrot.slane %v550, 5
        %v553 = vsel %vm241, %v548, %v552
        %v555 = vshrl.u32 %v216, 16
        %v557 = vrot.slane %v555, 4
        %v558 = vshll.u32 %v216, 16
        %v560 = vrot.slane %v558, 5
        %v561 = vor.u32 %v557, %v560
        %v562 = vrot.slane %v561, 4
        %v564 = vshll.u32 %v217, 16
        %v566 = vrot.slane %v564, 5
        %v567 = vsel %vm241, %v562, %v566
        %v568 = vshrl.u32 %v217, 16
        %v570 = vrot.slane %v568, 4
        %v571 = vor.u32 %v570, %v566
        %v572 = vrot.slane %v571, 4
        %v574 = vshll.u32 %v236, 16
        %v576 = vrot.slane %v574, 5
        %v577 = vsel %vm241, %v572, %v576
        %v579 = vshrl.u32 %v218, 16
        %v581 = vrot.slane %v579, 4
        %v582 = vshll.u32 %v218, 16
        %v584 = vrot.slane %v582, 5
        %v585 = vor.u32 %v581, %v584
        %v586 = vrot.slane %v585, 4
        %v588 = vshll.u32 %v219, 16
        %v590 = vrot.slane %v588, 5
        %v591 = vsel %vm241, %v586, %v590
        %v592 = vshrl.u32 %v219, 16
        %v594 = vrot.slane %v592, 4
        %v595 = vor.u32 %v594, %v590
        %v596 = vrot.slane %v595, 4
        %v598 = vshll.u32 %v237, 16
        %v600 = vrot.slane %v598, 5
        %v601 = vsel %vm241, %v596, %v600
        %v603 = vshrl.u32 %v220, 16
        %v605 = vrot.slane %v603, 4
        %v606 = vshll.u32 %v220, 16
        %v608 = vrot.slane %v606, 5
        %v609 = vor.u32 %v605, %v608
        %v610 = vrot.slane %v609, 4
        %v612 = vshll.u32 %v221, 16
        %v614 = vrot.slane %v612, 5
        %v615 = vsel %vm241, %v610, %v614
        %v616 = vshrl.u32 %v221, 16
        %v618 = vrot.slane %v616, 4
        %v619 = vor.u32 %v618, %v614
        %v620 = vrot.slane %v619, 4
        %v622 = vshll.u32 %v238, 16
        %v624 = vrot.slane %v622, 5
        %v625 = vsel %vm241, %v620, %v624
        %s626 = scalar_lea.vmem %s1, 2
        %v627 = vld [vmem:[%s626] sm:$0x3]
        %v628 = vunpack.c.l.b16 %v255
        %v629 = vunpack.c.l.b16 %v265
        %v630 = vunpack.c.l.b16 %v279
        %v631 = vunpack.c.l.b16 %v289
        %v632 = vunpack.c.l.b16 %v303
        %v633 = vunpack.c.l.b16 %v313
        %v634 = vunpack.c.l.b16 %v327
        %v635 = vunpack.c.l.b16 %v337
        %v636 = vunpack.c.l.b16 %v351
        %v637 = vunpack.c.l.b16 %v361
        %v638 = vunpack.c.l.b16 %v375
        %v639 = vunpack.c.l.b16 %v385
        %v640 = vunpack.c.l.b16 %v399
        %v641 = vunpack.c.l.b16 %v409
        %v642 = vunpack.c.l.b16 %v423
        %v643 = vunpack.c.l.b16 %v433
        %v644 = vunpack.c.l.b16 %v447
        %v645 = vunpack.c.l.b16 %v457
        %v646 = vunpack.c.l.b16 %v471
        %v647 = vunpack.c.l.b16 %v481
        %v648 = vunpack.c.l.b16 %v495
        %v649 = vunpack.c.l.b16 %v505
        %v650 = vunpack.c.l.b16 %v519
        %v651 = vunpack.c.l.b16 %v529
        %v652 = vunpack.c.l.b16 %v543
        %v653 = vunpack.c.l.b16 %v553
        %v654 = vunpack.c.l.b16 %v567
        %v655 = vunpack.c.l.b16 %v577
        %v656 = vunpack.c.l.b16 %v591
        %v657 = vunpack.c.l.b16 %v601
        %v658 = vunpack.c.l.b16 %v615
        %v659 = vunpack.c.l.b16 %v625
        %v660 = vpack.c.b16 %v629, %v628
        %v661 = vpack.c.b16 %v631, %v630
        %v662 = vpack.c.b16 %v633, %v632
        %v663 = vpack.c.b16 %v635, %v634
        %v664 = vpack.c.b16 %v637, %v636
        %v665 = vpack.c.b16 %v639, %v638
        %v666 = vpack.c.b16 %v641, %v640
        %v667 = vpack.c.b16 %v643, %v642
        %v668 = vpack.c.b16 %v645, %v644
        %v669 = vpack.c.b16 %v647, %v646
        %v670 = vpack.c.b16 %v649, %v648
        %v671 = vpack.c.b16 %v651, %v650
        %v672 = vpack.c.b16 %v653, %v652
        %v673 = vpack.c.b16 %v655, %v654
        %v674 = vpack.c.b16 %v657, %v656
        %v675 = vpack.c.b16 %v659, %v658
        %vm676 = vcmask 31744
        %v678 = vsel %vm676, %v660, 0
        %v681 = vsel %vm676, %v661, 0
        %v684 = vsel %vm676, %v662, 0
        %v687 = vsel %vm676, %v663, 0
        %v690 = vsel %vm676, %v664, 0
        %v693 = vsel %vm676, %v665, 0
        %v696 = vsel %vm676, %v666, 0
        %v699 = vsel %vm676, %v667, 0
        %v702 = vsel %vm676, %v668, 0
        %v705 = vsel %vm676, %v669, 0
        %v708 = vsel %vm676, %v670, 0
        %v711 = vsel %vm676, %v671, 0
        %v714 = vsel %vm676, %v672, 0
        %v717 = vsel %vm676, %v673, 0
        %v720 = vsel %vm676, %v674, 0
        %v723 = vsel %vm676, %v675, 0
        %vm725 = vcmask 1041408
        %v727 = vsel %vm725, %v627, 0
        %729 = vmatprep.subr.bf16.mxu0 0
        %730 = vmatpush1.bf16.msra.mxu0 %v727
        %731 = vmatprep.subr.bf16.mxu0 0
        %732 = vmatpush1.bf16.msra.mxu0 0
        %733 = vmatprep.subr.bf16.mxu0 0
        %734 = vmatpush1.bf16.msra.mxu0 0
        %735 = vmatprep.subr.bf16.mxu0 0
        %736 = vmatpush1.bf16.msra.mxu0 0
        %737 = vmatprep.subr.bf16.mxu0 0
        %738 = vmatpush1.bf16.msra.mxu0 0
        %739 = vmatprep.subr.bf16.mxu0 0
        %740 = vmatpush1.bf16.msra.mxu0 0
        %741 = vmatprep.subr.bf16.mxu0 0
        %742 = vmatpush1.bf16.msra.mxu0 0
        %743 = vmatprep.subr.bf16.mxu0 0
        %744 = vmatpush1.bf16.msra.mxu0 0
        %745 = vmatprep.subr.bf16.mxu0 0
        %746 = vmatpush1.bf16.msra.mxu0 0
        %747 = vmatprep.subr.bf16.mxu0 0
        %748 = vmatpush1.bf16.msra.mxu0 0
        %749 = vmatprep.subr.bf16.mxu0 0
        %750 = vmatpush1.bf16.msra.mxu0 0
        %751 = vmatprep.subr.bf16.mxu0 0
        %752 = vmatpush1.bf16.msra.mxu0 0
        %753 = vmatprep.subr.bf16.mxu0 0
        %754 = vmatpush1.bf16.msra.mxu0 0
        %755 = vmatprep.subr.bf16.mxu0 0
        %756 = vmatpush1.bf16.msra.mxu0 0
        %757 = vmatprep.subr.bf16.mxu0 0
        %758 = vmatpush1.bf16.msra.mxu0 0
        %759 = vmatprep.subr.bf16.mxu0 0
        %760 = vmatpush1.bf16.msra.mxu0 0
        %761 = vmatprep.mubr.bf16.mxu0 0
        %762 = vmatmul.mubr.bf16.gmra.mrb[0].mxu0 %v678
        %v763 = vpop.f32.mrb[0].mxu0
        %v764 = vadd.f32 0.0, %v763
        %v765 = vpop.f32.mrb[0].mxu0
        %v766 = vpop.f32.mrb[0].mxu0
        %v767 = vadd.f32 0.0, %v766
        %v768 = vpop.f32.mrb[0].mxu0
        %769 = vmatprep.mubr.bf16.mxu0 0
        %770 = vmatmul.mubr.bf16.gmra.mrb[0].mxu0 %v681
        %v771 = vpop.f32.mrb[0].mxu0
        %v772 = vadd.f32 0.0, %v771
        %v773 = vpop.f32.mrb[0].mxu0
        %v774 = vpop.f32.mrb[0].mxu0
        %v775 = vadd.f32 0.0, %v774
        %v776 = vpop.f32.mrb[0].mxu0
        %777 = vmatprep.mubr.bf16.mxu0 0
        %778 = vmatmul.mubr.bf16.gmra.mrb[0].mxu0 %v684
        %v779 = vpop.f32.mrb[0].mxu0
        %v780 = vadd.f32 0.0, %v779
        %v781 = vpop.f32.mrb[0].mxu0
        %v782 = vpop.f32.mrb[0].mxu0
        %v783 = vadd.f32 0.0, %v782
        %v784 = vpop.f32.mrb[0].mxu0
        %785 = vmatprep.mubr.bf16.mxu0 0
        %786 = vmatmul.mubr.bf16.gmra.mrb[0].mxu0 %v687
        %v787 = vpop.f32.mrb[0].mxu0
        %v788 = vadd.f32 0.0, %v787
        %v789 = vpop.f32.mrb[0].mxu0
        %v790 = vpop.f32.mrb[0].mxu0
        %v791 = vadd.f32 0.0, %v790
        %v792 = vpop.f32.mrb[0].mxu0
        %793 = vmatprep.mubr.bf16.mxu0 0
        %794 = vmatmul.mubr.bf16.gmra.mrb[0].mxu0 %v690
        %v795 = vpop.f32.mrb[0].mxu0
        %v796 = vadd.f32 0.0, %v795
        %v797 = vpop.f32.mrb[0].mxu0
        %v798 = vpop.f32.mrb[0].mxu0
        %v799 = vadd.f32 0.0, %v798
        %v800 = vpop.f32.mrb[0].mxu0
        %801 = vmatprep.mubr.bf16.mxu0 0
        %802 = vmatmul.mubr.bf16.gmra.mrb[0].mxu0 %v693
        %v803 = vpop.f32.mrb[0].mxu0
        %v804 = vadd.f32 0.0, %v803
        %v805 = vpop.f32.mrb[0].mxu0
        %v806 = vpop.f32.mrb[0].mxu0
        %v807 = vadd.f32 0.0, %v806
        %v808 = vpop.f32.mrb[0].mxu0
        %809 = vmatprep.mubr.bf16.mxu0 0
        %810 = vmatmul.mubr.bf16.gmra.mrb[0].mxu0 %v696
        %v811 = vpop.f32.mrb[0].mxu0
        %v812 = vadd.f32 0.0, %v811
        %v813 = vpop.f32.mrb[0].mxu0
        %v814 = vpop.f32.mrb[0].mxu0
        %v815 = vadd.f32 0.0, %v814
        %v816 = vpop.f32.mrb[0].mxu0
        %817 = vmatprep.mubr.bf16.mxu0 0
        %818 = vmatmul.mubr.bf16.gmra.mrb[0].mxu0 %v699
        %v819 = vpop.f32.mrb[0].mxu0
        %v820 = vadd.f32 0.0, %v819
        %v821 = vpop.f32.mrb[0].mxu0
        %v822 = vpop.f32.mrb[0].mxu0
        %v823 = vadd.f32 0.0, %v822
        %v824 = vpop.f32.mrb[0].mxu0
        %825 = vmatprep.mubr.bf16.mxu0 0
        %826 = vmatmul.mubr.bf16.gmra.mrb[0].mxu0 %v702
        %v827 = vpop.f32.mrb[0].mxu0
        %v828 = vadd.f32 0.0, %v827
        %v829 = vpop.f32.mrb[0].mxu0
        %v830 = vpop.f32.mrb[0].mxu0
        %v831 = vadd.f32 0.0, %v830
        %v832 = vpop.f32.mrb[0].mxu0
        %833 = vmatprep.mubr.bf16.mxu0 0
        %834 = vmatmul.mubr.bf16.gmra.mrb[0].mxu0 %v705
        %v835 = vpop.f32.mrb[0].mxu0
        %v836 = vadd.f32 0.0, %v835
        %v837 = vpop.f32.mrb[0].mxu0
        %v838 = vpop.f32.mrb[0].mxu0
        %v839 = vadd.f32 0.0, %v838
        %v840 = vpop.f32.mrb[0].mxu0
        %841 = vmatprep.mubr.bf16.mxu0 0
        %842 = vmatmul.mubr.bf16.gmra.mrb[0].mxu0 %v708
        %v843 = vpop.f32.mrb[0].mxu0
        %v844 = vadd.f32 0.0, %v843
        %v845 = vpop.f32.mrb[0].mxu0
        %v846 = vpop.f32.mrb[0].mxu0
        %v847 = vadd.f32 0.0, %v846
        %v848 = vpop.f32.mrb[0].mxu0
        %849 = vmatprep.mubr.bf16.mxu0 0
        %850 = vmatmul.mubr.bf16.gmra.mrb[0].mxu0 %v711
        %v851 = vpop.f32.mrb[0].mxu0
        %v852 = vadd.f32 0.0, %v851
        %v853 = vpop.f32.mrb[0].mxu0
        %v854 = vpop.f32.mrb[0].mxu0
        %v855 = vadd.f32 0.0, %v854
        %v856 = vpop.f32.mrb[0].mxu0
        %857 = vmatprep.mubr.bf16.mxu0 0
        %858 = vmatmul.mubr.bf16.gmra.mrb[0].mxu0 %v714
        %v859 = vpop.f32.mrb[0].mxu0
        %v860 = vadd.f32 0.0, %v859
        %v861 = vpop.f32.mrb[0].mxu0
        %v862 = vpop.f32.mrb[0].mxu0
        %v863 = vadd.f32 0.0, %v862
        %v864 = vpop.f32.mrb[0].mxu0
        %865 = vmatprep.mubr.bf16.mxu0 0
        %866 = vmatmul.mubr.bf16.gmra.mrb[0].mxu0 %v717
        %v867 = vpop.f32.mrb[0].mxu0
        %v868 = vadd.f32 0.0, %v867
        %v869 = vpop.f32.mrb[0].mxu0
        %v870 = vpop.f32.mrb[0].mxu0
        %v871 = vadd.f32 0.0, %v870
        %v872 = vpop.f32.mrb[0].mxu0
        %873 = vmatprep.mubr.bf16.mxu0 0
        %874 = vmatmul.mubr.bf16.gmra.mrb[0].mxu0 %v720
        %v875 = vpop.f32.mrb[0].mxu0
        %v876 = vadd.f32 0.0, %v875
        %v877 = vpop.f32.mrb[0].mxu0
        %v878 = vpop.f32.mrb[0].mxu0
        %v879 = vadd.f32 0.0, %v878
        %v880 = vpop.f32.mrb[0].mxu0
        %881 = vmatprep.mubr.bf16.mxu0 0
        %882 = vmatmul.mubr.bf16.gmra.mrb[0].mxu0 %v723
        %v883 = vpop.f32.mrb[0].mxu0
        %v884 = vadd.f32 0.0, %v883
        %v885 = vpop.f32.mrb[0].mxu0
        %v886 = vpop.f32.mrb[0].mxu0
        %v887 = vadd.f32 0.0, %v886
        %v888 = vpop.f32.mrb[0].mxu0
        %889 = vdwg.mxu0
        %v922 = vunpack.c.l.b16 %v190
        %v923 = vunpack.c.l.b16 %v191
        %v924 = vunpack.c.l.b16 %v192
        %v925 = vunpack.c.l.b16 %v193
        %v926 = vunpack.c.l.b16 %v194
        %v927 = vunpack.c.l.b16 %v195
        %v928 = vunpack.c.l.b16 %v196
        %v929 = vunpack.c.l.b16 %v197
        %v930 = vunpack.c.l.b16 %v198
        %v931 = vunpack.c.l.b16 %v199
        %v932 = vunpack.c.l.b16 %v200
        %v933 = vunpack.c.l.b16 %v201
        %v934 = vunpack.c.l.b16 %v202
        %v935 = vunpack.c.l.b16 %v203
        %v936 = vunpack.c.l.b16 %v204
        %v937 = vunpack.c.l.b16 %v205
        %v938 = vunpack.c.l.b16 %v206
        %v939 = vunpack.c.l.b16 %v207
        %v940 = vunpack.c.l.b16 %v208
        %v941 = vunpack.c.l.b16 %v209
        %v942 = vunpack.c.l.b16 %v210
        %v943 = vunpack.c.l.b16 %v211
        %v944 = vunpack.c.l.b16 %v212
        %v945 = vunpack.c.l.b16 %v213
        %v946 = vunpack.c.l.b16 %v214
        %v947 = vunpack.c.l.b16 %v215
        %v948 = vunpack.c.l.b16 %v216
        %v949 = vunpack.c.l.b16 %v217
        %v950 = vunpack.c.l.b16 %v218
        %v951 = vunpack.c.l.b16 %v219
        %v952 = vunpack.c.l.b16 %v220
        %v953 = vunpack.c.l.b16 %v221
        %v954 = vpack.c.b16 %v923, %v922
        %v955 = vpack.c.b16 %v925, %v924
        %v956 = vpack.c.b16 %v927, %v926
        %v957 = vpack.c.b16 %v929, %v928
        %v958 = vpack.c.b16 %v931, %v930
        %v959 = vpack.c.b16 %v933, %v932
        %v960 = vpack.c.b16 %v935, %v934
        %v961 = vpack.c.b16 %v937, %v936
        %v962 = vpack.c.b16 %v939, %v938
        %v963 = vpack.c.b16 %v941, %v940
        %v964 = vpack.c.b16 %v943, %v942
        %v965 = vpack.c.b16 %v945, %v944
        %v966 = vpack.c.b16 %v947, %v946
        %v967 = vpack.c.b16 %v949, %v948
        %v968 = vpack.c.b16 %v951, %v950
        %v969 = vpack.c.b16 %v953, %v952
        %v971 = vsel %vm676, %v954, 0
        %v974 = vsel %vm676, %v955, 0
        %v977 = vsel %vm676, %v956, 0
        %v980 = vsel %vm676, %v957, 0
        %v983 = vsel %vm676, %v958, 0
        %v986 = vsel %vm676, %v959, 0
        %v989 = vsel %vm676, %v960, 0
        %v992 = vsel %vm676, %v961, 0
        %v995 = vsel %vm676, %v962, 0
        %v998 = vsel %vm676, %v963, 0
        %v1001 = vsel %vm676, %v964, 0
        %v1004 = vsel %vm676, %v965, 0
        %v1007 = vsel %vm676, %v966, 0
        %v1010 = vsel %vm676, %v967, 0
        %v1013 = vsel %vm676, %v968, 0
        %v1016 = vsel %vm676, %v969, 0
        %v1019 = vsel %vm725, %v222, 0
        %1021 = vmatprep.subr.bf16.mxu0 0
        %1022 = vmatpush1.bf16.msra.mxu0 %v1019
        %1023 = vmatprep.subr.bf16.mxu0 0
        %1024 = vmatpush1.bf16.msra.mxu0 0
        %1025 = vmatprep.subr.bf16.mxu0 0
        %1026 = vmatpush1.bf16.msra.mxu0 0
        %1027 = vmatprep.subr.bf16.mxu0 0
        %1028 = vmatpush1.bf16.msra.mxu0 0
        %1029 = vmatprep.subr.bf16.mxu0 0
        %1030 = vmatpush1.bf16.msra.mxu0 0
        %1031 = vmatprep.subr.bf16.mxu0 0
        %1032 = vmatpush1.bf16.msra.mxu0 0
        %1033 = vmatprep.subr.bf16.mxu0 0
        %1034 = vmatpush1.bf16.msra.mxu0 0
        %1035 = vmatprep.subr.bf16.mxu0 0
        %1036 = vmatpush1.bf16.msra.mxu0 0
        %1037 = vmatprep.subr.bf16.mxu0 0
        %1038 = vmatpush1.bf16.msra.mxu0 0
        %1039 = vmatprep.subr.bf16.mxu0 0
        %1040 = vmatpush1.bf16.msra.mxu0 0
        %1041 = vmatprep.subr.bf16.mxu0 0
        %1042 = vmatpush1.bf16.msra.mxu0 0
        %1043 = vmatprep.subr.bf16.mxu0 0
        %1044 = vmatpush1.bf16.msra.mxu0 0
        %1045 = vmatprep.subr.bf16.mxu0 0
        %1046 = vmatpush1.bf16.msra.mxu0 0
        %1047 = vmatprep.subr.bf16.mxu0 0
        %1048 = vmatpush1.bf16.msra.mxu0 0
        %1049 = vmatprep.subr.bf16.mxu0 0
        %1050 = vmatpush1.bf16.msra.mxu0 0
        %1051 = vmatprep.subr.bf16.mxu0 0
        %1052 = vmatpush1.bf16.msra.mxu0 0
        %1053 = vmatprep.mubr.bf16.mxu0 0
        %1054 = vmatmul.mubr.bf16.gmra.mrb[0].mxu0 %v971
        %v1055 = vpop.f32.mrb[0].mxu0
        %v1056 = vadd.f32 %v764, %v1055
        %v1057 = vpop.f32.mrb[0].mxu0
        %v1058 = vpop.f32.mrb[0].mxu0
        %v1059 = vadd.f32 %v767, %v1058
        %v1060 = vpop.f32.mrb[0].mxu0
        %1061 = vmatprep.mubr.bf16.mxu0 0
        %1062 = vmatmul.mubr.bf16.gmra.mrb[0].mxu0 %v974
        %v1063 = vpop.f32.mrb[0].mxu0
        %v1064 = vadd.f32 %v772, %v1063
        %v1065 = vpop.f32.mrb[0].mxu0
        %v1066 = vpop.f32.mrb[0].mxu0
        %v1067 = vadd.f32 %v775, %v1066
        %v1068 = vpop.f32.mrb[0].mxu0
        %1069 = vmatprep.mubr.bf16.mxu0 0
        %1070 = vmatmul.mubr.bf16.gmra.mrb[0].mxu0 %v977
        %v1071 = vpop.f32.mrb[0].mxu0
        %v1072 = vadd.f32 %v780, %v1071
        %v1073 = vpop.f32.mrb[0].mxu0
        %v1074 = vpop.f32.mrb[0].mxu0
        %v1075 = vadd.f32 %v783, %v1074
        %v1076 = vpop.f32.mrb[0].mxu0
        %1077 = vmatprep.mubr.bf16.mxu0 0
        %1078 = vmatmul.mubr.bf16.gmra.mrb[0].mxu0 %v980
        %v1079 = vpop.f32.mrb[0].mxu0
        %v1080 = vadd.f32 %v788, %v1079
        %v1081 = vpop.f32.mrb[0].mxu0
        %v1082 = vpop.f32.mrb[0].mxu0
        %v1083 = vadd.f32 %v791, %v1082
        %v1084 = vpop.f32.mrb[0].mxu0
        %1085 = vmatprep.mubr.bf16.mxu0 0
        %1086 = vmatmul.mubr.bf16.gmra.mrb[0].mxu0 %v983
        %v1087 = vpop.f32.mrb[0].mxu0
        %v1088 = vadd.f32 %v796, %v1087
        %v1089 = vpop.f32.mrb[0].mxu0
        %v1090 = vpop.f32.mrb[0].mxu0
        %v1091 = vadd.f32 %v799, %v1090
        %v1092 = vpop.f32.mrb[0].mxu0
        %1093 = vmatprep.mubr.bf16.mxu0 0
        %1094 = vmatmul.mubr.bf16.gmra.mrb[0].mxu0 %v986
        %v1095 = vpop.f32.mrb[0].mxu0
        %v1096 = vadd.f32 %v804, %v1095
        %v1097 = vpop.f32.mrb[0].mxu0
        %v1098 = vpop.f32.mrb[0].mxu0
        %v1099 = vadd.f32 %v807, %v1098
        %v1100 = vpop.f32.mrb[0].mxu0
        %1101 = vmatprep.mubr.bf16.mxu0 0
        %1102 = vmatmul.mubr.bf16.gmra.mrb[0].mxu0 %v989
        %v1103 = vpop.f32.mrb[0].mxu0
        %v1104 = vadd.f32 %v812, %v1103
        %v1105 = vpop.f32.mrb[0].mxu0
        %v1106 = vpop.f32.mrb[0].mxu0
        %v1107 = vadd.f32 %v815, %v1106
        %v1108 = vpop.f32.mrb[0].mxu0
        %1109 = vmatprep.mubr.bf16.mxu0 0
        %1110 = vmatmul.mubr.bf16.gmra.mrb[0].mxu0 %v992
        %v1111 = vpop.f32.mrb[0].mxu0
        %v1112 = vadd.f32 %v820, %v1111
        %v1113 = vpop.f32.mrb[0].mxu0
        %v1114 = vpop.f32.mrb[0].mxu0
        %v1115 = vadd.f32 %v823, %v1114
        %v1116 = vpop.f32.mrb[0].mxu0
        %1117 = vmatprep.mubr.bf16.mxu0 0
        %1118 = vmatmul.mubr.bf16.gmra.mrb[0].mxu0 %v995
        %v1119 = vpop.f32.mrb[0].mxu0
        %v1120 = vadd.f32 %v828, %v1119
        %v1121 = vpop.f32.mrb[0].mxu0
        %v1122 = vpop.f32.mrb[0].mxu0
        %v1123 = vadd.f32 %v831, %v1122
        %v1124 = vpop.f32.mrb[0].mxu0
        %1125 = vmatprep.mubr.bf16.mxu0 0
        %1126 = vmatmul.mubr.bf16.gmra.mrb[0].mxu0 %v998
        %v1127 = vpop.f32.mrb[0].mxu0
        %v1128 = vadd.f32 %v836, %v1127
        %v1129 = vpop.f32.mrb[0].mxu0
        %v1130 = vpop.f32.mrb[0].mxu0
        %v1131 = vadd.f32 %v839, %v1130
        %v1132 = vpop.f32.mrb[0].mxu0
        %1133 = vmatprep.mubr.bf16.mxu0 0
        %1134 = vmatmul.mubr.bf16.gmra.mrb[0].mxu0 %v1001
        %v1135 = vpop.f32.mrb[0].mxu0
        %v1136 = vadd.f32 %v844, %v1135
        %v1137 = vpop.f32.mrb[0].mxu0
        %v1138 = vpop.f32.mrb[0].mxu0
        %v1139 = vadd.f32 %v847, %v1138
        %v1140 = vpop.f32.mrb[0].mxu0
        %1141 = vmatprep.mubr.bf16.mxu0 0
        %1142 = vmatmul.mubr.bf16.gmra.mrb[0].mxu0 %v1004
        %v1143 = vpop.f32.mrb[0].mxu0
        %v1144 = vadd.f32 %v852, %v1143
        %v1145 = vpop.f32.mrb[0].mxu0
        %v1146 = vpop.f32.mrb[0].mxu0
        %v1147 = vadd.f32 %v855, %v1146
        %v1148 = vpop.f32.mrb[0].mxu0
        %1149 = vmatprep.mubr.bf16.mxu0 0
        %1150 = vmatmul.mubr.bf16.gmra.mrb[0].mxu0 %v1007
        %v1151 = vpop.f32.mrb[0].mxu0
        %v1152 = vadd.f32 %v860, %v1151
        %v1153 = vpop.f32.mrb[0].mxu0
        %v1154 = vpop.f32.mrb[0].mxu0
        %v1155 = vadd.f32 %v863, %v1154
        %v1156 = vpop.f32.mrb[0].mxu0
        %1157 = vmatprep.mubr.bf16.mxu0 0
        %1158 = vmatmul.mubr.bf16.gmra.mrb[0].mxu0 %v1010
        %v1159 = vpop.f32.mrb[0].mxu0
        %v1160 = vadd.f32 %v868, %v1159
        %v1161 = vpop.f32.mrb[0].mxu0
        %v1162 = vpop.f32.mrb[0].mxu0
        %v1163 = vadd.f32 %v871, %v1162
        %v1164 = vpop.f32.mrb[0].mxu0
        %1165 = vmatprep.mubr.bf16.mxu0 0
        %1166 = vmatmul.mubr.bf16.gmra.mrb[0].mxu0 %v1013
        %v1167 = vpop.f32.mrb[0].mxu0
        %v1168 = vadd.f32 %v876, %v1167
        %v1169 = vpop.f32.mrb[0].mxu0
        %v1170 = vpop.f32.mrb[0].mxu0
        %v1171 = vadd.f32 %v879, %v1170
        %v1172 = vpop.f32.mrb[0].mxu0
        %1173 = vmatprep.mubr.bf16.mxu0 0
        %1174 = vmatmul.mubr.bf16.gmra.mrb[0].mxu0 %v1016
        %v1175 = vpop.f32.mrb[0].mxu0
        %v1176 = vadd.f32 %v884, %v1175
        %v1177 = vpop.f32.mrb[0].mxu0
        %v1178 = vpop.f32.mrb[0].mxu0
        %v1179 = vadd.f32 %v887, %v1178
        %v1180 = vpop.f32.mrb[0].mxu0
        %1181 = vdwg.mxu0
        %v1182 = vld [vmem:[%s189] sm:$0xe]
        %v1183 = vld [vmem:[%s189 + $0xc] sm:$0xe]
        %v1184 = vld [vmem:[%s189 + $0x18] sm:$0xe]
        %v1185 = vld [vmem:[%s189 + $0x24] sm:$0xe]
        %v1186 = vld [vmem:[%s189 + $0x30] sm:$0xe]
        %v1187 = vld [vmem:[%s189 + $0x3c] sm:$0xe]
        %v1188 = vld [vmem:[%s189 + $0x48] sm:$0xe]
        %v1189 = vld [vmem:[%s189 + $0x54] sm:$0xe]
        %v1190 = vld [vmem:[%s189 + $0x60] sm:$0xe]
        %v1191 = vld [vmem:[%s189 + $0x6c] sm:$0xe]
        %v1192 = vld [vmem:[%s189 + $0x78] sm:$0xe]
        %v1193 = vld [vmem:[%s189 + $0x84] sm:$0xe]
        %v1194 = vld [vmem:[%s189 + $0x90] sm:$0xe]
        %v1195 = vld [vmem:[%s189 + $0x9c] sm:$0xe]
        %v1196 = vld [vmem:[%s189 + $0xa8] sm:$0xe]
        %v1197 = vld [vmem:[%s189 + $0xb4] sm:$0xe]
        %vm1230 = vcmask 1042432
        %vm1231 = vcmask 1046532
        %vm1232 = vmor %vm1230, %vm1231
        %v1233 = vrot.slane %v1182, 5
        %v1234 = vrot.slane %v1233, 4
        %v1235 = vrot.slane %v191, 5
        %v1236 = vsel %vm1232, %v1234, %v1235
        %v1237 = vrot.slane %v1235, 4
        %v1238 = vrot.slane %v223, 5
        %v1239 = vsel %vm1232, %v1237, %v1238
        %v1240 = vrot.slane %v1183, 5
        %v1241 = vrot.slane %v1240, 4
        %v1242 = vrot.slane %v193, 5
        %v1243 = vsel %vm1232, %v1241, %v1242
        %v1244 = vrot.slane %v1242, 4
        %v1245 = vrot.slane %v224, 5
        %v1246 = vsel %vm1232, %v1244, %v1245
        %v1247 = vrot.slane %v1184, 5
        %v1248 = vrot.slane %v1247, 4
        %v1249 = vrot.slane %v195, 5
        %v1250 = vsel %vm1232, %v1248, %v1249
        %v1251 = vrot.slane %v1249, 4
        %v1252 = vrot.slane %v225, 5
        %v1253 = vsel %vm1232, %v1251, %v1252
        %v1254 = vrot.slane %v1185, 5
        %v1255 = vrot.slane %v1254, 4
        %v1256 = vrot.slane %v197, 5
        %v1257 = vsel %vm1232, %v1255, %v1256
        %v1258 = vrot.slane %v1256, 4
        %v1259 = vrot.slane %v226, 5
        %v1260 = vsel %vm1232, %v1258, %v1259
        %v1261 = vrot.slane %v1186, 5
        %v1262 = vrot.slane %v1261, 4
        %v1263 = vrot.slane %v199, 5
        %v1264 = vsel %vm1232, %v1262, %v1263
        %v1265 = vrot.slane %v1263, 4
        %v1266 = vrot.slane %v227, 5
        %v1267 = vsel %vm1232, %v1265, %v1266
        %v1268 = vrot.slane %v1187, 5
        %v1269 = vrot.slane %v1268, 4
        %v1270 = vrot.slane %v201, 5
        %v1271 = vsel %vm1232, %v1269, %v1270
        %v1272 = vrot.slane %v1270, 4
        %v1273 = vrot.slane %v228, 5
        %v1274 = vsel %vm1232, %v1272, %v1273
        %v1275 = vrot.slane %v1188, 5
        %v1276 = vrot.slane %v1275, 4
        %v1277 = vrot.slane %v203, 5
        %v1278 = vsel %vm1232, %v1276, %v1277
        %v1279 = vrot.slane %v1277, 4
        %v1280 = vrot.slane %v229, 5
        %v1281 = vsel %vm1232, %v1279, %v1280
        %v1282 = vrot.slane %v1189, 5
        %v1283 = vrot.slane %v1282, 4
        %v1284 = vrot.slane %v205, 5
        %v1285 = vsel %vm1232, %v1283, %v1284
        %v1286 = vrot.slane %v1284, 4
        %v1287 = vrot.slane %v230, 5
        %v1288 = vsel %vm1232, %v1286, %v1287
        %v1289 = vrot.slane %v1190, 5
        %v1290 = vrot.slane %v1289, 4
        %v1291 = vrot.slane %v207, 5
        %v1292 = vsel %vm1232, %v1290, %v1291
        %v1293 = vrot.slane %v1291, 4
        %v1294 = vrot.slane %v231, 5
        %v1295 = vsel %vm1232, %v1293, %v1294
        %v1296 = vrot.slane %v1191, 5
        %v1297 = vrot.slane %v1296, 4
        %v1298 = vrot.slane %v209, 5
        %v1299 = vsel %vm1232, %v1297, %v1298
        %v1300 = vrot.slane %v1298, 4
        %v1301 = vrot.slane %v232, 5
        %v1302 = vsel %vm1232, %v1300, %v1301
        %v1303 = vrot.slane %v1192, 5
        %v1304 = vrot.slane %v1303, 4
        %v1305 = vrot.slane %v211, 5
        %v1306 = vsel %vm1232, %v1304, %v1305
        %v1307 = vrot.slane %v1305, 4
        %v1308 = vrot.slane %v233, 5
        %v1309 = vsel %vm1232, %v1307, %v1308
        %v1310 = vrot.slane %v1193, 5
        %v1311 = vrot.slane %v1310, 4
        %v1312 = vrot.slane %v213, 5
        %v1313 = vsel %vm1232, %v1311, %v1312
        %v1314 = vrot.slane %v1312, 4
        %v1315 = vrot.slane %v234, 5
        %v1316 = vsel %vm1232, %v1314, %v1315
        %v1317 = vrot.slane %v1194, 5
        %v1318 = vrot.slane %v1317, 4
        %v1319 = vrot.slane %v215, 5
        %v1320 = vsel %vm1232, %v1318, %v1319
        %v1321 = vrot.slane %v1319, 4
        %v1322 = vrot.slane %v235, 5
        %v1323 = vsel %vm1232, %v1321, %v1322
        %v1324 = vrot.slane %v1195, 5
        %v1325 = vrot.slane %v1324, 4
        %v1326 = vrot.slane %v217, 5
        %v1327 = vsel %vm1232, %v1325, %v1326
        %v1328 = vrot.slane %v1326, 4
        %v1329 = vrot.slane %v236, 5
        %v1330 = vsel %vm1232, %v1328, %v1329
        %v1331 = vrot.slane %v1196, 5
        %v1332 = vrot.slane %v1331, 4
        %v1333 = vrot.slane %v219, 5
        %v1334 = vsel %vm1232, %v1332, %v1333
        %v1335 = vrot.slane %v1333, 4
        %v1336 = vrot.slane %v237, 5
        %v1337 = vsel %vm1232, %v1335, %v1336
        %v1338 = vrot.slane %v1197, 5
        %v1339 = vrot.slane %v1338, 4
        %v1340 = vrot.slane %v221, 5
        %v1341 = vsel %vm1232, %v1339, %v1340
        %v1342 = vrot.slane %v1340, 4
        %v1343 = vrot.slane %v238, 5
        %v1344 = vsel %vm1232, %v1342, %v1343
        %s1345 = scalar_lea.vmem %s1, 4
        %v1346 = vld [vmem:[%s1345] sm:$0x3]
        %v1347 = vunpack.c.l.b16 %v1236
        %v1348 = vunpack.c.l.b16 %v1239
        %v1349 = vunpack.c.l.b16 %v1243
        %v1350 = vunpack.c.l.b16 %v1246
        %v1351 = vunpack.c.l.b16 %v1250
        %v1352 = vunpack.c.l.b16 %v1253
        %v1353 = vunpack.c.l.b16 %v1257
        %v1354 = vunpack.c.l.b16 %v1260
        %v1355 = vunpack.c.l.b16 %v1264
        %v1356 = vunpack.c.l.b16 %v1267
        %v1357 = vunpack.c.l.b16 %v1271
        %v1358 = vunpack.c.l.b16 %v1274
        %v1359 = vunpack.c.l.b16 %v1278
        %v1360 = vunpack.c.l.b16 %v1281
        %v1361 = vunpack.c.l.b16 %v1285
        %v1362 = vunpack.c.l.b16 %v1288
        %v1363 = vunpack.c.l.b16 %v1292
        %v1364 = vunpack.c.l.b16 %v1295
        %v1365 = vunpack.c.l.b16 %v1299
        %v1366 = vunpack.c.l.b16 %v1302
        %v1367 = vunpack.c.l.b16 %v1306
        %v1368 = vunpack.c.l.b16 %v1309
        %v1369 = vunpack.c.l.b16 %v1313
        %v1370 = vunpack.c.l.b16 %v1316
        %v1371 = vunpack.c.l.b16 %v1320
        %v1372 = vunpack.c.l.b16 %v1323
        %v1373 = vunpack.c.l.b16 %v1327
        %v1374 = vunpack.c.l.b16 %v1330
        %v1375 = vunpack.c.l.b16 %v1334
        %v1376 = vunpack.c.l.b16 %v1337
        %v1377 = vunpack.c.l.b16 %v1341
        %v1378 = vunpack.c.l.b16 %v1344
        %v1379 = vpack.c.b16 %v1348, %v1347
        %v1380 = vpack.c.b16 %v1350, %v1349
        %v1381 = vpack.c.b16 %v1352, %v1351
        %v1382 = vpack.c.b16 %v1354, %v1353
        %v1383 = vpack.c.b16 %v1356, %v1355
        %v1384 = vpack.c.b16 %v1358, %v1357
        %v1385 = vpack.c.b16 %v1360, %v1359
        %v1386 = vpack.c.b16 %v1362, %v1361
        %v1387 = vpack.c.b16 %v1364, %v1363
        %v1388 = vpack.c.b16 %v1366, %v1365
        %v1389 = vpack.c.b16 %v1368, %v1367
        %v1390 = vpack.c.b16 %v1370, %v1369
        %v1391 = vpack.c.b16 %v1372, %v1371
        %v1392 = vpack.c.b16 %v1374, %v1373
        %v1393 = vpack.c.b16 %v1376, %v1375
        %v1394 = vpack.c.b16 %v1378, %v1377
        %v1396 = vsel %vm676, %v1379, 0
        %v1399 = vsel %vm676, %v1380, 0
        %v1402 = vsel %vm676, %v1381, 0
        %v1405 = vsel %vm676, %v1382, 0
        %v1408 = vsel %vm676, %v1383, 0
        %v1411 = vsel %vm676, %v1384, 0
        %v1414 = vsel %vm676, %v1385, 0
        %v1417 = vsel %vm676, %v1386, 0
        %v1420 = vsel %vm676, %v1387, 0
        %v1423 = vsel %vm676, %v1388, 0
        %v1426 = vsel %vm676, %v1389, 0
        %v1429 = vsel %vm676, %v1390, 0
        %v1432 = vsel %vm676, %v1391, 0
        %v1435 = vsel %vm676, %v1392, 0
        %v1438 = vsel %vm676, %v1393, 0
        %v1441 = vsel %vm676, %v1394, 0
        %v1444 = vsel %vm725, %v1346, 0
        %1446 = vmatprep.subr.bf16.mxu0 0
        %1447 = vmatpush1.bf16.msra.mxu0 %v1444
        %1448 = vmatprep.subr.bf16.mxu0 0
        %1449 = vmatpush1.bf16.msra.mxu0 0
        %1450 = vmatprep.subr.bf16.mxu0 0
        %1451 = vmatpush1.bf16.msra.mxu0 0
        %1452 = vmatprep.subr.bf16.mxu0 0
        %1453 = vmatpush1.bf16.msra.mxu0 0
        %1454 = vmatprep.subr.bf16.mxu0 0
        %1455 = vmatpush1.bf16.msra.mxu0 0
        %1456 = vmatprep.subr.bf16.mxu0 0
        %1457 = vmatpush1.bf16.msra.mxu0 0
        %1458 = vmatprep.subr.bf16.mxu0 0
        %1459 = vmatpush1.bf16.msra.mxu0 0
        %1460 = vmatprep.subr.bf16.mxu0 0
        %1461 = vmatpush1.bf16.msra.mxu0 0
        %1462 = vmatprep.subr.bf16.mxu0 0
        %1463 = vmatpush1.bf16.msra.mxu0 0
        %1464 = vmatprep.subr.bf16.mxu0 0
        %1465 = vmatpush1.bf16.msra.mxu0 0
        %1466 = vmatprep.subr.bf16.mxu0 0
        %1467 = vmatpush1.bf16.msra.mxu0 0
        %1468 = vmatprep.subr.bf16.mxu0 0
        %1469 = vmatpush1.bf16.msra.mxu0 0
        %1470 = vmatprep.subr.bf16.mxu0 0
        %1471 = vmatpush1.bf16.msra.mxu0 0
        %1472 = vmatprep.subr.bf16.mxu0 0
        %1473 = vmatpush1.bf16.msra.mxu0 0
        %1474 = vmatprep.subr.bf16.mxu0 0
        %1475 = vmatpush1.bf16.msra.mxu0 0
        %1476 = vmatprep.subr.bf16.mxu0 0
        %1477 = vmatpush1.bf16.msra.mxu0 0
        %1478 = vmatprep.mubr.bf16.mxu0 0
        %1479 = vmatmul.mubr.bf16.gmra.mrb[0].mxu0 %v1396
        %v1480 = vpop.f32.mrb[0].mxu0
        %v1481 = vadd.f32 0.0, %v1480
        %v1482 = vpop.f32.mrb[0].mxu0
        %v1483 = vpop.f32.mrb[0].mxu0
        %v1484 = vadd.f32 0.0, %v1483
        %v1485 = vpop.f32.mrb[0].mxu0
        %1486 = vmatprep.mubr.bf16.mxu0 0
        %1487 = vmatmul.mubr.bf16.gmra.mrb[0].mxu0 %v1399
        %v1488 = vpop.f32.mrb[0].mxu0
        %v1489 = vadd.f32 0.0, %v1488
        %v1490 = vpop.f32.mrb[0].mxu0
        %v1491 = vpop.f32.mrb[0].mxu0
        %v1492 = vadd.f32 0.0, %v1491
        %v1493 = vpop.f32.mrb[0].mxu0
        %1494 = vmatprep.mubr.bf16.mxu0 0
        %1495 = vmatmul.mubr.bf16.gmra.mrb[0].mxu0 %v1402
        %v1496 = vpop.f32.mrb[0].mxu0
        %v1497 = vadd.f32 0.0, %v1496
        %v1498 = vpop.f32.mrb[0].mxu0
        %v1499 = vpop.f32.mrb[0].mxu0
        %v1500 = vadd.f32 0.0, %v1499
        %v1501 = vpop.f32.mrb[0].mxu0
        %1502 = vmatprep.mubr.bf16.mxu0 0
        %1503 = vmatmul.mubr.bf16.gmra.mrb[0].mxu0 %v1405
        %v1504 = vpop.f32.mrb[0].mxu0
        %v1505 = vadd.f32 0.0, %v1504
        %v1506 = vpop.f32.mrb[0].mxu0
        %v1507 = vpop.f32.mrb[0].mxu0
        %v1508 = vadd.f32 0.0, %v1507
        %v1509 = vpop.f32.mrb[0].mxu0
        %1510 = vmatprep.mubr.bf16.mxu0 0
        %1511 = vmatmul.mubr.bf16.gmra.mrb[0].mxu0 %v1408
        %v1512 = vpop.f32.mrb[0].mxu0
        %v1513 = vadd.f32 0.0, %v1512
        %v1514 = vpop.f32.mrb[0].mxu0
        %v1515 = vpop.f32.mrb[0].mxu0
        %v1516 = vadd.f32 0.0, %v1515
        %v1517 = vpop.f32.mrb[0].mxu0
        %1518 = vmatprep.mubr.bf16.mxu0 0
        %1519 = vmatmul.mubr.bf16.gmra.mrb[0].mxu0 %v1411
        %v1520 = vpop.f32.mrb[0].mxu0
        %v1521 = vadd.f32 0.0, %v1520
        %v1522 = vpop.f32.mrb[0].mxu0
        %v1523 = vpop.f32.mrb[0].mxu0
        %v1524 = vadd.f32 0.0, %v1523
        %v1525 = vpop.f32.mrb[0].mxu0
        %1526 = vmatprep.mubr.bf16.mxu0 0
        %1527 = vmatmul.mubr.bf16.gmra.mrb[0].mxu0 %v1414
        %v1528 = vpop.f32.mrb[0].mxu0
        %v1529 = vadd.f32 0.0, %v1528
        %v1530 = vpop.f32.mrb[0].mxu0
        %v1531 = vpop.f32.mrb[0].mxu0
        %v1532 = vadd.f32 0.0, %v1531
        %v1533 = vpop.f32.mrb[0].mxu0
        %1534 = vmatprep.mubr.bf16.mxu0 0
        %1535 = vmatmul.mubr.bf16.gmra.mrb[0].mxu0 %v1417
        %v1536 = vpop.f32.mrb[0].mxu0
        %v1537 = vadd.f32 0.0, %v1536
        %v1538 = vpop.f32.mrb[0].mxu0
        %v1539 = vpop.f32.mrb[0].mxu0
        %v1540 = vadd.f32 0.0, %v1539
        %v1541 = vpop.f32.mrb[0].mxu0
        %1542 = vmatprep.mubr.bf16.mxu0 0
        %1543 = vmatmul.mubr.bf16.gmra.mrb[0].mxu0 %v1420
        %v1544 = vpop.f32.mrb[0].mxu0
        %v1545 = vadd.f32 0.0, %v1544
        %v1546 = vpop.f32.mrb[0].mxu0
        %v1547 = vpop.f32.mrb[0].mxu0
        %v1548 = vadd.f32 0.0, %v1547
        %v1549 = vpop.f32.mrb[0].mxu0
        %1550 = vmatprep.mubr.bf16.mxu0 0
        %1551 = vmatmul.mubr.bf16.gmra.mrb[0].mxu0 %v1423
        %v1552 = vpop.f32.mrb[0].mxu0
        %v1553 = vadd.f32 0.0, %v1552
        %v1554 = vpop.f32.mrb[0].mxu0
        %v1555 = vpop.f32.mrb[0].mxu0
        %v1556 = vadd.f32 0.0, %v1555
        %v1557 = vpop.f32.mrb[0].mxu0
        %1558 = vmatprep.mubr.bf16.mxu0 0
        %1559 = vmatmul.mubr.bf16.gmra.mrb[0].mxu0 %v1426
        %v1560 = vpop.f32.mrb[0].mxu0
        %v1561 = vadd.f32 0.0, %v1560
        %v1562 = vpop.f32.mrb[0].mxu0
        %v1563 = vpop.f32.mrb[0].mxu0
        %v1564 = vadd.f32 0.0, %v1563
        %v1565 = vpop.f32.mrb[0].mxu0
        %1566 = vmatprep.mubr.bf16.mxu0 0
        %1567 = vmatmul.mubr.bf16.gmra.mrb[0].mxu0 %v1429
        %v1568 = vpop.f32.mrb[0].mxu0
        %v1569 = vadd.f32 0.0, %v1568
        %v1570 = vpop.f32.mrb[0].mxu0
        %v1571 = vpop.f32.mrb[0].mxu0
        %v1572 = vadd.f32 0.0, %v1571
        %v1573 = vpop.f32.mrb[0].mxu0
        %1574 = vmatprep.mubr.bf16.mxu0 0
        %1575 = vmatmul.mubr.bf16.gmra.mrb[0].mxu0 %v1432
        %v1576 = vpop.f32.mrb[0].mxu0
        %v1577 = vadd.f32 0.0, %v1576
        %v1578 = vpop.f32.mrb[0].mxu0
        %v1579 = vpop.f32.mrb[0].mxu0
        %v1580 = vadd.f32 0.0, %v1579
        %v1581 = vpop.f32.mrb[0].mxu0
        %1582 = vmatprep.mubr.bf16.mxu0 0
        %1583 = vmatmul.mubr.bf16.gmra.mrb[0].mxu0 %v1435
        %v1584 = vpop.f32.mrb[0].mxu0
        %v1585 = vadd.f32 0.0, %v1584
        %v1586 = vpop.f32.mrb[0].mxu0
        %v1587 = vpop.f32.mrb[0].mxu0
        %v1588 = vadd.f32 0.0, %v1587
        %v1589 = vpop.f32.mrb[0].mxu0
        %1590 = vmatprep.mubr.bf16.mxu0 0
        %1591 = vmatmul.mubr.bf16.gmra.mrb[0].mxu0 %v1438
        %v1592 = vpop.f32.mrb[0].mxu0
        %v1593 = vadd.f32 0.0, %v1592
        %v1594 = vpop.f32.mrb[0].mxu0
        %v1595 = vpop.f32.mrb[0].mxu0
        %v1596 = vadd.f32 0.0, %v1595
        %v1597 = vpop.f32.mrb[0].mxu0
        %1598 = vmatprep.mubr.bf16.mxu0 0
        %1599 = vmatmul.mubr.bf16.gmra.mrb[0].mxu0 %v1441
        %v1600 = vpop.f32.mrb[0].mxu0
        %v1601 = vadd.f32 0.0, %v1600
        %v1602 = vpop.f32.mrb[0].mxu0
        %v1603 = vpop.f32.mrb[0].mxu0
        %v1604 = vadd.f32 0.0, %v1603
        %v1605 = vpop.f32.mrb[0].mxu0
        %1606 = vdwg.mxu0
        %v1607 = vadd.f32 %v1056, %v1481
        %v1608 = vadd.f32 %v1059, %v1484
        %v1609 = vadd.f32 %v1064, %v1489
        %v1610 = vadd.f32 %v1067, %v1492
        %v1611 = vadd.f32 %v1072, %v1497
        %v1612 = vadd.f32 %v1075, %v1500
        %v1613 = vadd.f32 %v1080, %v1505
        %v1614 = vadd.f32 %v1083, %v1508
        %v1615 = vadd.f32 %v1088, %v1513
        %v1616 = vadd.f32 %v1091, %v1516
        %v1617 = vadd.f32 %v1096, %v1521
        %v1618 = vadd.f32 %v1099, %v1524
        %v1619 = vadd.f32 %v1104, %v1529
        %v1620 = vadd.f32 %v1107, %v1532
        %v1621 = vadd.f32 %v1112, %v1537
        %v1622 = vadd.f32 %v1115, %v1540
        %v1623 = vadd.f32 %v1120, %v1545
        %v1624 = vadd.f32 %v1123, %v1548
        %v1625 = vadd.f32 %v1128, %v1553
        %v1626 = vadd.f32 %v1131, %v1556
        %v1627 = vadd.f32 %v1136, %v1561
        %v1628 = vadd.f32 %v1139, %v1564
        %v1629 = vadd.f32 %v1144, %v1569
        %v1630 = vadd.f32 %v1147, %v1572
        %v1631 = vadd.f32 %v1152, %v1577
        %v1632 = vadd.f32 %v1155, %v1580
        %v1633 = vadd.f32 %v1160, %v1585
        %v1634 = vadd.f32 %v1163, %v1588
        %v1635 = vadd.f32 %v1168, %v1593
        %v1636 = vadd.f32 %v1171, %v1596
        %v1637 = vadd.f32 %v1176, %v1601
        %v1638 = vadd.f32 %v1179, %v1604
        %s1639 = sadd.s32 %s185, 1
        %s1640 = smul.u32 %s1639, 3
        %s1641 = smul.addr %s1640, 4
        %s1642 = scalar_lea.vmem %s182, %s1641
        %v1643 = vld [vmem:[%s1642] sm:$0xf]
        %v1644 = vld [vmem:[%s1642 + $0x4] sm:$0xf]
        %v1645 = vld [vmem:[%s1642 + $0xc] sm:$0xf]
        %v1646 = vld [vmem:[%s1642 + $0x10] sm:$0xf]
        %v1647 = vld [vmem:[%s1642 + $0x18] sm:$0xf]
        %v1648 = vld [vmem:[%s1642 + $0x1c] sm:$0xf]
        %v1649 = vld [vmem:[%s1642 + $0x24] sm:$0xf]
        %v1650 = vld [vmem:[%s1642 + $0x28] sm:$0xf]
        %v1651 = vld [vmem:[%s1642 + $0x30] sm:$0xf]
        %v1652 = vld [vmem:[%s1642 + $0x34] sm:$0xf]
        %v1653 = vld [vmem:[%s1642 + $0x3c] sm:$0xf]
        %v1654 = vld [vmem:[%s1642 + $0x40] sm:$0xf]
        %v1655 = vld [vmem:[%s1642 + $0x48] sm:$0xf]
        %v1656 = vld [vmem:[%s1642 + $0x4c] sm:$0xf]
        %v1657 = vld [vmem:[%s1642 + $0x54] sm:$0xf]
        %v1658 = vld [vmem:[%s1642 + $0x58] sm:$0xf]
        %v1659 = vld [vmem:[%s1642 + $0x60] sm:$0xf]
        %v1660 = vld [vmem:[%s1642 + $0x64] sm:$0xf]
        %v1661 = vld [vmem:[%s1642 + $0x6c] sm:$0xf]
        %v1662 = vld [vmem:[%s1642 + $0x70] sm:$0xf]
        %v1663 = vld [vmem:[%s1642 + $0x78] sm:$0xf]
        %v1664 = vld [vmem:[%s1642 + $0x7c] sm:$0xf]
        %v1665 = vld [vmem:[%s1642 + $0x84] sm:$0xf]
        %v1666 = vld [vmem:[%s1642 + $0x88] sm:$0xf]
        %v1667 = vld [vmem:[%s1642 + $0x90] sm:$0xf]
        %v1668 = vld [vmem:[%s1642 + $0x94] sm:$0xf]
        %v1669 = vld [vmem:[%s1642 + $0x9c] sm:$0xf]
        %v1670 = vld [vmem:[%s1642 + $0xa0] sm:$0xf]
        %v1671 = vld [vmem:[%s1642 + $0xa8] sm:$0xf]
        %v1672 = vld [vmem:[%s1642 + $0xac] sm:$0xf]
        %v1673 = vld [vmem:[%s1642 + $0xb4] sm:$0xf]
        %v1674 = vld [vmem:[%s1642 + $0xb8] sm:$0xf]
        %s1675 = scalar_lea.vmem %s1, 6
        %v1676 = vld [vmem:[%s1675] sm:$0x3]
        %v1709 = vunpack.c.l.b16 %v1643
        %v1710 = vunpack.c.l.b16 %v1644
        %v1711 = vunpack.c.l.b16 %v1645
        %v1712 = vunpack.c.l.b16 %v1646
        %v1713 = vunpack.c.l.b16 %v1647
        %v1714 = vunpack.c.l.b16 %v1648
        %v1715 = vunpack.c.l.b16 %v1649
        %v1716 = vunpack.c.l.b16 %v1650
        %v1717 = vunpack.c.l.b16 %v1651
        %v1718 = vunpack.c.l.b16 %v1652
        %v1719 = vunpack.c.l.b16 %v1653
        %v1720 = vunpack.c.l.b16 %v1654
        %v1721 = vunpack.c.l.b16 %v1655
        %v1722 = vunpack.c.l.b16 %v1656
        %v1723 = vunpack.c.l.b16 %v1657
        %v1724 = vunpack.c.l.b16 %v1658
        %v1725 = vunpack.c.l.b16 %v1659
        %v1726 = vunpack.c.l.b16 %v1660
        %v1727 = vunpack.c.l.b16 %v1661
        %v1728 = vunpack.c.l.b16 %v1662
        %v1729 = vunpack.c.l.b16 %v1663
        %v1730 = vunpack.c.l.b16 %v1664
        %v1731 = vunpack.c.l.b16 %v1665
        %v1732 = vunpack.c.l.b16 %v1666
        %v1733 = vunpack.c.l.b16 %v1667
        %v1734 = vunpack.c.l.b16 %v1668
        %v1735 = vunpack.c.l.b16 %v1669
        %v1736 = vunpack.c.l.b16 %v1670
        %v1737 = vunpack.c.l.b16 %v1671
        %v1738 = vunpack.c.l.b16 %v1672
        %v1739 = vunpack.c.l.b16 %v1673
        %v1740 = vunpack.c.l.b16 %v1674
        %v1741 = vpack.c.b16 %v1710, %v1709
        %v1742 = vpack.c.b16 %v1712, %v1711
        %v1743 = vpack.c.b16 %v1714, %v1713
        %v1744 = vpack.c.b16 %v1716, %v1715
        %v1745 = vpack.c.b16 %v1718, %v1717
        %v1746 = vpack.c.b16 %v1720, %v1719
        %v1747 = vpack.c.b16 %v1722, %v1721
        %v1748 = vpack.c.b16 %v1724, %v1723
        %v1749 = vpack.c.b16 %v1726, %v1725
        %v1750 = vpack.c.b16 %v1728, %v1727
        %v1751 = vpack.c.b16 %v1730, %v1729
        %v1752 = vpack.c.b16 %v1732, %v1731
        %v1753 = vpack.c.b16 %v1734, %v1733
        %v1754 = vpack.c.b16 %v1736, %v1735
        %v1755 = vpack.c.b16 %v1738, %v1737
        %v1756 = vpack.c.b16 %v1740, %v1739
        %v1758 = vsel %vm676, %v1741, 0
        %v1761 = vsel %vm676, %v1742, 0
        %v1764 = vsel %vm676, %v1743, 0
        %v1767 = vsel %vm676, %v1744, 0
        %v1770 = vsel %vm676, %v1745, 0
        %v1773 = vsel %vm676, %v1746, 0
        %v1776 = vsel %vm676, %v1747, 0
        %v1779 = vsel %vm676, %v1748, 0
        %v1782 = vsel %vm676, %v1749, 0
        %v1785 = vsel %vm676, %v1750, 0
        %v1788 = vsel %vm676, %v1751, 0
        %v1791 = vsel %vm676, %v1752, 0
        %v1794 = vsel %vm676, %v1753, 0
        %v1797 = vsel %vm676, %v1754, 0
        %v1800 = vsel %vm676, %v1755, 0
        %v1803 = vsel %vm676, %v1756, 0
        %v1806 = vsel %vm725, %v1676, 0
        %1808 = vmatprep.subr.bf16.mxu0 0
        %1809 = vmatpush1.bf16.msra.mxu0 %v1806
        %1810 = vmatprep.subr.bf16.mxu0 0
        %1811 = vmatpush1.bf16.msra.mxu0 0
        %1812 = vmatprep.subr.bf16.mxu0 0
        %1813 = vmatpush1.bf16.msra.mxu0 0
        %1814 = vmatprep.subr.bf16.mxu0 0
        %1815 = vmatpush1.bf16.msra.mxu0 0
        %1816 = vmatprep.subr.bf16.mxu0 0
        %1817 = vmatpush1.bf16.msra.mxu0 0
        %1818 = vmatprep.subr.bf16.mxu0 0
        %1819 = vmatpush1.bf16.msra.mxu0 0
        %1820 = vmatprep.subr.bf16.mxu0 0
        %1821 = vmatpush1.bf16.msra.mxu0 0
        %1822 = vmatprep.subr.bf16.mxu0 0
        %1823 = vmatpush1.bf16.msra.mxu0 0
        %1824 = vmatprep.subr.bf16.mxu0 0
        %1825 = vmatpush1.bf16.msra.mxu0 0
        %1826 = vmatprep.subr.bf16.mxu0 0
        %1827 = vmatpush1.bf16.msra.mxu0 0
        %1828 = vmatprep.subr.bf16.mxu0 0
        %1829 = vmatpush1.bf16.msra.mxu0 0
        %1830 = vmatprep.subr.bf16.mxu0 0
        %1831 = vmatpush1.bf16.msra.mxu0 0
        %1832 = vmatprep.subr.bf16.mxu0 0
        %1833 = vmatpush1.bf16.msra.mxu0 0
        %1834 = vmatprep.subr.bf16.mxu0 0
        %1835 = vmatpush1.bf16.msra.mxu0 0
        %1836 = vmatprep.subr.bf16.mxu0 0
        %1837 = vmatpush1.bf16.msra.mxu0 0
        %1838 = vmatprep.subr.bf16.mxu0 0
        %1839 = vmatpush1.bf16.msra.mxu0 0
        %1840 = vmatprep.mubr.bf16.mxu0 0
        %1841 = vmatmul.mubr.bf16.gmra.mrb[0].mxu0 %v1758
        %v1842 = vpop.f32.mrb[0].mxu0
        %v1843 = vadd.f32 0.0, %v1842
        %v1844 = vpop.f32.mrb[0].mxu0
        %v1845 = vpop.f32.mrb[0].mxu0
        %v1846 = vadd.f32 0.0, %v1845
        %v1847 = vpop.f32.mrb[0].mxu0
        %1848 = vmatprep.mubr.bf16.mxu0 0
        %1849 = vmatmul.mubr.bf16.gmra.mrb[0].mxu0 %v1761
        %v1850 = vpop.f32.mrb[0].mxu0
        %v1851 = vadd.f32 0.0, %v1850
        %v1852 = vpop.f32.mrb[0].mxu0
        %v1853 = vpop.f32.mrb[0].mxu0
        %v1854 = vadd.f32 0.0, %v1853
        %v1855 = vpop.f32.mrb[0].mxu0
        %1856 = vmatprep.mubr.bf16.mxu0 0
        %1857 = vmatmul.mubr.bf16.gmra.mrb[0].mxu0 %v1764
        %v1858 = vpop.f32.mrb[0].mxu0
        %v1859 = vadd.f32 0.0, %v1858
        %v1860 = vpop.f32.mrb[0].mxu0
        %v1861 = vpop.f32.mrb[0].mxu0
        %v1862 = vadd.f32 0.0, %v1861
        %v1863 = vpop.f32.mrb[0].mxu0
        %1864 = vmatprep.mubr.bf16.mxu0 0
        %1865 = vmatmul.mubr.bf16.gmra.mrb[0].mxu0 %v1767
        %v1866 = vpop.f32.mrb[0].mxu0
        %v1867 = vadd.f32 0.0, %v1866
        %v1868 = vpop.f32.mrb[0].mxu0
        %v1869 = vpop.f32.mrb[0].mxu0
        %v1870 = vadd.f32 0.0, %v1869
        %v1871 = vpop.f32.mrb[0].mxu0
        %1872 = vmatprep.mubr.bf16.mxu0 0
        %1873 = vmatmul.mubr.bf16.gmra.mrb[0].mxu0 %v1770
        %v1874 = vpop.f32.mrb[0].mxu0
        %v1875 = vadd.f32 0.0, %v1874
        %v1876 = vpop.f32.mrb[0].mxu0
        %v1877 = vpop.f32.mrb[0].mxu0
        %v1878 = vadd.f32 0.0, %v1877
        %v1879 = vpop.f32.mrb[0].mxu0
        %1880 = vmatprep.mubr.bf16.mxu0 0
        %1881 = vmatmul.mubr.bf16.gmra.mrb[0].mxu0 %v1773
        %v1882 = vpop.f32.mrb[0].mxu0
        %v1883 = vadd.f32 0.0, %v1882
        %v1884 = vpop.f32.mrb[0].mxu0
        %v1885 = vpop.f32.mrb[0].mxu0
        %v1886 = vadd.f32 0.0, %v1885
        %v1887 = vpop.f32.mrb[0].mxu0
        %1888 = vmatprep.mubr.bf16.mxu0 0
        %1889 = vmatmul.mubr.bf16.gmra.mrb[0].mxu0 %v1776
        %v1890 = vpop.f32.mrb[0].mxu0
        %v1891 = vadd.f32 0.0, %v1890
        %v1892 = vpop.f32.mrb[0].mxu0
        %v1893 = vpop.f32.mrb[0].mxu0
        %v1894 = vadd.f32 0.0, %v1893
        %v1895 = vpop.f32.mrb[0].mxu0
        %1896 = vmatprep.mubr.bf16.mxu0 0
        %1897 = vmatmul.mubr.bf16.gmra.mrb[0].mxu0 %v1779
        %v1898 = vpop.f32.mrb[0].mxu0
        %v1899 = vadd.f32 0.0, %v1898
        %v1900 = vpop.f32.mrb[0].mxu0
        %v1901 = vpop.f32.mrb[0].mxu0
        %v1902 = vadd.f32 0.0, %v1901
        %v1903 = vpop.f32.mrb[0].mxu0
        %1904 = vmatprep.mubr.bf16.mxu0 0
        %1905 = vmatmul.mubr.bf16.gmra.mrb[0].mxu0 %v1782
        %v1906 = vpop.f32.mrb[0].mxu0
        %v1907 = vadd.f32 0.0, %v1906
        %v1908 = vpop.f32.mrb[0].mxu0
        %v1909 = vpop.f32.mrb[0].mxu0
        %v1910 = vadd.f32 0.0, %v1909
        %v1911 = vpop.f32.mrb[0].mxu0
        %1912 = vmatprep.mubr.bf16.mxu0 0
        %1913 = vmatmul.mubr.bf16.gmra.mrb[0].mxu0 %v1785
        %v1914 = vpop.f32.mrb[0].mxu0
        %v1915 = vadd.f32 0.0, %v1914
        %v1916 = vpop.f32.mrb[0].mxu0
        %v1917 = vpop.f32.mrb[0].mxu0
        %v1918 = vadd.f32 0.0, %v1917
        %v1919 = vpop.f32.mrb[0].mxu0
        %1920 = vmatprep.mubr.bf16.mxu0 0
        %1921 = vmatmul.mubr.bf16.gmra.mrb[0].mxu0 %v1788
        %v1922 = vpop.f32.mrb[0].mxu0
        %v1923 = vadd.f32 0.0, %v1922
        %v1924 = vpop.f32.mrb[0].mxu0
        %v1925 = vpop.f32.mrb[0].mxu0
        %v1926 = vadd.f32 0.0, %v1925
        %v1927 = vpop.f32.mrb[0].mxu0
        %1928 = vmatprep.mubr.bf16.mxu0 0
        %1929 = vmatmul.mubr.bf16.gmra.mrb[0].mxu0 %v1791
        %v1930 = vpop.f32.mrb[0].mxu0
        %v1931 = vadd.f32 0.0, %v1930
        %v1932 = vpop.f32.mrb[0].mxu0
        %v1933 = vpop.f32.mrb[0].mxu0
        %v1934 = vadd.f32 0.0, %v1933
        %v1935 = vpop.f32.mrb[0].mxu0
        %1936 = vmatprep.mubr.bf16.mxu0 0
        %1937 = vmatmul.mubr.bf16.gmra.mrb[0].mxu0 %v1794
        %v1938 = vpop.f32.mrb[0].mxu0
        %v1939 = vadd.f32 0.0, %v1938
        %v1940 = vpop.f32.mrb[0].mxu0
        %v1941 = vpop.f32.mrb[0].mxu0
        %v1942 = vadd.f32 0.0, %v1941
        %v1943 = vpop.f32.mrb[0].mxu0
        %1944 = vmatprep.mubr.bf16.mxu0 0
        %1945 = vmatmul.mubr.bf16.gmra.mrb[0].mxu0 %v1797
        %v1946 = vpop.f32.mrb[0].mxu0
        %v1947 = vadd.f32 0.0, %v1946
        %v1948 = vpop.f32.mrb[0].mxu0
        %v1949 = vpop.f32.mrb[0].mxu0
        %v1950 = vadd.f32 0.0, %v1949
        %v1951 = vpop.f32.mrb[0].mxu0
        %1952 = vmatprep.mubr.bf16.mxu0 0
        %1953 = vmatmul.mubr.bf16.gmra.mrb[0].mxu0 %v1800
        %v1954 = vpop.f32.mrb[0].mxu0
        %v1955 = vadd.f32 0.0, %v1954
        %v1956 = vpop.f32.mrb[0].mxu0
        %v1957 = vpop.f32.mrb[0].mxu0
        %v1958 = vadd.f32 0.0, %v1957
        %v1959 = vpop.f32.mrb[0].mxu0
        %1960 = vmatprep.mubr.bf16.mxu0 0
        %1961 = vmatmul.mubr.bf16.gmra.mrb[0].mxu0 %v1803
        %v1962 = vpop.f32.mrb[0].mxu0
        %v1963 = vadd.f32 0.0, %v1962
        %v1964 = vpop.f32.mrb[0].mxu0
        %v1965 = vpop.f32.mrb[0].mxu0
        %v1966 = vadd.f32 0.0, %v1965
        %v1967 = vpop.f32.mrb[0].mxu0
        %1968 = vdwg.mxu0
        %v1969 = vadd.f32 %v1607, %v1843
        %v1970 = vadd.f32 %v1608, %v1846
        %v1971 = vadd.f32 %v1609, %v1851
        %v1972 = vadd.f32 %v1610, %v1854
        %v1973 = vadd.f32 %v1611, %v1859
        %v1974 = vadd.f32 %v1612, %v1862
        %v1975 = vadd.f32 %v1613, %v1867
        %v1976 = vadd.f32 %v1614, %v1870
        %v1977 = vadd.f32 %v1615, %v1875
        %v1978 = vadd.f32 %v1616, %v1878
        %v1979 = vadd.f32 %v1617, %v1883
        %v1980 = vadd.f32 %v1618, %v1886
        %v1981 = vadd.f32 %v1619, %v1891
        %v1982 = vadd.f32 %v1620, %v1894
        %v1983 = vadd.f32 %v1621, %v1899
        %v1984 = vadd.f32 %v1622, %v1902
        %v1985 = vadd.f32 %v1623, %v1907
        %v1986 = vadd.f32 %v1624, %v1910
        %v1987 = vadd.f32 %v1625, %v1915
        %v1988 = vadd.f32 %v1626, %v1918
        %v1989 = vadd.f32 %v1627, %v1923
        %v1990 = vadd.f32 %v1628, %v1926
        %v1991 = vadd.f32 %v1629, %v1931
        %v1992 = vadd.f32 %v1630, %v1934
        %v1993 = vadd.f32 %v1631, %v1939
        %v1994 = vadd.f32 %v1632, %v1942
        %v1995 = vadd.f32 %v1633, %v1947
        %v1996 = vadd.f32 %v1634, %v1950
        %v1997 = vadd.f32 %v1635, %v1955
        %v1998 = vadd.f32 %v1636, %v1958
        %v1999 = vadd.f32 %v1637, %v1963
        %v2000 = vadd.f32 %v1638, %v1966
        %v2001 = vld [vmem:[%s1642] sm:$0xf]
        %v2002 = vld [vmem:[%s1642 + $0x4] sm:$0xf]
        %v2003 = vld [vmem:[%s1642 + $0x8] sm:$0x1]
        %v2004 = vld [vmem:[%s1642 + $0xc] sm:$0xf]
        %v2005 = vld [vmem:[%s1642 + $0x10] sm:$0xf]
        %v2006 = vld [vmem:[%s1642 + $0x14] sm:$0x1]
        %v2007 = vld [vmem:[%s1642 + $0x18] sm:$0xf]
        %v2008 = vld [vmem:[%s1642 + $0x1c] sm:$0xf]
        %v2009 = vld [vmem:[%s1642 + $0x20] sm:$0x1]
        %v2010 = vld [vmem:[%s1642 + $0x24] sm:$0xf]
        %v2011 = vld [vmem:[%s1642 + $0x28] sm:$0xf]
        %v2012 = vld [vmem:[%s1642 + $0x2c] sm:$0x1]
        %v2013 = vld [vmem:[%s1642 + $0x30] sm:$0xf]
        %v2014 = vld [vmem:[%s1642 + $0x34] sm:$0xf]
        %v2015 = vld [vmem:[%s1642 + $0x38] sm:$0x1]
        %v2016 = vld [vmem:[%s1642 + $0x3c] sm:$0xf]
        %v2017 = vld [vmem:[%s1642 + $0x40] sm:$0xf]
        %v2018 = vld [vmem:[%s1642 + $0x44] sm:$0x1]
        %v2019 = vld [vmem:[%s1642 + $0x48] sm:$0xf]
        %v2020 = vld [vmem:[%s1642 + $0x4c] sm:$0xf]
        %v2021 = vld [vmem:[%s1642 + $0x50] sm:$0x1]
        %v2022 = vld [vmem:[%s1642 + $0x54] sm:$0xf]
        %v2023 = vld [vmem:[%s1642 + $0x58] sm:$0xf]
        %v2024 = vld [vmem:[%s1642 + $0x5c] sm:$0x1]
        %v2025 = vld [vmem:[%s1642 + $0x60] sm:$0xf]
        %v2026 = vld [vmem:[%s1642 + $0x64] sm:$0xf]
        %v2027 = vld [vmem:[%s1642 + $0x68] sm:$0x1]
        %v2028 = vld [vmem:[%s1642 + $0x6c] sm:$0xf]
        %v2029 = vld [vmem:[%s1642 + $0x70] sm:$0xf]
        %v2030 = vld [vmem:[%s1642 + $0x74] sm:$0x1]
        %v2031 = vld [vmem:[%s1642 + $0x78] sm:$0xf]
        %v2032 = vld [vmem:[%s1642 + $0x7c] sm:$0xf]
        %v2033 = vld [vmem:[%s1642 + $0x80] sm:$0x1]
        %v2034 = vld [vmem:[%s1642 + $0x84] sm:$0xf]
        %v2035 = vld [vmem:[%s1642 + $0x88] sm:$0xf]
        %v2036 = vld [vmem:[%s1642 + $0x8c] sm:$0x1]
        %v2037 = vld [vmem:[%s1642 + $0x90] sm:$0xf]
        %v2038 = vld [vmem:[%s1642 + $0x94] sm:$0xf]
        %v2039 = vld [vmem:[%s1642 + $0x98] sm:$0x1]
        %v2040 = vld [vmem:[%s1642 + $0x9c] sm:$0xf]
        %v2041 = vld [vmem:[%s1642 + $0xa0] sm:$0xf]
        %v2042 = vld [vmem:[%s1642 + $0xa4] sm:$0x1]
        %v2043 = vld [vmem:[%s1642 + $0xa8] sm:$0xf]
        %v2044 = vld [vmem:[%s1642 + $0xac] sm:$0xf]
        %v2045 = vld [vmem:[%s1642 + $0xb0] sm:$0x1]
        %v2046 = vld [vmem:[%s1642 + $0xb4] sm:$0xf]
        %v2047 = vld [vmem:[%s1642 + $0xb8] sm:$0xf]
        %v2048 = vld [vmem:[%s1642 + $0xbc] sm:$0x1]
        %v2050 = vshrl.u32 %v2001, 16
        %v2052 = vrot.slane %v2050, 4
        %v2053 = vshll.u32 %v2001, 16
        %v2055 = vrot.slane %v2053, 5
        %v2056 = vor.u32 %v2052, %v2055
        %v2057 = vrot.slane %v2056, 4
        %v2059 = vshll.u32 %v2002, 16
        %v2061 = vrot.slane %v2059, 5
        %v2062 = vsel %vm241, %v2057, %v2061
        %v2063 = vshrl.u32 %v2002, 16
        %v2065 = vrot.slane %v2063, 4
        %v2066 = vor.u32 %v2065, %v2061
        %v2067 = vrot.slane %v2066, 4
        %v2069 = vshll.u32 %v2003, 16
        %v2071 = vrot.slane %v2069, 5
        %v2072 = vsel %vm241, %v2067, %v2071
        %v2074 = vshrl.u32 %v2004, 16
        %v2076 = vrot.slane %v2074, 4
        %v2077 = vshll.u32 %v2004, 16
        %v2079 = vrot.slane %v2077, 5
        %v2080 = vor.u32 %v2076, %v2079
        %v2081 = vrot.slane %v2080, 4
        %v2083 = vshll.u32 %v2005, 16
        %v2085 = vrot.slane %v2083, 5
        %v2086 = vsel %vm241, %v2081, %v2085
        %v2087 = vshrl.u32 %v2005, 16
        %v2089 = vrot.slane %v2087, 4
        %v2090 = vor.u32 %v2089, %v2085
        %v2091 = vrot.slane %v2090, 4
        %v2093 = vshll.u32 %v2006, 16
        %v2095 = vrot.slane %v2093, 5
        %v2096 = vsel %vm241, %v2091, %v2095
        %v2098 = vshrl.u32 %v2007, 16
        %v2100 = vrot.slane %v2098, 4
        %v2101 = vshll.u32 %v2007, 16
        %v2103 = vrot.slane %v2101, 5
        %v2104 = vor.u32 %v2100, %v2103
        %v2105 = vrot.slane %v2104, 4
        %v2107 = vshll.u32 %v2008, 16
        %v2109 = vrot.slane %v2107, 5
        %v2110 = vsel %vm241, %v2105, %v2109
        %v2111 = vshrl.u32 %v2008, 16
        %v2113 = vrot.slane %v2111, 4
        %v2114 = vor.u32 %v2113, %v2109
        %v2115 = vrot.slane %v2114, 4
        %v2117 = vshll.u32 %v2009, 16
        %v2119 = vrot.slane %v2117, 5
        %v2120 = vsel %vm241, %v2115, %v2119
        %v2122 = vshrl.u32 %v2010, 16
        %v2124 = vrot.slane %v2122, 4
        %v2125 = vshll.u32 %v2010, 16
        %v2127 = vrot.slane %v2125, 5
        %v2128 = vor.u32 %v2124, %v2127
        %v2129 = vrot.slane %v2128, 4
        %v2131 = vshll.u32 %v2011, 16
        %v2133 = vrot.slane %v2131, 5
        %v2134 = vsel %vm241, %v2129, %v2133
        %v2135 = vshrl.u32 %v2011, 16
        %v2137 = vrot.slane %v2135, 4
        %v2138 = vor.u32 %v2137, %v2133
        %v2139 = vrot.slane %v2138, 4
        %v2141 = vshll.u32 %v2012, 16
        %v2143 = vrot.slane %v2141, 5
        %v2144 = vsel %vm241, %v2139, %v2143
        %v2146 = vshrl.u32 %v2013, 16
        %v2148 = vrot.slane %v2146, 4
        %v2149 = vshll.u32 %v2013, 16
        %v2151 = vrot.slane %v2149, 5
        %v2152 = vor.u32 %v2148, %v2151
        %v2153 = vrot.slane %v2152, 4
        %v2155 = vshll.u32 %v2014, 16
        %v2157 = vrot.slane %v2155, 5
        %v2158 = vsel %vm241, %v2153, %v2157
        %v2159 = vshrl.u32 %v2014, 16
        %v2161 = vrot.slane %v2159, 4
        %v2162 = vor.u32 %v2161, %v2157
        %v2163 = vrot.slane %v2162, 4
        %v2165 = vshll.u32 %v2015, 16
        %v2167 = vrot.slane %v2165, 5
        %v2168 = vsel %vm241, %v2163, %v2167
        %v2170 = vshrl.u32 %v2016, 16
        %v2172 = vrot.slane %v2170, 4
        %v2173 = vshll.u32 %v2016, 16
        %v2175 = vrot.slane %v2173, 5
        %v2176 = vor.u32 %v2172, %v2175
        %v2177 = vrot.slane %v2176, 4
        %v2179 = vshll.u32 %v2017, 16
        %v2181 = vrot.slane %v2179, 5
        %v2182 = vsel %vm241, %v2177, %v2181
        %v2183 = vshrl.u32 %v2017, 16
        %v2185 = vrot.slane %v2183, 4
        %v2186 = vor.u32 %v2185, %v2181
        %v2187 = vrot.slane %v2186, 4
        %v2189 = vshll.u32 %v2018, 16
        %v2191 = vrot.slane %v2189, 5
        %v2192 = vsel %vm241, %v2187, %v2191
        %v2194 = vshrl.u32 %v2019, 16
        %v2196 = vrot.slane %v2194, 4
        %v2197 = vshll.u32 %v2019, 16
        %v2199 = vrot.slane %v2197, 5
        %v2200 = vor.u32 %v2196, %v2199
        %v2201 = vrot.slane %v2200, 4
        %v2203 = vshll.u32 %v2020, 16
        %v2205 = vrot.slane %v2203, 5
        %v2206 = vsel %vm241, %v2201, %v2205
        %v2207 = vshrl.u32 %v2020, 16
        %v2209 = vrot.slane %v2207, 4
        %v2210 = vor.u32 %v2209, %v2205
        %v2211 = vrot.slane %v2210, 4
        %v2213 = vshll.u32 %v2021, 16
        %v2215 = vrot.slane %v2213, 5
        %v2216 = vsel %vm241, %v2211, %v2215
        %v2218 = vshrl.u32 %v2022, 16
        %v2220 = vrot.slane %v2218, 4
        %v2221 = vshll.u32 %v2022, 16
        %v2223 = vrot.slane %v2221, 5
        %v2224 = vor.u32 %v2220, %v2223
        %v2225 = vrot.slane %v2224, 4
        %v2227 = vshll.u32 %v2023, 16
        %v2229 = vrot.slane %v2227, 5
        %v2230 = vsel %vm241, %v2225, %v2229
        %v2231 = vshrl.u32 %v2023, 16
        %v2233 = vrot.slane %v2231, 4
        %v2234 = vor.u32 %v2233, %v2229
        %v2235 = vrot.slane %v2234, 4
        %v2237 = vshll.u32 %v2024, 16
        %v2239 = vrot.slane %v2237, 5
        %v2240 = vsel %vm241, %v2235, %v2239
        %v2242 = vshrl.u32 %v2025, 16
        %v2244 = vrot.slane %v2242, 4
        %v2245 = vshll.u32 %v2025, 16
        %v2247 = vrot.slane %v2245, 5
        %v2248 = vor.u32 %v2244, %v2247
        %v2249 = vrot.slane %v2248, 4
        %v2251 = vshll.u32 %v2026, 16
        %v2253 = vrot.slane %v2251, 5
        %v2254 = vsel %vm241, %v2249, %v2253
        %v2255 = vshrl.u32 %v2026, 16
        %v2257 = vrot.slane %v2255, 4
        %v2258 = vor.u32 %v2257, %v2253
        %v2259 = vrot.slane %v2258, 4
        %v2261 = vshll.u32 %v2027, 16
        %v2263 = vrot.slane %v2261, 5
        %v2264 = vsel %vm241, %v2259, %v2263
        %v2266 = vshrl.u32 %v2028, 16
        %v2268 = vrot.slane %v2266, 4
        %v2269 = vshll.u32 %v2028, 16
        %v2271 = vrot.slane %v2269, 5
        %v2272 = vor.u32 %v2268, %v2271
        %v2273 = vrot.slane %v2272, 4
        %v2275 = vshll.u32 %v2029, 16
        %v2277 = vrot.slane %v2275, 5
        %v2278 = vsel %vm241, %v2273, %v2277
        %v2279 = vshrl.u32 %v2029, 16
        %v2281 = vrot.slane %v2279, 4
        %v2282 = vor.u32 %v2281, %v2277
        %v2283 = vrot.slane %v2282, 4
        %v2285 = vshll.u32 %v2030, 16
        %v2287 = vrot.slane %v2285, 5
        %v2288 = vsel %vm241, %v2283, %v2287
        %v2290 = vshrl.u32 %v2031, 16
        %v2292 = vrot.slane %v2290, 4
        %v2293 = vshll.u32 %v2031, 16
        %v2295 = vrot.slane %v2293, 5
        %v2296 = vor.u32 %v2292, %v2295
        %v2297 = vrot.slane %v2296, 4
        %v2299 = vshll.u32 %v2032, 16
        %v2301 = vrot.slane %v2299, 5
        %v2302 = vsel %vm241, %v2297, %v2301
        %v2303 = vshrl.u32 %v2032, 16
        %v2305 = vrot.slane %v2303, 4
        %v2306 = vor.u32 %v2305, %v2301
        %v2307 = vrot.slane %v2306, 4
        %v2309 = vshll.u32 %v2033, 16
        %v2311 = vrot.slane %v2309, 5
        %v2312 = vsel %vm241, %v2307, %v2311
        %v2314 = vshrl.u32 %v2034, 16
        %v2316 = vrot.slane %v2314, 4
        %v2317 = vshll.u32 %v2034, 16
        %v2319 = vrot.slane %v2317, 5
        %v2320 = vor.u32 %v2316, %v2319
        %v2321 = vrot.slane %v2320, 4
        %v2323 = vshll.u32 %v2035, 16
        %v2325 = vrot.slane %v2323, 5
        %v2326 = vsel %vm241, %v2321, %v2325
        %v2327 = vshrl.u32 %v2035, 16
        %v2329 = vrot.slane %v2327, 4
        %v2330 = vor.u32 %v2329, %v2325
        %v2331 = vrot.slane %v2330, 4
        %v2333 = vshll.u32 %v2036, 16
        %v2335 = vrot.slane %v2333, 5
        %v2336 = vsel %vm241, %v2331, %v2335
        %v2338 = vshrl.u32 %v2037, 16
        %v2340 = vrot.slane %v2338, 4
        %v2341 = vshll.u32 %v2037, 16
        %v2343 = vrot.slane %v2341, 5
        %v2344 = vor.u32 %v2340, %v2343
        %v2345 = vrot.slane %v2344, 4
        %v2347 = vshll.u32 %v2038, 16
        %v2349 = vrot.slane %v2347, 5
        %v2350 = vsel %vm241, %v2345, %v2349
        %v2351 = vshrl.u32 %v2038, 16
        %v2353 = vrot.slane %v2351, 4
        %v2354 = vor.u32 %v2353, %v2349
        %v2355 = vrot.slane %v2354, 4
        %v2357 = vshll.u32 %v2039, 16
        %v2359 = vrot.slane %v2357, 5
        %v2360 = vsel %vm241, %v2355, %v2359
        %v2362 = vshrl.u32 %v2040, 16
        %v2364 = vrot.slane %v2362, 4
        %v2365 = vshll.u32 %v2040, 16
        %v2367 = vrot.slane %v2365, 5
        %v2368 = vor.u32 %v2364, %v2367
        %v2369 = vrot.slane %v2368, 4
        %v2371 = vshll.u32 %v2041, 16
        %v2373 = vrot.slane %v2371, 5
        %v2374 = vsel %vm241, %v2369, %v2373
        %v2375 = vshrl.u32 %v2041, 16
        %v2377 = vrot.slane %v2375, 4
        %v2378 = vor.u32 %v2377, %v2373
        %v2379 = vrot.slane %v2378, 4
        %v2381 = vshll.u32 %v2042, 16
        %v2383 = vrot.slane %v2381, 5
        %v2384 = vsel %vm241, %v2379, %v2383
        %v2386 = vshrl.u32 %v2043, 16
        %v2388 = vrot.slane %v2386, 4
        %v2389 = vshll.u32 %v2043, 16
        %v2391 = vrot.slane %v2389, 5
        %v2392 = vor.u32 %v2388, %v2391
        %v2393 = vrot.slane %v2392, 4
        %v2395 = vshll.u32 %v2044, 16
        %v2397 = vrot.slane %v2395, 5
        %v2398 = vsel %vm241, %v2393, %v2397
        %v2399 = vshrl.u32 %v2044, 16
        %v2401 = vrot.slane %v2399, 4
        %v2402 = vor.u32 %v2401, %v2397
        %v2403 = vrot.slane %v2402, 4
        %v2405 = vshll.u32 %v2045, 16
        %v2407 = vrot.slane %v2405, 5
        %v2408 = vsel %vm241, %v2403, %v2407
        %v2410 = vshrl.u32 %v2046, 16
        %v2412 = vrot.slane %v2410, 4
        %v2413 = vshll.u32 %v2046, 16
        %v2415 = vrot.slane %v2413, 5
        %v2416 = vor.u32 %v2412, %v2415
        %v2417 = vrot.slane %v2416, 4
        %v2419 = vshll.u32 %v2047, 16
        %v2421 = vrot.slane %v2419, 5
        %v2422 = vsel %vm241, %v2417, %v2421
        %v2423 = vshrl.u32 %v2047, 16
        %v2425 = vrot.slane %v2423, 4
        %v2426 = vor.u32 %v2425, %v2421
        %v2427 = vrot.slane %v2426, 4
        %v2429 = vshll.u32 %v2048, 16
        %v2431 = vrot.slane %v2429, 5
        %v2432 = vsel %vm241, %v2427, %v2431
        %s2433 = scalar_lea.vmem %s1, 8
        %v2434 = vld [vmem:[%s2433] sm:$0x3]
        %v2435 = vunpack.c.l.b16 %v2062
        %v2436 = vunpack.c.l.b16 %v2072
        %v2437 = vunpack.c.l.b16 %v2086
        %v2438 = vunpack.c.l.b16 %v2096
        %v2439 = vunpack.c.l.b16 %v2110
        %v2440 = vunpack.c.l.b16 %v2120
        %v2441 = vunpack.c.l.b16 %v2134
        %v2442 = vunpack.c.l.b16 %v2144
        %v2443 = vunpack.c.l.b16 %v2158
        %v2444 = vunpack.c.l.b16 %v2168
        %v2445 = vunpack.c.l.b16 %v2182
        %v2446 = vunpack.c.l.b16 %v2192
        %v2447 = vunpack.c.l.b16 %v2206
        %v2448 = vunpack.c.l.b16 %v2216
        %v2449 = vunpack.c.l.b16 %v2230
        %v2450 = vunpack.c.l.b16 %v2240
        %v2451 = vunpack.c.l.b16 %v2254
        %v2452 = vunpack.c.l.b16 %v2264
        %v2453 = vunpack.c.l.b16 %v2278
        %v2454 = vunpack.c.l.b16 %v2288
        %v2455 = vunpack.c.l.b16 %v2302
        %v2456 = vunpack.c.l.b16 %v2312
        %v2457 = vunpack.c.l.b16 %v2326
        %v2458 = vunpack.c.l.b16 %v2336
        %v2459 = vunpack.c.l.b16 %v2350
        %v2460 = vunpack.c.l.b16 %v2360
        %v2461 = vunpack.c.l.b16 %v2374
        %v2462 = vunpack.c.l.b16 %v2384
        %v2463 = vunpack.c.l.b16 %v2398
        %v2464 = vunpack.c.l.b16 %v2408
        %v2465 = vunpack.c.l.b16 %v2422
        %v2466 = vunpack.c.l.b16 %v2432
        %v2467 = vpack.c.b16 %v2436, %v2435
        %v2468 = vpack.c.b16 %v2438, %v2437
        %v2469 = vpack.c.b16 %v2440, %v2439
        %v2470 = vpack.c.b16 %v2442, %v2441
        %v2471 = vpack.c.b16 %v2444, %v2443
        %v2472 = vpack.c.b16 %v2446, %v2445
        %v2473 = vpack.c.b16 %v2448, %v2447
        %v2474 = vpack.c.b16 %v2450, %v2449
        %v2475 = vpack.c.b16 %v2452, %v2451
        %v2476 = vpack.c.b16 %v2454, %v2453
        %v2477 = vpack.c.b16 %v2456, %v2455
        %v2478 = vpack.c.b16 %v2458, %v2457
        %v2479 = vpack.c.b16 %v2460, %v2459
        %v2480 = vpack.c.b16 %v2462, %v2461
        %v2481 = vpack.c.b16 %v2464, %v2463
        %v2482 = vpack.c.b16 %v2466, %v2465
        %v2484 = vsel %vm676, %v2467, 0
        %v2487 = vsel %vm676, %v2468, 0
        %v2490 = vsel %vm676, %v2469, 0
        %v2493 = vsel %vm676, %v2470, 0
        %v2496 = vsel %vm676, %v2471, 0
        %v2499 = vsel %vm676, %v2472, 0
        %v2502 = vsel %vm676, %v2473, 0
        %v2505 = vsel %vm676, %v2474, 0
        %v2508 = vsel %vm676, %v2475, 0
        %v2511 = vsel %vm676, %v2476, 0
        %v2514 = vsel %vm676, %v2477, 0
        %v2517 = vsel %vm676, %v2478, 0
        %v2520 = vsel %vm676, %v2479, 0
        %v2523 = vsel %vm676, %v2480, 0
        %v2526 = vsel %vm676, %v2481, 0
        %v2529 = vsel %vm676, %v2482, 0
        %v2532 = vsel %vm725, %v2434, 0
        %2534 = vmatprep.subr.bf16.mxu0 0
        %2535 = vmatpush1.bf16.msra.mxu0 %v2532
        %2536 = vmatprep.subr.bf16.mxu0 0
        %2537 = vmatpush1.bf16.msra.mxu0 0
        %2538 = vmatprep.subr.bf16.mxu0 0
        %2539 = vmatpush1.bf16.msra.mxu0 0
        %2540 = vmatprep.subr.bf16.mxu0 0
        %2541 = vmatpush1.bf16.msra.mxu0 0
        %2542 = vmatprep.subr.bf16.mxu0 0
        %2543 = vmatpush1.bf16.msra.mxu0 0
        %2544 = vmatprep.subr.bf16.mxu0 0
        %2545 = vmatpush1.bf16.msra.mxu0 0
        %2546 = vmatprep.subr.bf16.mxu0 0
        %2547 = vmatpush1.bf16.msra.mxu0 0
        %2548 = vmatprep.subr.bf16.mxu0 0
        %2549 = vmatpush1.bf16.msra.mxu0 0
        %2550 = vmatprep.subr.bf16.mxu0 0
        %2551 = vmatpush1.bf16.msra.mxu0 0
        %2552 = vmatprep.subr.bf16.mxu0 0
        %2553 = vmatpush1.bf16.msra.mxu0 0
        %2554 = vmatprep.subr.bf16.mxu0 0
        %2555 = vmatpush1.bf16.msra.mxu0 0
        %2556 = vmatprep.subr.bf16.mxu0 0
        %2557 = vmatpush1.bf16.msra.mxu0 0
        %2558 = vmatprep.subr.bf16.mxu0 0
        %2559 = vmatpush1.bf16.msra.mxu0 0
        %2560 = vmatprep.subr.bf16.mxu0 0
        %2561 = vmatpush1.bf16.msra.mxu0 0
        %2562 = vmatprep.subr.bf16.mxu0 0
        %2563 = vmatpush1.bf16.msra.mxu0 0
        %2564 = vmatprep.subr.bf16.mxu0 0
        %2565 = vmatpush1.bf16.msra.mxu0 0
        %2566 = vmatprep.mubr.bf16.mxu0 0
        %2567 = vmatmul.mubr.bf16.gmra.mrb[0].mxu0 %v2484
        %v2568 = vpop.f32.mrb[0].mxu0
        %v2569 = vadd.f32 0.0, %v2568
        %v2570 = vpop.f32.mrb[0].mxu0
        %v2571 = vpop.f32.mrb[0].mxu0
        %v2572 = vadd.f32 0.0, %v2571
        %v2573 = vpop.f32.mrb[0].mxu0
        %2574 = vmatprep.mubr.bf16.mxu0 0
        %2575 = vmatmul.mubr.bf16.gmra.mrb[0].mxu0 %v2487
        %v2576 = vpop.f32.mrb[0].mxu0
        %v2577 = vadd.f32 0.0, %v2576
        %v2578 = vpop.f32.mrb[0].mxu0
        %v2579 = vpop.f32.mrb[0].mxu0
        %v2580 = vadd.f32 0.0, %v2579
        %v2581 = vpop.f32.mrb[0].mxu0
        %2582 = vmatprep.mubr.bf16.mxu0 0
        %2583 = vmatmul.mubr.bf16.gmra.mrb[0].mxu0 %v2490
        %v2584 = vpop.f32.mrb[0].mxu0
        %v2585 = vadd.f32 0.0, %v2584
        %v2586 = vpop.f32.mrb[0].mxu0
        %v2587 = vpop.f32.mrb[0].mxu0
        %v2588 = vadd.f32 0.0, %v2587
        %v2589 = vpop.f32.mrb[0].mxu0
        %2590 = vmatprep.mubr.bf16.mxu0 0
        %2591 = vmatmul.mubr.bf16.gmra.mrb[0].mxu0 %v2493
        %v2592 = vpop.f32.mrb[0].mxu0
        %v2593 = vadd.f32 0.0, %v2592
        %v2594 = vpop.f32.mrb[0].mxu0
        %v2595 = vpop.f32.mrb[0].mxu0
        %v2596 = vadd.f32 0.0, %v2595
        %v2597 = vpop.f32.mrb[0].mxu0
        %2598 = vmatprep.mubr.bf16.mxu0 0
        %2599 = vmatmul.mubr.bf16.gmra.mrb[0].mxu0 %v2496
        %v2600 = vpop.f32.mrb[0].mxu0
        %v2601 = vadd.f32 0.0, %v2600
        %v2602 = vpop.f32.mrb[0].mxu0
        %v2603 = vpop.f32.mrb[0].mxu0
        %v2604 = vadd.f32 0.0, %v2603
        %v2605 = vpop.f32.mrb[0].mxu0
        %2606 = vmatprep.mubr.bf16.mxu0 0
        %2607 = vmatmul.mubr.bf16.gmra.mrb[0].mxu0 %v2499
        %v2608 = vpop.f32.mrb[0].mxu0
        %v2609 = vadd.f32 0.0, %v2608
        %v2610 = vpop.f32.mrb[0].mxu0
        %v2611 = vpop.f32.mrb[0].mxu0
        %v2612 = vadd.f32 0.0, %v2611
        %v2613 = vpop.f32.mrb[0].mxu0
        %2614 = vmatprep.mubr.bf16.mxu0 0
        %2615 = vmatmul.mubr.bf16.gmra.mrb[0].mxu0 %v2502
        %v2616 = vpop.f32.mrb[0].mxu0
        %v2617 = vadd.f32 0.0, %v2616
        %v2618 = vpop.f32.mrb[0].mxu0
        %v2619 = vpop.f32.mrb[0].mxu0
        %v2620 = vadd.f32 0.0, %v2619
        %v2621 = vpop.f32.mrb[0].mxu0
        %2622 = vmatprep.mubr.bf16.mxu0 0
        %2623 = vmatmul.mubr.bf16.gmra.mrb[0].mxu0 %v2505
        %v2624 = vpop.f32.mrb[0].mxu0
        %v2625 = vadd.f32 0.0, %v2624
        %v2626 = vpop.f32.mrb[0].mxu0
        %v2627 = vpop.f32.mrb[0].mxu0
        %v2628 = vadd.f32 0.0, %v2627
        %v2629 = vpop.f32.mrb[0].mxu0
        %2630 = vmatprep.mubr.bf16.mxu0 0
        %2631 = vmatmul.mubr.bf16.gmra.mrb[0].mxu0 %v2508
        %v2632 = vpop.f32.mrb[0].mxu0
        %v2633 = vadd.f32 0.0, %v2632
        %v2634 = vpop.f32.mrb[0].mxu0
        %v2635 = vpop.f32.mrb[0].mxu0
        %v2636 = vadd.f32 0.0, %v2635
        %v2637 = vpop.f32.mrb[0].mxu0
        %2638 = vmatprep.mubr.bf16.mxu0 0
        %2639 = vmatmul.mubr.bf16.gmra.mrb[0].mxu0 %v2511
        %v2640 = vpop.f32.mrb[0].mxu0
        %v2641 = vadd.f32 0.0, %v2640
        %v2642 = vpop.f32.mrb[0].mxu0
        %v2643 = vpop.f32.mrb[0].mxu0
        %v2644 = vadd.f32 0.0, %v2643
        %v2645 = vpop.f32.mrb[0].mxu0
        %2646 = vmatprep.mubr.bf16.mxu0 0
        %2647 = vmatmul.mubr.bf16.gmra.mrb[0].mxu0 %v2514
        %v2648 = vpop.f32.mrb[0].mxu0
        %v2649 = vadd.f32 0.0, %v2648
        %v2650 = vpop.f32.mrb[0].mxu0
        %v2651 = vpop.f32.mrb[0].mxu0
        %v2652 = vadd.f32 0.0, %v2651
        %v2653 = vpop.f32.mrb[0].mxu0
        %2654 = vmatprep.mubr.bf16.mxu0 0
        %2655 = vmatmul.mubr.bf16.gmra.mrb[0].mxu0 %v2517
        %v2656 = vpop.f32.mrb[0].mxu0
        %v2657 = vadd.f32 0.0, %v2656
        %v2658 = vpop.f32.mrb[0].mxu0
        %v2659 = vpop.f32.mrb[0].mxu0
        %v2660 = vadd.f32 0.0, %v2659
        %v2661 = vpop.f32.mrb[0].mxu0
        %2662 = vmatprep.mubr.bf16.mxu0 0
        %2663 = vmatmul.mubr.bf16.gmra.mrb[0].mxu0 %v2520
        %v2664 = vpop.f32.mrb[0].mxu0
        %v2665 = vadd.f32 0.0, %v2664
        %v2666 = vpop.f32.mrb[0].mxu0
        %v2667 = vpop.f32.mrb[0].mxu0
        %v2668 = vadd.f32 0.0, %v2667
        %v2669 = vpop.f32.mrb[0].mxu0
        %2670 = vmatprep.mubr.bf16.mxu0 0
        %2671 = vmatmul.mubr.bf16.gmra.mrb[0].mxu0 %v2523
        %v2672 = vpop.f32.mrb[0].mxu0
        %v2673 = vadd.f32 0.0, %v2672
        %v2674 = vpop.f32.mrb[0].mxu0
        %v2675 = vpop.f32.mrb[0].mxu0
        %v2676 = vadd.f32 0.0, %v2675
        %v2677 = vpop.f32.mrb[0].mxu0
        %2678 = vmatprep.mubr.bf16.mxu0 0
        %2679 = vmatmul.mubr.bf16.gmra.mrb[0].mxu0 %v2526
        %v2680 = vpop.f32.mrb[0].mxu0
        %v2681 = vadd.f32 0.0, %v2680
        %v2682 = vpop.f32.mrb[0].mxu0
        %v2683 = vpop.f32.mrb[0].mxu0
        %v2684 = vadd.f32 0.0, %v2683
        %v2685 = vpop.f32.mrb[0].mxu0
        %2686 = vmatprep.mubr.bf16.mxu0 0
        %2687 = vmatmul.mubr.bf16.gmra.mrb[0].mxu0 %v2529
        %v2688 = vpop.f32.mrb[0].mxu0
        %v2689 = vadd.f32 0.0, %v2688
        %v2690 = vpop.f32.mrb[0].mxu0
        %v2691 = vpop.f32.mrb[0].mxu0
        %v2692 = vadd.f32 0.0, %v2691
        %v2693 = vpop.f32.mrb[0].mxu0
        %2694 = vdwg.mxu0
        %v2695 = vadd.f32 %v1969, %v2569
        %v2696 = vadd.f32 %v1970, %v2572
        %v2697 = vadd.f32 %v1971, %v2577
        %v2698 = vadd.f32 %v1972, %v2580
        %v2699 = vadd.f32 %v1973, %v2585
        %v2700 = vadd.f32 %v1974, %v2588
        %v2701 = vadd.f32 %v1975, %v2593
        %v2702 = vadd.f32 %v1976, %v2596
        %v2703 = vadd.f32 %v1977, %v2601
        %v2704 = vadd.f32 %v1978, %v2604
        %v2705 = vadd.f32 %v1979, %v2609
        %v2706 = vadd.f32 %v1980, %v2612
        %v2707 = vadd.f32 %v1981, %v2617
        %v2708 = vadd.f32 %v1982, %v2620
        %v2709 = vadd.f32 %v1983, %v2625
        %v2710 = vadd.f32 %v1984, %v2628
        %v2711 = vadd.f32 %v1985, %v2633
        %v2712 = vadd.f32 %v1986, %v2636
        %v2713 = vadd.f32 %v1987, %v2641
        %v2714 = vadd.f32 %v1988, %v2644
        %v2715 = vadd.f32 %v1989, %v2649
        %v2716 = vadd.f32 %v1990, %v2652
        %v2717 = vadd.f32 %v1991, %v2657
        %v2718 = vadd.f32 %v1992, %v2660
        %v2719 = vadd.f32 %v1993, %v2665
        %v2720 = vadd.f32 %v1994, %v2668
        %v2721 = vadd.f32 %v1995, %v2673
        %v2722 = vadd.f32 %v1996, %v2676
        %v2723 = vadd.f32 %v1997, %v2681
        %v2724 = vadd.f32 %v1998, %v2684
        %v2725 = vadd.f32 %v1999, %v2689
        %v2726 = vadd.f32 %v2000, %v2692
        %v2727 = vld [vmem:[%s1642] sm:$0xe]
        %v2728 = vld [vmem:[%s1642 + $0xc] sm:$0xe]
        %v2729 = vld [vmem:[%s1642 + $0x18] sm:$0xe]
        %v2730 = vld [vmem:[%s1642 + $0x24] sm:$0xe]
        %v2731 = vld [vmem:[%s1642 + $0x30] sm:$0xe]
        %v2732 = vld [vmem:[%s1642 + $0x3c] sm:$0xe]
        %v2733 = vld [vmem:[%s1642 + $0x48] sm:$0xe]
        %v2734 = vld [vmem:[%s1642 + $0x54] sm:$0xe]
        %v2735 = vld [vmem:[%s1642 + $0x60] sm:$0xe]
        %v2736 = vld [vmem:[%s1642 + $0x6c] sm:$0xe]
        %v2737 = vld [vmem:[%s1642 + $0x78] sm:$0xe]
        %v2738 = vld [vmem:[%s1642 + $0x84] sm:$0xe]
        %v2739 = vld [vmem:[%s1642 + $0x90] sm:$0xe]
        %v2740 = vld [vmem:[%s1642 + $0x9c] sm:$0xe]
        %v2741 = vld [vmem:[%s1642 + $0xa8] sm:$0xe]
        %v2742 = vld [vmem:[%s1642 + $0xb4] sm:$0xe]
        %v2791 = vrot.slane %v2727, 5
        %v2792 = vrot.slane %v2791, 4
        %v2793 = vrot.slane %v2002, 5
        %v2794 = vsel %vm1232, %v2792, %v2793
        %v2795 = vrot.slane %v2793, 4
        %v2796 = vrot.slane %v2003, 5
        %v2797 = vsel %vm1232, %v2795, %v2796
        %v2798 = vrot.slane %v2728, 5
        %v2799 = vrot.slane %v2798, 4
        %v2800 = vrot.slane %v2005, 5
        %v2801 = vsel %vm1232, %v2799, %v2800
        %v2802 = vrot.slane %v2800, 4
        %v2803 = vrot.slane %v2006, 5
        %v2804 = vsel %vm1232, %v2802, %v2803
        %v2805 = vrot.slane %v2729, 5
        %v2806 = vrot.slane %v2805, 4
        %v2807 = vrot.slane %v2008, 5
        %v2808 = vsel %vm1232, %v2806, %v2807
        %v2809 = vrot.slane %v2807, 4
        %v2810 = vrot.slane %v2009, 5
        %v2811 = vsel %vm1232, %v2809, %v2810
        %v2812 = vrot.slane %v2730, 5
        %v2813 = vrot.slane %v2812, 4
        %v2814 = vrot.slane %v2011, 5
        %v2815 = vsel %vm1232, %v2813, %v2814
        %v2816 = vrot.slane %v2814, 4
        %v2817 = vrot.slane %v2012, 5
        %v2818 = vsel %vm1232, %v2816, %v2817
        %v2819 = vrot.slane %v2731, 5
        %v2820 = vrot.slane %v2819, 4
        %v2821 = vrot.slane %v2014, 5
        %v2822 = vsel %vm1232, %v2820, %v2821
        %v2823 = vrot.slane %v2821, 4
        %v2824 = vrot.slane %v2015, 5
        %v2825 = vsel %vm1232, %v2823, %v2824
        %v2826 = vrot.slane %v2732, 5
        %v2827 = vrot.slane %v2826, 4
        %v2828 = vrot.slane %v2017, 5
        %v2829 = vsel %vm1232, %v2827, %v2828
        %v2830 = vrot.slane %v2828, 4
        %v2831 = vrot.slane %v2018, 5
        %v2832 = vsel %vm1232, %v2830, %v2831
        %v2833 = vrot.slane %v2733, 5
        %v2834 = vrot.slane %v2833, 4
        %v2835 = vrot.slane %v2020, 5
        %v2836 = vsel %vm1232, %v2834, %v2835
        %v2837 = vrot.slane %v2835, 4
        %v2838 = vrot.slane %v2021, 5
        %v2839 = vsel %vm1232, %v2837, %v2838
        %v2840 = vrot.slane %v2734, 5
        %v2841 = vrot.slane %v2840, 4
        %v2842 = vrot.slane %v2023, 5
        %v2843 = vsel %vm1232, %v2841, %v2842
        %v2844 = vrot.slane %v2842, 4
        %v2845 = vrot.slane %v2024, 5
        %v2846 = vsel %vm1232, %v2844, %v2845
        %v2847 = vrot.slane %v2735, 5
        %v2848 = vrot.slane %v2847, 4
        %v2849 = vrot.slane %v2026, 5
        %v2850 = vsel %vm1232, %v2848, %v2849
        %v2851 = vrot.slane %v2849, 4
        %v2852 = vrot.slane %v2027, 5
        %v2853 = vsel %vm1232, %v2851, %v2852
        %v2854 = vrot.slane %v2736, 5
        %v2855 = vrot.slane %v2854, 4
        %v2856 = vrot.slane %v2029, 5
        %v2857 = vsel %vm1232, %v2855, %v2856
        %v2858 = vrot.slane %v2856, 4
        %v2859 = vrot.slane %v2030, 5
        %v2860 = vsel %vm1232, %v2858, %v2859
        %v2861 = vrot.slane %v2737, 5
        %v2862 = vrot.slane %v2861, 4
        %v2863 = vrot.slane %v2032, 5
        %v2864 = vsel %vm1232, %v2862, %v2863
        %v2865 = vrot.slane %v2863, 4
        %v2866 = vrot.slane %v2033, 5
        %v2867 = vsel %vm1232, %v2865, %v2866
        %v2868 = vrot.slane %v2738, 5
        %v2869 = vrot.slane %v2868, 4
        %v2870 = vrot.slane %v2035, 5
        %v2871 = vsel %vm1232, %v2869, %v2870
        %v2872 = vrot.slane %v2870, 4
        %v2873 = vrot.slane %v2036, 5
        %v2874 = vsel %vm1232, %v2872, %v2873
        %v2875 = vrot.slane %v2739, 5
        %v2876 = vrot.slane %v2875, 4
        %v2877 = vrot.slane %v2038, 5
        %v2878 = vsel %vm1232, %v2876, %v2877
        %v2879 = vrot.slane %v2877, 4
        %v2880 = vrot.slane %v2039, 5
        %v2881 = vsel %vm1232, %v2879, %v2880
        %v2882 = vrot.slane %v2740, 5
        %v2883 = vrot.slane %v2882, 4
        %v2884 = vrot.slane %v2041, 5
        %v2885 = vsel %vm1232, %v2883, %v2884
        %v2886 = vrot.slane %v2884, 4
        %v2887 = vrot.slane %v2042, 5
        %v2888 = vsel %vm1232, %v2886, %v2887
        %v2889 = vrot.slane %v2741, 5
        %v2890 = vrot.slane %v2889, 4
        %v2891 = vrot.slane %v2044, 5
        %v2892 = vsel %vm1232, %v2890, %v2891
        %v2893 = vrot.slane %v2891, 4
        %v2894 = vrot.slane %v2045, 5
        %v2895 = vsel %vm1232, %v2893, %v2894
        %v2896 = vrot.slane %v2742, 5
        %v2897 = vrot.slane %v2896, 4
        %v2898 = vrot.slane %v2047, 5
        %v2899 = vsel %vm1232, %v2897, %v2898
        %v2900 = vrot.slane %v2898, 4
        %v2901 = vrot.slane %v2048, 5
        %v2902 = vsel %vm1232, %v2900, %v2901
        %s2903 = scalar_lea.vmem %s1, 10
        %v2904 = vld [vmem:[%s2903] sm:$0x3]
        %v2905 = vunpack.c.l.b16 %v2794
        %v2906 = vunpack.c.l.b16 %v2797
        %v2907 = vunpack.c.l.b16 %v2801
        %v2908 = vunpack.c.l.b16 %v2804
        %v2909 = vunpack.c.l.b16 %v2808
        %v2910 = vunpack.c.l.b16 %v2811
        %v2911 = vunpack.c.l.b16 %v2815
        %v2912 = vunpack.c.l.b16 %v2818
        %v2913 = vunpack.c.l.b16 %v2822
        %v2914 = vunpack.c.l.b16 %v2825
        %v2915 = vunpack.c.l.b16 %v2829
        %v2916 = vunpack.c.l.b16 %v2832
        %v2917 = vunpack.c.l.b16 %v2836
        %v2918 = vunpack.c.l.b16 %v2839
        %v2919 = vunpack.c.l.b16 %v2843
        %v2920 = vunpack.c.l.b16 %v2846
        %v2921 = vunpack.c.l.b16 %v2850
        %v2922 = vunpack.c.l.b16 %v2853
        %v2923 = vunpack.c.l.b16 %v2857
        %v2924 = vunpack.c.l.b16 %v2860
        %v2925 = vunpack.c.l.b16 %v2864
        %v2926 = vunpack.c.l.b16 %v2867
        %v2927 = vunpack.c.l.b16 %v2871
        %v2928 = vunpack.c.l.b16 %v2874
        %v2929 = vunpack.c.l.b16 %v2878
        %v2930 = vunpack.c.l.b16 %v2881
        %v2931 = vunpack.c.l.b16 %v2885
        %v2932 = vunpack.c.l.b16 %v2888
        %v2933 = vunpack.c.l.b16 %v2892
        %v2934 = vunpack.c.l.b16 %v2895
        %v2935 = vunpack.c.l.b16 %v2899
        %v2936 = vunpack.c.l.b16 %v2902
        %v2937 = vpack.c.b16 %v2906, %v2905
        %v2938 = vpack.c.b16 %v2908, %v2907
        %v2939 = vpack.c.b16 %v2910, %v2909
        %v2940 = vpack.c.b16 %v2912, %v2911
        %v2941 = vpack.c.b16 %v2914, %v2913
        %v2942 = vpack.c.b16 %v2916, %v2915
        %v2943 = vpack.c.b16 %v2918, %v2917
        %v2944 = vpack.c.b16 %v2920, %v2919
        %v2945 = vpack.c.b16 %v2922, %v2921
        %v2946 = vpack.c.b16 %v2924, %v2923
        %v2947 = vpack.c.b16 %v2926, %v2925
        %v2948 = vpack.c.b16 %v2928, %v2927
        %v2949 = vpack.c.b16 %v2930, %v2929
        %v2950 = vpack.c.b16 %v2932, %v2931
        %v2951 = vpack.c.b16 %v2934, %v2933
        %v2952 = vpack.c.b16 %v2936, %v2935
        %v2954 = vsel %vm676, %v2937, 0
        %v2957 = vsel %vm676, %v2938, 0
        %v2960 = vsel %vm676, %v2939, 0
        %v2963 = vsel %vm676, %v2940, 0
        %v2966 = vsel %vm676, %v2941, 0
        %v2969 = vsel %vm676, %v2942, 0
        %v2972 = vsel %vm676, %v2943, 0
        %v2975 = vsel %vm676, %v2944, 0
        %v2978 = vsel %vm676, %v2945, 0
        %v2981 = vsel %vm676, %v2946, 0
        %v2984 = vsel %vm676, %v2947, 0
        %v2987 = vsel %vm676, %v2948, 0
        %v2990 = vsel %vm676, %v2949, 0
        %v2993 = vsel %vm676, %v2950, 0
        %v2996 = vsel %vm676, %v2951, 0
        %v2999 = vsel %vm676, %v2952, 0
        %v3002 = vsel %vm725, %v2904, 0
        %3004 = vmatprep.subr.bf16.mxu0 0
        %3005 = vmatpush1.bf16.msra.mxu0 %v3002
        %3006 = vmatprep.subr.bf16.mxu0 0
        %3007 = vmatpush1.bf16.msra.mxu0 0
        %3008 = vmatprep.subr.bf16.mxu0 0
        %3009 = vmatpush1.bf16.msra.mxu0 0
        %3010 = vmatprep.subr.bf16.mxu0 0
        %3011 = vmatpush1.bf16.msra.mxu0 0
        %3012 = vmatprep.subr.bf16.mxu0 0
        %3013 = vmatpush1.bf16.msra.mxu0 0
        %3014 = vmatprep.subr.bf16.mxu0 0
        %3015 = vmatpush1.bf16.msra.mxu0 0
        %3016 = vmatprep.subr.bf16.mxu0 0
        %3017 = vmatpush1.bf16.msra.mxu0 0
        %3018 = vmatprep.subr.bf16.mxu0 0
        %3019 = vmatpush1.bf16.msra.mxu0 0
        %3020 = vmatprep.subr.bf16.mxu0 0
        %3021 = vmatpush1.bf16.msra.mxu0 0
        %3022 = vmatprep.subr.bf16.mxu0 0
        %3023 = vmatpush1.bf16.msra.mxu0 0
        %3024 = vmatprep.subr.bf16.mxu0 0
        %3025 = vmatpush1.bf16.msra.mxu0 0
        %3026 = vmatprep.subr.bf16.mxu0 0
        %3027 = vmatpush1.bf16.msra.mxu0 0
        %3028 = vmatprep.subr.bf16.mxu0 0
        %3029 = vmatpush1.bf16.msra.mxu0 0
        %3030 = vmatprep.subr.bf16.mxu0 0
        %3031 = vmatpush1.bf16.msra.mxu0 0
        %3032 = vmatprep.subr.bf16.mxu0 0
        %3033 = vmatpush1.bf16.msra.mxu0 0
        %3034 = vmatprep.subr.bf16.mxu0 0
        %3035 = vmatpush1.bf16.msra.mxu0 0
        %3036 = vmatprep.mubr.bf16.mxu0 0
        %3037 = vmatmul.mubr.bf16.gmra.mrb[0].mxu0 %v2954
        %v3038 = vpop.f32.mrb[0].mxu0
        %v3039 = vadd.f32 0.0, %v3038
        %v3040 = vpop.f32.mrb[0].mxu0
        %v3041 = vpop.f32.mrb[0].mxu0
        %v3042 = vadd.f32 0.0, %v3041
        %v3043 = vpop.f32.mrb[0].mxu0
        %3044 = vmatprep.mubr.bf16.mxu0 0
        %3045 = vmatmul.mubr.bf16.gmra.mrb[0].mxu0 %v2957
        %v3046 = vpop.f32.mrb[0].mxu0
        %v3047 = vadd.f32 0.0, %v3046
        %v3048 = vpop.f32.mrb[0].mxu0
        %v3049 = vpop.f32.mrb[0].mxu0
        %v3050 = vadd.f32 0.0, %v3049
        %v3051 = vpop.f32.mrb[0].mxu0
        %3052 = vmatprep.mubr.bf16.mxu0 0
        %3053 = vmatmul.mubr.bf16.gmra.mrb[0].mxu0 %v2960
        %v3054 = vpop.f32.mrb[0].mxu0
        %v3055 = vadd.f32 0.0, %v3054
        %v3056 = vpop.f32.mrb[0].mxu0
        %v3057 = vpop.f32.mrb[0].mxu0
        %v3058 = vadd.f32 0.0, %v3057
        %v3059 = vpop.f32.mrb[0].mxu0
        %3060 = vmatprep.mubr.bf16.mxu0 0
        %3061 = vmatmul.mubr.bf16.gmra.mrb[0].mxu0 %v2963
        %v3062 = vpop.f32.mrb[0].mxu0
        %v3063 = vadd.f32 0.0, %v3062
        %v3064 = vpop.f32.mrb[0].mxu0
        %v3065 = vpop.f32.mrb[0].mxu0
        %v3066 = vadd.f32 0.0, %v3065
        %v3067 = vpop.f32.mrb[0].mxu0
        %3068 = vmatprep.mubr.bf16.mxu0 0
        %3069 = vmatmul.mubr.bf16.gmra.mrb[0].mxu0 %v2966
        %v3070 = vpop.f32.mrb[0].mxu0
        %v3071 = vadd.f32 0.0, %v3070
        %v3072 = vpop.f32.mrb[0].mxu0
        %v3073 = vpop.f32.mrb[0].mxu0
        %v3074 = vadd.f32 0.0, %v3073
        %v3075 = vpop.f32.mrb[0].mxu0
        %3076 = vmatprep.mubr.bf16.mxu0 0
        %3077 = vmatmul.mubr.bf16.gmra.mrb[0].mxu0 %v2969
        %v3078 = vpop.f32.mrb[0].mxu0
        %v3079 = vadd.f32 0.0, %v3078
        %v3080 = vpop.f32.mrb[0].mxu0
        %v3081 = vpop.f32.mrb[0].mxu0
        %v3082 = vadd.f32 0.0, %v3081
        %v3083 = vpop.f32.mrb[0].mxu0
        %3084 = vmatprep.mubr.bf16.mxu0 0
        %3085 = vmatmul.mubr.bf16.gmra.mrb[0].mxu0 %v2972
        %v3086 = vpop.f32.mrb[0].mxu0
        %v3087 = vadd.f32 0.0, %v3086
        %v3088 = vpop.f32.mrb[0].mxu0
        %v3089 = vpop.f32.mrb[0].mxu0
        %v3090 = vadd.f32 0.0, %v3089
        %v3091 = vpop.f32.mrb[0].mxu0
        %3092 = vmatprep.mubr.bf16.mxu0 0
        %3093 = vmatmul.mubr.bf16.gmra.mrb[0].mxu0 %v2975
        %v3094 = vpop.f32.mrb[0].mxu0
        %v3095 = vadd.f32 0.0, %v3094
        %v3096 = vpop.f32.mrb[0].mxu0
        %v3097 = vpop.f32.mrb[0].mxu0
        %v3098 = vadd.f32 0.0, %v3097
        %v3099 = vpop.f32.mrb[0].mxu0
        %3100 = vmatprep.mubr.bf16.mxu0 0
        %3101 = vmatmul.mubr.bf16.gmra.mrb[0].mxu0 %v2978
        %v3102 = vpop.f32.mrb[0].mxu0
        %v3103 = vadd.f32 0.0, %v3102
        %v3104 = vpop.f32.mrb[0].mxu0
        %v3105 = vpop.f32.mrb[0].mxu0
        %v3106 = vadd.f32 0.0, %v3105
        %v3107 = vpop.f32.mrb[0].mxu0
        %3108 = vmatprep.mubr.bf16.mxu0 0
        %3109 = vmatmul.mubr.bf16.gmra.mrb[0].mxu0 %v2981
        %v3110 = vpop.f32.mrb[0].mxu0
        %v3111 = vadd.f32 0.0, %v3110
        %v3112 = vpop.f32.mrb[0].mxu0
        %v3113 = vpop.f32.mrb[0].mxu0
        %v3114 = vadd.f32 0.0, %v3113
        %v3115 = vpop.f32.mrb[0].mxu0
        %3116 = vmatprep.mubr.bf16.mxu0 0
        %3117 = vmatmul.mubr.bf16.gmra.mrb[0].mxu0 %v2984
        %v3118 = vpop.f32.mrb[0].mxu0
        %v3119 = vadd.f32 0.0, %v3118
        %v3120 = vpop.f32.mrb[0].mxu0
        %v3121 = vpop.f32.mrb[0].mxu0
        %v3122 = vadd.f32 0.0, %v3121
        %v3123 = vpop.f32.mrb[0].mxu0
        %3124 = vmatprep.mubr.bf16.mxu0 0
        %3125 = vmatmul.mubr.bf16.gmra.mrb[0].mxu0 %v2987
        %v3126 = vpop.f32.mrb[0].mxu0
        %v3127 = vadd.f32 0.0, %v3126
        %v3128 = vpop.f32.mrb[0].mxu0
        %v3129 = vpop.f32.mrb[0].mxu0
        %v3130 = vadd.f32 0.0, %v3129
        %v3131 = vpop.f32.mrb[0].mxu0
        %3132 = vmatprep.mubr.bf16.mxu0 0
        %3133 = vmatmul.mubr.bf16.gmra.mrb[0].mxu0 %v2990
        %v3134 = vpop.f32.mrb[0].mxu0
        %v3135 = vadd.f32 0.0, %v3134
        %v3136 = vpop.f32.mrb[0].mxu0
        %v3137 = vpop.f32.mrb[0].mxu0
        %v3138 = vadd.f32 0.0, %v3137
        %v3139 = vpop.f32.mrb[0].mxu0
        %3140 = vmatprep.mubr.bf16.mxu0 0
        %3141 = vmatmul.mubr.bf16.gmra.mrb[0].mxu0 %v2993
        %v3142 = vpop.f32.mrb[0].mxu0
        %v3143 = vadd.f32 0.0, %v3142
        %v3144 = vpop.f32.mrb[0].mxu0
        %v3145 = vpop.f32.mrb[0].mxu0
        %v3146 = vadd.f32 0.0, %v3145
        %v3147 = vpop.f32.mrb[0].mxu0
        %3148 = vmatprep.mubr.bf16.mxu0 0
        %3149 = vmatmul.mubr.bf16.gmra.mrb[0].mxu0 %v2996
        %v3150 = vpop.f32.mrb[0].mxu0
        %v3151 = vadd.f32 0.0, %v3150
        %v3152 = vpop.f32.mrb[0].mxu0
        %v3153 = vpop.f32.mrb[0].mxu0
        %v3154 = vadd.f32 0.0, %v3153
        %v3155 = vpop.f32.mrb[0].mxu0
        %3156 = vmatprep.mubr.bf16.mxu0 0
        %3157 = vmatmul.mubr.bf16.gmra.mrb[0].mxu0 %v2999
        %v3158 = vpop.f32.mrb[0].mxu0
        %v3159 = vadd.f32 0.0, %v3158
        %v3160 = vpop.f32.mrb[0].mxu0
        %v3161 = vpop.f32.mrb[0].mxu0
        %v3162 = vadd.f32 0.0, %v3161
        %v3163 = vpop.f32.mrb[0].mxu0
        %3164 = vdwg.mxu0
        %v3165 = vadd.f32 %v2695, %v3039
        %v3166 = vadd.f32 %v2696, %v3042
        %v3167 = vadd.f32 %v2697, %v3047
        %v3168 = vadd.f32 %v2698, %v3050
        %v3169 = vadd.f32 %v2699, %v3055
        %v3170 = vadd.f32 %v2700, %v3058
        %v3171 = vadd.f32 %v2701, %v3063
        %v3172 = vadd.f32 %v2702, %v3066
        %v3173 = vadd.f32 %v2703, %v3071
        %v3174 = vadd.f32 %v2704, %v3074
        %v3175 = vadd.f32 %v2705, %v3079
        %v3176 = vadd.f32 %v2706, %v3082
        %v3177 = vadd.f32 %v2707, %v3087
        %v3178 = vadd.f32 %v2708, %v3090
        %v3179 = vadd.f32 %v2709, %v3095
        %v3180 = vadd.f32 %v2710, %v3098
        %v3181 = vadd.f32 %v2711, %v3103
        %v3182 = vadd.f32 %v2712, %v3106
        %v3183 = vadd.f32 %v2713, %v3111
        %v3184 = vadd.f32 %v2714, %v3114
        %v3185 = vadd.f32 %v2715, %v3119
        %v3186 = vadd.f32 %v2716, %v3122
        %v3187 = vadd.f32 %v2717, %v3127
        %v3188 = vadd.f32 %v2718, %v3130
        %v3189 = vadd.f32 %v2719, %v3135
        %v3190 = vadd.f32 %v2720, %v3138
        %v3191 = vadd.f32 %v2721, %v3143
        %v3192 = vadd.f32 %v2722, %v3146
        %v3193 = vadd.f32 %v2723, %v3151
        %v3194 = vadd.f32 %v2724, %v3154
        %v3195 = vadd.f32 %v2725, %v3159
        %v3196 = vadd.f32 %v2726, %v3162
        %s3197 = sadd.s32 %s185, 2
        %s3198 = smul.u32 %s3197, 3
        %s3199 = smul.addr %s3198, 4
        %s3200 = scalar_lea.vmem %s182, %s3199
        %v3201 = vld [vmem:[%s3200] sm:$0xf]
        %v3202 = vld [vmem:[%s3200 + $0x4] sm:$0xf]
        %v3203 = vld [vmem:[%s3200 + $0xc] sm:$0xf]
        %v3204 = vld [vmem:[%s3200 + $0x10] sm:$0xf]
        %v3205 = vld [vmem:[%s3200 + $0x18] sm:$0xf]
        %v3206 = vld [vmem:[%s3200 + $0x1c] sm:$0xf]
        %v3207 = vld [vmem:[%s3200 + $0x24] sm:$0xf]
        %v3208 = vld [vmem:[%s3200 + $0x28] sm:$0xf]
        %v3209 = vld [vmem:[%s3200 + $0x30] sm:$0xf]
        %v3210 = vld [vmem:[%s3200 + $0x34] sm:$0xf]
        %v3211 = vld [vmem:[%s3200 + $0x3c] sm:$0xf]
        %v3212 = vld [vmem:[%s3200 + $0x40] sm:$0xf]
        %v3213 = vld [vmem:[%s3200 + $0x48] sm:$0xf]
        %v3214 = vld [vmem:[%s3200 + $0x4c] sm:$0xf]
        %v3215 = vld [vmem:[%s3200 + $0x54] sm:$0xf]
        %v3216 = vld [vmem:[%s3200 + $0x58] sm:$0xf]
        %v3217 = vld [vmem:[%s3200 + $0x60] sm:$0xf]
        %v3218 = vld [vmem:[%s3200 + $0x64] sm:$0xf]
        %v3219 = vld [vmem:[%s3200 + $0x6c] sm:$0xf]
        %v3220 = vld [vmem:[%s3200 + $0x70] sm:$0xf]
        %v3221 = vld [vmem:[%s3200 + $0x78] sm:$0xf]
        %v3222 = vld [vmem:[%s3200 + $0x7c] sm:$0xf]
        %v3223 = vld [vmem:[%s3200 + $0x84] sm:$0xf]
        %v3224 = vld [vmem:[%s3200 + $0x88] sm:$0xf]
        %v3225 = vld [vmem:[%s3200 + $0x90] sm:$0xf]
        %v3226 = vld [vmem:[%s3200 + $0x94] sm:$0xf]
        %v3227 = vld [vmem:[%s3200 + $0x9c] sm:$0xf]
        %v3228 = vld [vmem:[%s3200 + $0xa0] sm:$0xf]
        %v3229 = vld [vmem:[%s3200 + $0xa8] sm:$0xf]
        %v3230 = vld [vmem:[%s3200 + $0xac] sm:$0xf]
        %v3231 = vld [vmem:[%s3200 + $0xb4] sm:$0xf]
        %v3232 = vld [vmem:[%s3200 + $0xb8] sm:$0xf]
        %s3233 = scalar_lea.vmem %s1, 12
        %v3234 = vld [vmem:[%s3233] sm:$0x3]
        %v3267 = vunpack.c.l.b16 %v3201
        %v3268 = vunpack.c.l.b16 %v3202
        %v3269 = vunpack.c.l.b16 %v3203
        %v3270 = vunpack.c.l.b16 %v3204
        %v3271 = vunpack.c.l.b16 %v3205
        %v3272 = vunpack.c.l.b16 %v3206
        %v3273 = vunpack.c.l.b16 %v3207
        %v3274 = vunpack.c.l.b16 %v3208
        %v3275 = vunpack.c.l.b16 %v3209
        %v3276 = vunpack.c.l.b16 %v3210
        %v3277 = vunpack.c.l.b16 %v3211
        %v3278 = vunpack.c.l.b16 %v3212
        %v3279 = vunpack.c.l.b16 %v3213
        %v3280 = vunpack.c.l.b16 %v3214
        %v3281 = vunpack.c.l.b16 %v3215
        %v3282 = vunpack.c.l.b16 %v3216
        %v3283 = vunpack.c.l.b16 %v3217
        %v3284 = vunpack.c.l.b16 %v3218
        %v3285 = vunpack.c.l.b16 %v3219
        %v3286 = vunpack.c.l.b16 %v3220
        %v3287 = vunpack.c.l.b16 %v3221
        %v3288 = vunpack.c.l.b16 %v3222
        %v3289 = vunpack.c.l.b16 %v3223
        %v3290 = vunpack.c.l.b16 %v3224
        %v3291 = vunpack.c.l.b16 %v3225
        %v3292 = vunpack.c.l.b16 %v3226
        %v3293 = vunpack.c.l.b16 %v3227
        %v3294 = vunpack.c.l.b16 %v3228
        %v3295 = vunpack.c.l.b16 %v3229
        %v3296 = vunpack.c.l.b16 %v3230
        %v3297 = vunpack.c.l.b16 %v3231
        %v3298 = vunpack.c.l.b16 %v3232
        %v3299 = vpack.c.b16 %v3268, %v3267
        %v3300 = vpack.c.b16 %v3270, %v3269
        %v3301 = vpack.c.b16 %v3272, %v3271
        %v3302 = vpack.c.b16 %v3274, %v3273
        %v3303 = vpack.c.b16 %v3276, %v3275
        %v3304 = vpack.c.b16 %v3278, %v3277
        %v3305 = vpack.c.b16 %v3280, %v3279
        %v3306 = vpack.c.b16 %v3282, %v3281
        %v3307 = vpack.c.b16 %v3284, %v3283
        %v3308 = vpack.c.b16 %v3286, %v3285
        %v3309 = vpack.c.b16 %v3288, %v3287
        %v3310 = vpack.c.b16 %v3290, %v3289
        %v3311 = vpack.c.b16 %v3292, %v3291
        %v3312 = vpack.c.b16 %v3294, %v3293
        %v3313 = vpack.c.b16 %v3296, %v3295
        %v3314 = vpack.c.b16 %v3298, %v3297
        %v3316 = vsel %vm676, %v3299, 0
        %v3319 = vsel %vm676, %v3300, 0
        %v3322 = vsel %vm676, %v3301, 0
        %v3325 = vsel %vm676, %v3302, 0
        %v3328 = vsel %vm676, %v3303, 0
        %v3331 = vsel %vm676, %v3304, 0
        %v3334 = vsel %vm676, %v3305, 0
        %v3337 = vsel %vm676, %v3306, 0
        %v3340 = vsel %vm676, %v3307, 0
        %v3343 = vsel %vm676, %v3308, 0
        %v3346 = vsel %vm676, %v3309, 0
        %v3349 = vsel %vm676, %v3310, 0
        %v3352 = vsel %vm676, %v3311, 0
        %v3355 = vsel %vm676, %v3312, 0
        %v3358 = vsel %vm676, %v3313, 0
        %v3361 = vsel %vm676, %v3314, 0
        %v3364 = vsel %vm725, %v3234, 0
        %3366 = vmatprep.subr.bf16.mxu0 0
        %3367 = vmatpush1.bf16.msra.mxu0 %v3364
        %3368 = vmatprep.subr.bf16.mxu0 0
        %3369 = vmatpush1.bf16.msra.mxu0 0
        %3370 = vmatprep.subr.bf16.mxu0 0
        %3371 = vmatpush1.bf16.msra.mxu0 0
        %3372 = vmatprep.subr.bf16.mxu0 0
        %3373 = vmatpush1.bf16.msra.mxu0 0
        %3374 = vmatprep.subr.bf16.mxu0 0
        %3375 = vmatpush1.bf16.msra.mxu0 0
        %3376 = vmatprep.subr.bf16.mxu0 0
        %3377 = vmatpush1.bf16.msra.mxu0 0
        %3378 = vmatprep.subr.bf16.mxu0 0
        %3379 = vmatpush1.bf16.msra.mxu0 0
        %3380 = vmatprep.subr.bf16.mxu0 0
        %3381 = vmatpush1.bf16.msra.mxu0 0
        %3382 = vmatprep.subr.bf16.mxu0 0
        %3383 = vmatpush1.bf16.msra.mxu0 0
        %3384 = vmatprep.subr.bf16.mxu0 0
        %3385 = vmatpush1.bf16.msra.mxu0 0
        %3386 = vmatprep.subr.bf16.mxu0 0
        %3387 = vmatpush1.bf16.msra.mxu0 0
        %3388 = vmatprep.subr.bf16.mxu0 0
        %3389 = vmatpush1.bf16.msra.mxu0 0
        %3390 = vmatprep.subr.bf16.mxu0 0
        %3391 = vmatpush1.bf16.msra.mxu0 0
        %3392 = vmatprep.subr.bf16.mxu0 0
        %3393 = vmatpush1.bf16.msra.mxu0 0
        %3394 = vmatprep.subr.bf16.mxu0 0
        %3395 = vmatpush1.bf16.msra.mxu0 0
        %3396 = vmatprep.subr.bf16.mxu0 0
        %3397 = vmatpush1.bf16.msra.mxu0 0
        %3398 = vmatprep.mubr.bf16.mxu0 0
        %3399 = vmatmul.mubr.bf16.gmra.mrb[0].mxu0 %v3316
        %v3400 = vpop.f32.mrb[0].mxu0
        %v3401 = vadd.f32 0.0, %v3400
        %v3402 = vpop.f32.mrb[0].mxu0
        %v3403 = vpop.f32.mrb[0].mxu0
        %v3404 = vadd.f32 0.0, %v3403
        %v3405 = vpop.f32.mrb[0].mxu0
        %3406 = vmatprep.mubr.bf16.mxu0 0
        %3407 = vmatmul.mubr.bf16.gmra.mrb[0].mxu0 %v3319
        %v3408 = vpop.f32.mrb[0].mxu0
        %v3409 = vadd.f32 0.0, %v3408
        %v3410 = vpop.f32.mrb[0].mxu0
        %v3411 = vpop.f32.mrb[0].mxu0
        %v3412 = vadd.f32 0.0, %v3411
        %v3413 = vpop.f32.mrb[0].mxu0
        %3414 = vmatprep.mubr.bf16.mxu0 0
        %3415 = vmatmul.mubr.bf16.gmra.mrb[0].mxu0 %v3322
        %v3416 = vpop.f32.mrb[0].mxu0
        %v3417 = vadd.f32 0.0, %v3416
        %v3418 = vpop.f32.mrb[0].mxu0
        %v3419 = vpop.f32.mrb[0].mxu0
        %v3420 = vadd.f32 0.0, %v3419
        %v3421 = vpop.f32.mrb[0].mxu0
        %3422 = vmatprep.mubr.bf16.mxu0 0
        %3423 = vmatmul.mubr.bf16.gmra.mrb[0].mxu0 %v3325
        %v3424 = vpop.f32.mrb[0].mxu0
        %v3425 = vadd.f32 0.0, %v3424
        %v3426 = vpop.f32.mrb[0].mxu0
        %v3427 = vpop.f32.mrb[0].mxu0
        %v3428 = vadd.f32 0.0, %v3427
        %v3429 = vpop.f32.mrb[0].mxu0
        %3430 = vmatprep.mubr.bf16.mxu0 0
        %3431 = vmatmul.mubr.bf16.gmra.mrb[0].mxu0 %v3328
        %v3432 = vpop.f32.mrb[0].mxu0
        %v3433 = vadd.f32 0.0, %v3432
        %v3434 = vpop.f32.mrb[0].mxu0
        %v3435 = vpop.f32.mrb[0].mxu0
        %v3436 = vadd.f32 0.0, %v3435
        %v3437 = vpop.f32.mrb[0].mxu0
        %3438 = vmatprep.mubr.bf16.mxu0 0
        %3439 = vmatmul.mubr.bf16.gmra.mrb[0].mxu0 %v3331
        %v3440 = vpop.f32.mrb[0].mxu0
        %v3441 = vadd.f32 0.0, %v3440
        %v3442 = vpop.f32.mrb[0].mxu0
        %v3443 = vpop.f32.mrb[0].mxu0
        %v3444 = vadd.f32 0.0, %v3443
        %v3445 = vpop.f32.mrb[0].mxu0
        %3446 = vmatprep.mubr.bf16.mxu0 0
        %3447 = vmatmul.mubr.bf16.gmra.mrb[0].mxu0 %v3334
        %v3448 = vpop.f32.mrb[0].mxu0
        %v3449 = vadd.f32 0.0, %v3448
        %v3450 = vpop.f32.mrb[0].mxu0
        %v3451 = vpop.f32.mrb[0].mxu0
        %v3452 = vadd.f32 0.0, %v3451
        %v3453 = vpop.f32.mrb[0].mxu0
        %3454 = vmatprep.mubr.bf16.mxu0 0
        %3455 = vmatmul.mubr.bf16.gmra.mrb[0].mxu0 %v3337
        %v3456 = vpop.f32.mrb[0].mxu0
        %v3457 = vadd.f32 0.0, %v3456
        %v3458 = vpop.f32.mrb[0].mxu0
        %v3459 = vpop.f32.mrb[0].mxu0
        %v3460 = vadd.f32 0.0, %v3459
        %v3461 = vpop.f32.mrb[0].mxu0
        %3462 = vmatprep.mubr.bf16.mxu0 0
        %3463 = vmatmul.mubr.bf16.gmra.mrb[0].mxu0 %v3340
        %v3464 = vpop.f32.mrb[0].mxu0
        %v3465 = vadd.f32 0.0, %v3464
        %v3466 = vpop.f32.mrb[0].mxu0
        %v3467 = vpop.f32.mrb[0].mxu0
        %v3468 = vadd.f32 0.0, %v3467
        %v3469 = vpop.f32.mrb[0].mxu0
        %3470 = vmatprep.mubr.bf16.mxu0 0
        %3471 = vmatmul.mubr.bf16.gmra.mrb[0].mxu0 %v3343
        %v3472 = vpop.f32.mrb[0].mxu0
        %v3473 = vadd.f32 0.0, %v3472
        %v3474 = vpop.f32.mrb[0].mxu0
        %v3475 = vpop.f32.mrb[0].mxu0
        %v3476 = vadd.f32 0.0, %v3475
        %v3477 = vpop.f32.mrb[0].mxu0
        %3478 = vmatprep.mubr.bf16.mxu0 0
        %3479 = vmatmul.mubr.bf16.gmra.mrb[0].mxu0 %v3346
        %v3480 = vpop.f32.mrb[0].mxu0
        %v3481 = vadd.f32 0.0, %v3480
        %v3482 = vpop.f32.mrb[0].mxu0
        %v3483 = vpop.f32.mrb[0].mxu0
        %v3484 = vadd.f32 0.0, %v3483
        %v3485 = vpop.f32.mrb[0].mxu0
        %3486 = vmatprep.mubr.bf16.mxu0 0
        %3487 = vmatmul.mubr.bf16.gmra.mrb[0].mxu0 %v3349
        %v3488 = vpop.f32.mrb[0].mxu0
        %v3489 = vadd.f32 0.0, %v3488
        %v3490 = vpop.f32.mrb[0].mxu0
        %v3491 = vpop.f32.mrb[0].mxu0
        %v3492 = vadd.f32 0.0, %v3491
        %v3493 = vpop.f32.mrb[0].mxu0
        %3494 = vmatprep.mubr.bf16.mxu0 0
        %3495 = vmatmul.mubr.bf16.gmra.mrb[0].mxu0 %v3352
        %v3496 = vpop.f32.mrb[0].mxu0
        %v3497 = vadd.f32 0.0, %v3496
        %v3498 = vpop.f32.mrb[0].mxu0
        %v3499 = vpop.f32.mrb[0].mxu0
        %v3500 = vadd.f32 0.0, %v3499
        %v3501 = vpop.f32.mrb[0].mxu0
        %3502 = vmatprep.mubr.bf16.mxu0 0
        %3503 = vmatmul.mubr.bf16.gmra.mrb[0].mxu0 %v3355
        %v3504 = vpop.f32.mrb[0].mxu0
        %v3505 = vadd.f32 0.0, %v3504
        %v3506 = vpop.f32.mrb[0].mxu0
        %v3507 = vpop.f32.mrb[0].mxu0
        %v3508 = vadd.f32 0.0, %v3507
        %v3509 = vpop.f32.mrb[0].mxu0
        %3510 = vmatprep.mubr.bf16.mxu0 0
        %3511 = vmatmul.mubr.bf16.gmra.mrb[0].mxu0 %v3358
        %v3512 = vpop.f32.mrb[0].mxu0
        %v3513 = vadd.f32 0.0, %v3512
        %v3514 = vpop.f32.mrb[0].mxu0
        %v3515 = vpop.f32.mrb[0].mxu0
        %v3516 = vadd.f32 0.0, %v3515
        %v3517 = vpop.f32.mrb[0].mxu0
        %3518 = vmatprep.mubr.bf16.mxu0 0
        %3519 = vmatmul.mubr.bf16.gmra.mrb[0].mxu0 %v3361
        %v3520 = vpop.f32.mrb[0].mxu0
        %v3521 = vadd.f32 0.0, %v3520
        %v3522 = vpop.f32.mrb[0].mxu0
        %v3523 = vpop.f32.mrb[0].mxu0
        %v3524 = vadd.f32 0.0, %v3523
        %v3525 = vpop.f32.mrb[0].mxu0
        %3526 = vdwg.mxu0
        %v3527 = vadd.f32 %v3165, %v3401
        %v3528 = vadd.f32 %v3166, %v3404
        %v3529 = vadd.f32 %v3167, %v3409
        %v3530 = vadd.f32 %v3168, %v3412
        %v3531 = vadd.f32 %v3169, %v3417
        %v3532 = vadd.f32 %v3170, %v3420
        %v3533 = vadd.f32 %v3171, %v3425
        %v3534 = vadd.f32 %v3172, %v3428
        %v3535 = vadd.f32 %v3173, %v3433
        %v3536 = vadd.f32 %v3174, %v3436
        %v3537 = vadd.f32 %v3175, %v3441
        %v3538 = vadd.f32 %v3176, %v3444
        %v3539 = vadd.f32 %v3177, %v3449
        %v3540 = vadd.f32 %v3178, %v3452
        %v3541 = vadd.f32 %v3179, %v3457
        %v3542 = vadd.f32 %v3180, %v3460
        %v3543 = vadd.f32 %v3181, %v3465
        %v3544 = vadd.f32 %v3182, %v3468
        %v3545 = vadd.f32 %v3183, %v3473
        %v3546 = vadd.f32 %v3184, %v3476
        %v3547 = vadd.f32 %v3185, %v3481
        %v3548 = vadd.f32 %v3186, %v3484
        %v3549 = vadd.f32 %v3187, %v3489
        %v3550 = vadd.f32 %v3188, %v3492
        %v3551 = vadd.f32 %v3189, %v3497
        %v3552 = vadd.f32 %v3190, %v3500
        %v3553 = vadd.f32 %v3191, %v3505
        %v3554 = vadd.f32 %v3192, %v3508
        %v3555 = vadd.f32 %v3193, %v3513
        %v3556 = vadd.f32 %v3194, %v3516
        %v3557 = vadd.f32 %v3195, %v3521
        %v3558 = vadd.f32 %v3196, %v3524
        %v3559 = vld [vmem:[%s3200] sm:$0xf]
        %v3560 = vld [vmem:[%s3200 + $0x4] sm:$0xf]
        %v3561 = vld [vmem:[%s3200 + $0x8] sm:$0x1]
        %v3562 = vld [vmem:[%s3200 + $0xc] sm:$0xf]
        %v3563 = vld [vmem:[%s3200 + $0x10] sm:$0xf]
        %v3564 = vld [vmem:[%s3200 + $0x14] sm:$0x1]
        %v3565 = vld [vmem:[%s3200 + $0x18] sm:$0xf]
        %v3566 = vld [vmem:[%s3200 + $0x1c] sm:$0xf]
        %v3567 = vld [vmem:[%s3200 + $0x20] sm:$0x1]
        %v3568 = vld [vmem:[%s3200 + $0x24] sm:$0xf]
        %v3569 = vld [vmem:[%s3200 + $0x28] sm:$0xf]
        %v3570 = vld [vmem:[%s3200 + $0x2c] sm:$0x1]
        %v3571 = vld [vmem:[%s3200 + $0x30] sm:$0xf]
        %v3572 = vld [vmem:[%s3200 + $0x34] sm:$0xf]
        %v3573 = vld [vmem:[%s3200 + $0x38] sm:$0x1]
        %v3574 = vld [vmem:[%s3200 + $0x3c] sm:$0xf]
        %v3575 = vld [vmem:[%s3200 + $0x40] sm:$0xf]
        %v3576 = vld [vmem:[%s3200 + $0x44] sm:$0x1]
        %v3577 = vld [vmem:[%s3200 + $0x48] sm:$0xf]
        %v3578 = vld [vmem:[%s3200 + $0x4c] sm:$0xf]
        %v3579 = vld [vmem:[%s3200 + $0x50] sm:$0x1]
        %v3580 = vld [vmem:[%s3200 + $0x54] sm:$0xf]
        %v3581 = vld [vmem:[%s3200 + $0x58] sm:$0xf]
        %v3582 = vld [vmem:[%s3200 + $0x5c] sm:$0x1]
        %v3583 = vld [vmem:[%s3200 + $0x60] sm:$0xf]
        %v3584 = vld [vmem:[%s3200 + $0x64] sm:$0xf]
        %v3585 = vld [vmem:[%s3200 + $0x68] sm:$0x1]
        %v3586 = vld [vmem:[%s3200 + $0x6c] sm:$0xf]
        %v3587 = vld [vmem:[%s3200 + $0x70] sm:$0xf]
        %v3588 = vld [vmem:[%s3200 + $0x74] sm:$0x1]
        %v3589 = vld [vmem:[%s3200 + $0x78] sm:$0xf]
        %v3590 = vld [vmem:[%s3200 + $0x7c] sm:$0xf]
        %v3591 = vld [vmem:[%s3200 + $0x80] sm:$0x1]
        %v3592 = vld [vmem:[%s3200 + $0x84] sm:$0xf]
        %v3593 = vld [vmem:[%s3200 + $0x88] sm:$0xf]
        %v3594 = vld [vmem:[%s3200 + $0x8c] sm:$0x1]
        %v3595 = vld [vmem:[%s3200 + $0x90] sm:$0xf]
        %v3596 = vld [vmem:[%s3200 + $0x94] sm:$0xf]
        %v3597 = vld [vmem:[%s3200 + $0x98] sm:$0x1]
        %v3598 = vld [vmem:[%s3200 + $0x9c] sm:$0xf]
        %v3599 = vld [vmem:[%s3200 + $0xa0] sm:$0xf]
        %v3600 = vld [vmem:[%s3200 + $0xa4] sm:$0x1]
        %v3601 = vld [vmem:[%s3200 + $0xa8] sm:$0xf]
        %v3602 = vld [vmem:[%s3200 + $0xac] sm:$0xf]
        %v3603 = vld [vmem:[%s3200 + $0xb0] sm:$0x1]
        %v3604 = vld [vmem:[%s3200 + $0xb4] sm:$0xf]
        %v3605 = vld [vmem:[%s3200 + $0xb8] sm:$0xf]
        %v3606 = vld [vmem:[%s3200 + $0xbc] sm:$0x1]
        %v3608 = vshrl.u32 %v3559, 16
        %v3610 = vrot.slane %v3608, 4
        %v3611 = vshll.u32 %v3559, 16
        %v3613 = vrot.slane %v3611, 5
        %v3614 = vor.u32 %v3610, %v3613
        %v3615 = vrot.slane %v3614, 4
        %v3617 = vshll.u32 %v3560, 16
        %v3619 = vrot.slane %v3617, 5
        %v3620 = vsel %vm241, %v3615, %v3619
        %v3621 = vshrl.u32 %v3560, 16
        %v3623 = vrot.slane %v3621, 4
        %v3624 = vor.u32 %v3623, %v3619
        %v3625 = vrot.slane %v3624, 4
        %v3627 = vshll.u32 %v3561, 16
        %v3629 = vrot.slane %v3627, 5
        %v3630 = vsel %vm241, %v3625, %v3629
        %v3632 = vshrl.u32 %v3562, 16
        %v3634 = vrot.slane %v3632, 4
        %v3635 = vshll.u32 %v3562, 16
        %v3637 = vrot.slane %v3635, 5
        %v3638 = vor.u32 %v3634, %v3637
        %v3639 = vrot.slane %v3638, 4
        %v3641 = vshll.u32 %v3563, 16
        %v3643 = vrot.slane %v3641, 5
        %v3644 = vsel %vm241, %v3639, %v3643
        %v3645 = vshrl.u32 %v3563, 16
        %v3647 = vrot.slane %v3645, 4
        %v3648 = vor.u32 %v3647, %v3643
        %v3649 = vrot.slane %v3648, 4
        %v3651 = vshll.u32 %v3564, 16
        %v3653 = vrot.slane %v3651, 5
        %v3654 = vsel %vm241, %v3649, %v3653
        %v3656 = vshrl.u32 %v3565, 16
        %v3658 = vrot.slane %v3656, 4
        %v3659 = vshll.u32 %v3565, 16
        %v3661 = vrot.slane %v3659, 5
        %v3662 = vor.u32 %v3658, %v3661
        %v3663 = vrot.slane %v3662, 4
        %v3665 = vshll.u32 %v3566, 16
        %v3667 = vrot.slane %v3665, 5
        %v3668 = vsel %vm241, %v3663, %v3667
        %v3669 = vshrl.u32 %v3566, 16
        %v3671 = vrot.slane %v3669, 4
        %v3672 = vor.u32 %v3671, %v3667
        %v3673 = vrot.slane %v3672, 4
        %v3675 = vshll.u32 %v3567, 16
        %v3677 = vrot.slane %v3675, 5
        %v3678 = vsel %vm241, %v3673, %v3677
        %v3680 = vshrl.u32 %v3568, 16
        %v3682 = vrot.slane %v3680, 4
        %v3683 = vshll.u32 %v3568, 16
        %v3685 = vrot.slane %v3683, 5
        %v3686 = vor.u32 %v3682, %v3685
        %v3687 = vrot.slane %v3686, 4
        %v3689 = vshll.u32 %v3569, 16
        %v3691 = vrot.slane %v3689, 5
        %v3692 = vsel %vm241, %v3687, %v3691
        %v3693 = vshrl.u32 %v3569, 16
        %v3695 = vrot.slane %v3693, 4
        %v3696 = vor.u32 %v3695, %v3691
        %v3697 = vrot.slane %v3696, 4
        %v3699 = vshll.u32 %v3570, 16
        %v3701 = vrot.slane %v3699, 5
        %v3702 = vsel %vm241, %v3697, %v3701
        %v3704 = vshrl.u32 %v3571, 16
        %v3706 = vrot.slane %v3704, 4
        %v3707 = vshll.u32 %v3571, 16
        %v3709 = vrot.slane %v3707, 5
        %v3710 = vor.u32 %v3706, %v3709
        %v3711 = vrot.slane %v3710, 4
        %v3713 = vshll.u32 %v3572, 16
        %v3715 = vrot.slane %v3713, 5
        %v3716 = vsel %vm241, %v3711, %v3715
        %v3717 = vshrl.u32 %v3572, 16
        %v3719 = vrot.slane %v3717, 4
        %v3720 = vor.u32 %v3719, %v3715
        %v3721 = vrot.slane %v3720, 4
        %v3723 = vshll.u32 %v3573, 16
        %v3725 = vrot.slane %v3723, 5
        %v3726 = vsel %vm241, %v3721, %v3725
        %v3728 = vshrl.u32 %v3574, 16
        %v3730 = vrot.slane %v3728, 4
        %v3731 = vshll.u32 %v3574, 16
        %v3733 = vrot.slane %v3731, 5
        %v3734 = vor.u32 %v3730, %v3733
        %v3735 = vrot.slane %v3734, 4
        %v3737 = vshll.u32 %v3575, 16
        %v3739 = vrot.slane %v3737, 5
        %v3740 = vsel %vm241, %v3735, %v3739
        %v3741 = vshrl.u32 %v3575, 16
        %v3743 = vrot.slane %v3741, 4
        %v3744 = vor.u32 %v3743, %v3739
        %v3745 = vrot.slane %v3744, 4
        %v3747 = vshll.u32 %v3576, 16
        %v3749 = vrot.slane %v3747, 5
        %v3750 = vsel %vm241, %v3745, %v3749
        %v3752 = vshrl.u32 %v3577, 16
        %v3754 = vrot.slane %v3752, 4
        %v3755 = vshll.u32 %v3577, 16
        %v3757 = vrot.slane %v3755, 5
        %v3758 = vor.u32 %v3754, %v3757
        %v3759 = vrot.slane %v3758, 4
        %v3761 = vshll.u32 %v3578, 16
        %v3763 = vrot.slane %v3761, 5
        %v3764 = vsel %vm241, %v3759, %v3763
        %v3765 = vshrl.u32 %v3578, 16
        %v3767 = vrot.slane %v3765, 4
        %v3768 = vor.u32 %v3767, %v3763
        %v3769 = vrot.slane %v3768, 4
        %v3771 = vshll.u32 %v3579, 16
        %v3773 = vrot.slane %v3771, 5
        %v3774 = vsel %vm241, %v3769, %v3773
        %v3776 = vshrl.u32 %v3580, 16
        %v3778 = vrot.slane %v3776, 4
        %v3779 = vshll.u32 %v3580, 16
        %v3781 = vrot.slane %v3779, 5
        %v3782 = vor.u32 %v3778, %v3781
        %v3783 = vrot.slane %v3782, 4
        %v3785 = vshll.u32 %v3581, 16
        %v3787 = vrot.slane %v3785, 5
        %v3788 = vsel %vm241, %v3783, %v3787
        %v3789 = vshrl.u32 %v3581, 16
        %v3791 = vrot.slane %v3789, 4
        %v3792 = vor.u32 %v3791, %v3787
        %v3793 = vrot.slane %v3792, 4
        %v3795 = vshll.u32 %v3582, 16
        %v3797 = vrot.slane %v3795, 5
        %v3798 = vsel %vm241, %v3793, %v3797
        %v3800 = vshrl.u32 %v3583, 16
        %v3802 = vrot.slane %v3800, 4
        %v3803 = vshll.u32 %v3583, 16
        %v3805 = vrot.slane %v3803, 5
        %v3806 = vor.u32 %v3802, %v3805
        %v3807 = vrot.slane %v3806, 4
        %v3809 = vshll.u32 %v3584, 16
        %v3811 = vrot.slane %v3809, 5
        %v3812 = vsel %vm241, %v3807, %v3811
        %v3813 = vshrl.u32 %v3584, 16
        %v3815 = vrot.slane %v3813, 4
        %v3816 = vor.u32 %v3815, %v3811
        %v3817 = vrot.slane %v3816, 4
        %v3819 = vshll.u32 %v3585, 16
        %v3821 = vrot.slane %v3819, 5
        %v3822 = vsel %vm241, %v3817, %v3821
        %v3824 = vshrl.u32 %v3586, 16
        %v3826 = vrot.slane %v3824, 4
        %v3827 = vshll.u32 %v3586, 16
        %v3829 = vrot.slane %v3827, 5
        %v3830 = vor.u32 %v3826, %v3829
        %v3831 = vrot.slane %v3830, 4
        %v3833 = vshll.u32 %v3587, 16
        %v3835 = vrot.slane %v3833, 5
        %v3836 = vsel %vm241, %v3831, %v3835
        %v3837 = vshrl.u32 %v3587, 16
        %v3839 = vrot.slane %v3837, 4
        %v3840 = vor.u32 %v3839, %v3835
        %v3841 = vrot.slane %v3840, 4
        %v3843 = vshll.u32 %v3588, 16
        %v3845 = vrot.slane %v3843, 5
        %v3846 = vsel %vm241, %v3841, %v3845
        %v3848 = vshrl.u32 %v3589, 16
        %v3850 = vrot.slane %v3848, 4
        %v3851 = vshll.u32 %v3589, 16
        %v3853 = vrot.slane %v3851, 5
        %v3854 = vor.u32 %v3850, %v3853
        %v3855 = vrot.slane %v3854, 4
        %v3857 = vshll.u32 %v3590, 16
        %v3859 = vrot.slane %v3857, 5
        %v3860 = vsel %vm241, %v3855, %v3859
        %v3861 = vshrl.u32 %v3590, 16
        %v3863 = vrot.slane %v3861, 4
        %v3864 = vor.u32 %v3863, %v3859
        %v3865 = vrot.slane %v3864, 4
        %v3867 = vshll.u32 %v3591, 16
        %v3869 = vrot.slane %v3867, 5
        %v3870 = vsel %vm241, %v3865, %v3869
        %v3872 = vshrl.u32 %v3592, 16
        %v3874 = vrot.slane %v3872, 4
        %v3875 = vshll.u32 %v3592, 16
        %v3877 = vrot.slane %v3875, 5
        %v3878 = vor.u32 %v3874, %v3877
        %v3879 = vrot.slane %v3878, 4
        %v3881 = vshll.u32 %v3593, 16
        %v3883 = vrot.slane %v3881, 5
        %v3884 = vsel %vm241, %v3879, %v3883
        %v3885 = vshrl.u32 %v3593, 16
        %v3887 = vrot.slane %v3885, 4
        %v3888 = vor.u32 %v3887, %v3883
        %v3889 = vrot.slane %v3888, 4
        %v3891 = vshll.u32 %v3594, 16
        %v3893 = vrot.slane %v3891, 5
        %v3894 = vsel %vm241, %v3889, %v3893
        %v3896 = vshrl.u32 %v3595, 16
        %v3898 = vrot.slane %v3896, 4
        %v3899 = vshll.u32 %v3595, 16
        %v3901 = vrot.slane %v3899, 5
        %v3902 = vor.u32 %v3898, %v3901
        %v3903 = vrot.slane %v3902, 4
        %v3905 = vshll.u32 %v3596, 16
        %v3907 = vrot.slane %v3905, 5
        %v3908 = vsel %vm241, %v3903, %v3907
        %v3909 = vshrl.u32 %v3596, 16
        %v3911 = vrot.slane %v3909, 4
        %v3912 = vor.u32 %v3911, %v3907
        %v3913 = vrot.slane %v3912, 4
        %v3915 = vshll.u32 %v3597, 16
        %v3917 = vrot.slane %v3915, 5
        %v3918 = vsel %vm241, %v3913, %v3917
        %v3920 = vshrl.u32 %v3598, 16
        %v3922 = vrot.slane %v3920, 4
        %v3923 = vshll.u32 %v3598, 16
        %v3925 = vrot.slane %v3923, 5
        %v3926 = vor.u32 %v3922, %v3925
        %v3927 = vrot.slane %v3926, 4
        %v3929 = vshll.u32 %v3599, 16
        %v3931 = vrot.slane %v3929, 5
        %v3932 = vsel %vm241, %v3927, %v3931
        %v3933 = vshrl.u32 %v3599, 16
        %v3935 = vrot.slane %v3933, 4
        %v3936 = vor.u32 %v3935, %v3931
        %v3937 = vrot.slane %v3936, 4
        %v3939 = vshll.u32 %v3600, 16
        %v3941 = vrot.slane %v3939, 5
        %v3942 = vsel %vm241, %v3937, %v3941
        %v3944 = vshrl.u32 %v3601, 16
        %v3946 = vrot.slane %v3944, 4
        %v3947 = vshll.u32 %v3601, 16
        %v3949 = vrot.slane %v3947, 5
        %v3950 = vor.u32 %v3946, %v3949
        %v3951 = vrot.slane %v3950, 4
        %v3953 = vshll.u32 %v3602, 16
        %v3955 = vrot.slane %v3953, 5
        %v3956 = vsel %vm241, %v3951, %v3955
        %v3957 = vshrl.u32 %v3602, 16
        %v3959 = vrot.slane %v3957, 4
        %v3960 = vor.u32 %v3959, %v3955
        %v3961 = vrot.slane %v3960, 4
        %v3963 = vshll.u32 %v3603, 16
        %v3965 = vrot.slane %v3963, 5
        %v3966 = vsel %vm241, %v3961, %v3965
        %v3968 = vshrl.u32 %v3604, 16
        %v3970 = vrot.slane %v3968, 4
        %v3971 = vshll.u32 %v3604, 16
        %v3973 = vrot.slane %v3971, 5
        %v3974 = vor.u32 %v3970, %v3973
        %v3975 = vrot.slane %v3974, 4
        %v3977 = vshll.u32 %v3605, 16
        %v3979 = vrot.slane %v3977, 5
        %v3980 = vsel %vm241, %v3975, %v3979
        %v3981 = vshrl.u32 %v3605, 16
        %v3983 = vrot.slane %v3981, 4
        %v3984 = vor.u32 %v3983, %v3979
        %v3985 = vrot.slane %v3984, 4
        %v3987 = vshll.u32 %v3606, 16
        %v3989 = vrot.slane %v3987, 5
        %v3990 = vsel %vm241, %v3985, %v3989
        %s3991 = scalar_lea.vmem %s1, 14
        %v3992 = vld [vmem:[%s3991] sm:$0x3]
        %v3993 = vunpack.c.l.b16 %v3620
        %v3994 = vunpack.c.l.b16 %v3630
        %v3995 = vunpack.c.l.b16 %v3644
        %v3996 = vunpack.c.l.b16 %v3654
        %v3997 = vunpack.c.l.b16 %v3668
        %v3998 = vunpack.c.l.b16 %v3678
        %v3999 = vunpack.c.l.b16 %v3692
        %v4000 = vunpack.c.l.b16 %v3702
        %v4001 = vunpack.c.l.b16 %v3716
        %v4002 = vunpack.c.l.b16 %v3726
        %v4003 = vunpack.c.l.b16 %v3740
        %v4004 = vunpack.c.l.b16 %v3750
        %v4005 = vunpack.c.l.b16 %v3764
        %v4006 = vunpack.c.l.b16 %v3774
        %v4007 = vunpack.c.l.b16 %v3788
        %v4008 = vunpack.c.l.b16 %v3798
        %v4009 = vunpack.c.l.b16 %v3812
        %v4010 = vunpack.c.l.b16 %v3822
        %v4011 = vunpack.c.l.b16 %v3836
        %v4012 = vunpack.c.l.b16 %v3846
        %v4013 = vunpack.c.l.b16 %v3860
        %v4014 = vunpack.c.l.b16 %v3870
        %v4015 = vunpack.c.l.b16 %v3884
        %v4016 = vunpack.c.l.b16 %v3894
        %v4017 = vunpack.c.l.b16 %v3908
        %v4018 = vunpack.c.l.b16 %v3918
        %v4019 = vunpack.c.l.b16 %v3932
        %v4020 = vunpack.c.l.b16 %v3942
        %v4021 = vunpack.c.l.b16 %v3956
        %v4022 = vunpack.c.l.b16 %v3966
        %v4023 = vunpack.c.l.b16 %v3980
        %v4024 = vunpack.c.l.b16 %v3990
        %v4025 = vpack.c.b16 %v3994, %v3993
        %v4026 = vpack.c.b16 %v3996, %v3995
        %v4027 = vpack.c.b16 %v3998, %v3997
        %v4028 = vpack.c.b16 %v4000, %v3999
        %v4029 = vpack.c.b16 %v4002, %v4001
        %v4030 = vpack.c.b16 %v4004, %v4003
        %v4031 = vpack.c.b16 %v4006, %v4005
        %v4032 = vpack.c.b16 %v4008, %v4007
        %v4033 = vpack.c.b16 %v4010, %v4009
        %v4034 = vpack.c.b16 %v4012, %v4011
        %v4035 = vpack.c.b16 %v4014, %v4013
        %v4036 = vpack.c.b16 %v4016, %v4015
        %v4037 = vpack.c.b16 %v4018, %v4017
        %v4038 = vpack.c.b16 %v4020, %v4019
        %v4039 = vpack.c.b16 %v4022, %v4021
        %v4040 = vpack.c.b16 %v4024, %v4023
        %v4042 = vsel %vm676, %v4025, 0
        %v4045 = vsel %vm676, %v4026, 0
        %v4048 = vsel %vm676, %v4027, 0
        %v4051 = vsel %vm676, %v4028, 0
        %v4054 = vsel %vm676, %v4029, 0
        %v4057 = vsel %vm676, %v4030, 0
        %v4060 = vsel %vm676, %v4031, 0
        %v4063 = vsel %vm676, %v4032, 0
        %v4066 = vsel %vm676, %v4033, 0
        %v4069 = vsel %vm676, %v4034, 0
        %v4072 = vsel %vm676, %v4035, 0
        %v4075 = vsel %vm676, %v4036, 0
        %v4078 = vsel %vm676, %v4037, 0
        %v4081 = vsel %vm676, %v4038, 0
        %v4084 = vsel %vm676, %v4039, 0
        %v4087 = vsel %vm676, %v4040, 0
        %v4090 = vsel %vm725, %v3992, 0
        %4092 = vmatprep.subr.bf16.mxu0 0
        %4093 = vmatpush1.bf16.msra.mxu0 %v4090
        %4094 = vmatprep.subr.bf16.mxu0 0
        %4095 = vmatpush1.bf16.msra.mxu0 0
        %4096 = vmatprep.subr.bf16.mxu0 0
        %4097 = vmatpush1.bf16.msra.mxu0 0
        %4098 = vmatprep.subr.bf16.mxu0 0
        %4099 = vmatpush1.bf16.msra.mxu0 0
        %4100 = vmatprep.subr.bf16.mxu0 0
        %4101 = vmatpush1.bf16.msra.mxu0 0
        %4102 = vmatprep.subr.bf16.mxu0 0
        %4103 = vmatpush1.bf16.msra.mxu0 0
        %4104 = vmatprep.subr.bf16.mxu0 0
        %4105 = vmatpush1.bf16.msra.mxu0 0
        %4106 = vmatprep.subr.bf16.mxu0 0
        %4107 = vmatpush1.bf16.msra.mxu0 0
        %4108 = vmatprep.subr.bf16.mxu0 0
        %4109 = vmatpush1.bf16.msra.mxu0 0
        %4110 = vmatprep.subr.bf16.mxu0 0
        %4111 = vmatpush1.bf16.msra.mxu0 0
        %4112 = vmatprep.subr.bf16.mxu0 0
        %4113 = vmatpush1.bf16.msra.mxu0 0
        %4114 = vmatprep.subr.bf16.mxu0 0
        %4115 = vmatpush1.bf16.msra.mxu0 0
        %4116 = vmatprep.subr.bf16.mxu0 0
        %4117 = vmatpush1.bf16.msra.mxu0 0
        %4118 = vmatprep.subr.bf16.mxu0 0
        %4119 = vmatpush1.bf16.msra.mxu0 0
        %4120 = vmatprep.subr.bf16.mxu0 0
        %4121 = vmatpush1.bf16.msra.mxu0 0
        %4122 = vmatprep.subr.bf16.mxu0 0
        %4123 = vmatpush1.bf16.msra.mxu0 0
        %4124 = vmatprep.mubr.bf16.mxu0 0
        %4125 = vmatmul.mubr.bf16.gmra.mrb[0].mxu0 %v4042
        %v4126 = vpop.f32.mrb[0].mxu0
        %v4127 = vadd.f32 0.0, %v4126
        %v4128 = vpop.f32.mrb[0].mxu0
        %v4129 = vpop.f32.mrb[0].mxu0
        %v4130 = vadd.f32 0.0, %v4129
        %v4131 = vpop.f32.mrb[0].mxu0
        %4132 = vmatprep.mubr.bf16.mxu0 0
        %4133 = vmatmul.mubr.bf16.gmra.mrb[0].mxu0 %v4045
        %v4134 = vpop.f32.mrb[0].mxu0
        %v4135 = vadd.f32 0.0, %v4134
        %v4136 = vpop.f32.mrb[0].mxu0
        %v4137 = vpop.f32.mrb[0].mxu0
        %v4138 = vadd.f32 0.0, %v4137
        %v4139 = vpop.f32.mrb[0].mxu0
        %4140 = vmatprep.mubr.bf16.mxu0 0
        %4141 = vmatmul.mubr.bf16.gmra.mrb[0].mxu0 %v4048
        %v4142 = vpop.f32.mrb[0].mxu0
        %v4143 = vadd.f32 0.0, %v4142
        %v4144 = vpop.f32.mrb[0].mxu0
        %v4145 = vpop.f32.mrb[0].mxu0
        %v4146 = vadd.f32 0.0, %v4145
        %v4147 = vpop.f32.mrb[0].mxu0
        %4148 = vmatprep.mubr.bf16.mxu0 0
        %4149 = vmatmul.mubr.bf16.gmra.mrb[0].mxu0 %v4051
        %v4150 = vpop.f32.mrb[0].mxu0
        %v4151 = vadd.f32 0.0, %v4150
        %v4152 = vpop.f32.mrb[0].mxu0
        %v4153 = vpop.f32.mrb[0].mxu0
        %v4154 = vadd.f32 0.0, %v4153
        %v4155 = vpop.f32.mrb[0].mxu0
        %4156 = vmatprep.mubr.bf16.mxu0 0
        %4157 = vmatmul.mubr.bf16.gmra.mrb[0].mxu0 %v4054
        %v4158 = vpop.f32.mrb[0].mxu0
        %v4159 = vadd.f32 0.0, %v4158
        %v4160 = vpop.f32.mrb[0].mxu0
        %v4161 = vpop.f32.mrb[0].mxu0
        %v4162 = vadd.f32 0.0, %v4161
        %v4163 = vpop.f32.mrb[0].mxu0
        %4164 = vmatprep.mubr.bf16.mxu0 0
        %4165 = vmatmul.mubr.bf16.gmra.mrb[0].mxu0 %v4057
        %v4166 = vpop.f32.mrb[0].mxu0
        %v4167 = vadd.f32 0.0, %v4166
        %v4168 = vpop.f32.mrb[0].mxu0
        %v4169 = vpop.f32.mrb[0].mxu0
        %v4170 = vadd.f32 0.0, %v4169
        %v4171 = vpop.f32.mrb[0].mxu0
        %4172 = vmatprep.mubr.bf16.mxu0 0
        %4173 = vmatmul.mubr.bf16.gmra.mrb[0].mxu0 %v4060
        %v4174 = vpop.f32.mrb[0].mxu0
        %v4175 = vadd.f32 0.0, %v4174
        %v4176 = vpop.f32.mrb[0].mxu0
        %v4177 = vpop.f32.mrb[0].mxu0
        %v4178 = vadd.f32 0.0, %v4177
        %v4179 = vpop.f32.mrb[0].mxu0
        %4180 = vmatprep.mubr.bf16.mxu0 0
        %4181 = vmatmul.mubr.bf16.gmra.mrb[0].mxu0 %v4063
        %v4182 = vpop.f32.mrb[0].mxu0
        %v4183 = vadd.f32 0.0, %v4182
        %v4184 = vpop.f32.mrb[0].mxu0
        %v4185 = vpop.f32.mrb[0].mxu0
        %v4186 = vadd.f32 0.0, %v4185
        %v4187 = vpop.f32.mrb[0].mxu0
        %4188 = vmatprep.mubr.bf16.mxu0 0
        %4189 = vmatmul.mubr.bf16.gmra.mrb[0].mxu0 %v4066
        %v4190 = vpop.f32.mrb[0].mxu0
        %v4191 = vadd.f32 0.0, %v4190
        %v4192 = vpop.f32.mrb[0].mxu0
        %v4193 = vpop.f32.mrb[0].mxu0
        %v4194 = vadd.f32 0.0, %v4193
        %v4195 = vpop.f32.mrb[0].mxu0
        %4196 = vmatprep.mubr.bf16.mxu0 0
        %4197 = vmatmul.mubr.bf16.gmra.mrb[0].mxu0 %v4069
        %v4198 = vpop.f32.mrb[0].mxu0
        %v4199 = vadd.f32 0.0, %v4198
        %v4200 = vpop.f32.mrb[0].mxu0
        %v4201 = vpop.f32.mrb[0].mxu0
        %v4202 = vadd.f32 0.0, %v4201
        %v4203 = vpop.f32.mrb[0].mxu0
        %4204 = vmatprep.mubr.bf16.mxu0 0
        %4205 = vmatmul.mubr.bf16.gmra.mrb[0].mxu0 %v4072
        %v4206 = vpop.f32.mrb[0].mxu0
        %v4207 = vadd.f32 0.0, %v4206
        %v4208 = vpop.f32.mrb[0].mxu0
        %v4209 = vpop.f32.mrb[0].mxu0
        %v4210 = vadd.f32 0.0, %v4209
        %v4211 = vpop.f32.mrb[0].mxu0
        %4212 = vmatprep.mubr.bf16.mxu0 0
        %4213 = vmatmul.mubr.bf16.gmra.mrb[0].mxu0 %v4075
        %v4214 = vpop.f32.mrb[0].mxu0
        %v4215 = vadd.f32 0.0, %v4214
        %v4216 = vpop.f32.mrb[0].mxu0
        %v4217 = vpop.f32.mrb[0].mxu0
        %v4218 = vadd.f32 0.0, %v4217
        %v4219 = vpop.f32.mrb[0].mxu0
        %4220 = vmatprep.mubr.bf16.mxu0 0
        %4221 = vmatmul.mubr.bf16.gmra.mrb[0].mxu0 %v4078
        %v4222 = vpop.f32.mrb[0].mxu0
        %v4223 = vadd.f32 0.0, %v4222
        %v4224 = vpop.f32.mrb[0].mxu0
        %v4225 = vpop.f32.mrb[0].mxu0
        %v4226 = vadd.f32 0.0, %v4225
        %v4227 = vpop.f32.mrb[0].mxu0
        %4228 = vmatprep.mubr.bf16.mxu0 0
        %4229 = vmatmul.mubr.bf16.gmra.mrb[0].mxu0 %v4081
        %v4230 = vpop.f32.mrb[0].mxu0
        %v4231 = vadd.f32 0.0, %v4230
        %v4232 = vpop.f32.mrb[0].mxu0
        %v4233 = vpop.f32.mrb[0].mxu0
        %v4234 = vadd.f32 0.0, %v4233
        %v4235 = vpop.f32.mrb[0].mxu0
        %4236 = vmatprep.mubr.bf16.mxu0 0
        %4237 = vmatmul.mubr.bf16.gmra.mrb[0].mxu0 %v4084
        %v4238 = vpop.f32.mrb[0].mxu0
        %v4239 = vadd.f32 0.0, %v4238
        %v4240 = vpop.f32.mrb[0].mxu0
        %v4241 = vpop.f32.mrb[0].mxu0
        %v4242 = vadd.f32 0.0, %v4241
        %v4243 = vpop.f32.mrb[0].mxu0
        %4244 = vmatprep.mubr.bf16.mxu0 0
        %4245 = vmatmul.mubr.bf16.gmra.mrb[0].mxu0 %v4087
        %v4246 = vpop.f32.mrb[0].mxu0
        %v4247 = vadd.f32 0.0, %v4246
        %v4248 = vpop.f32.mrb[0].mxu0
        %v4249 = vpop.f32.mrb[0].mxu0
        %v4250 = vadd.f32 0.0, %v4249
        %v4251 = vpop.f32.mrb[0].mxu0
        %4252 = vdwg.mxu0
        %v4253 = vadd.f32 %v3527, %v4127
        %v4254 = vadd.f32 %v3528, %v4130
        %v4255 = vadd.f32 %v3529, %v4135
        %v4256 = vadd.f32 %v3530, %v4138
        %v4257 = vadd.f32 %v3531, %v4143
        %v4258 = vadd.f32 %v3532, %v4146
        %v4259 = vadd.f32 %v3533, %v4151
        %v4260 = vadd.f32 %v3534, %v4154
        %v4261 = vadd.f32 %v3535, %v4159
        %v4262 = vadd.f32 %v3536, %v4162
        %v4263 = vadd.f32 %v3537, %v4167
        %v4264 = vadd.f32 %v3538, %v4170
        %v4265 = vadd.f32 %v3539, %v4175
        %v4266 = vadd.f32 %v3540, %v4178
        %v4267 = vadd.f32 %v3541, %v4183
        %v4268 = vadd.f32 %v3542, %v4186
        %v4269 = vadd.f32 %v3543, %v4191
        %v4270 = vadd.f32 %v3544, %v4194
        %v4271 = vadd.f32 %v3545, %v4199
        %v4272 = vadd.f32 %v3546, %v4202
        %v4273 = vadd.f32 %v3547, %v4207
        %v4274 = vadd.f32 %v3548, %v4210
        %v4275 = vadd.f32 %v3549, %v4215
        %v4276 = vadd.f32 %v3550, %v4218
        %v4277 = vadd.f32 %v3551, %v4223
        %v4278 = vadd.f32 %v3552, %v4226
        %v4279 = vadd.f32 %v3553, %v4231
        %v4280 = vadd.f32 %v3554, %v4234
        %v4281 = vadd.f32 %v3555, %v4239
        %v4282 = vadd.f32 %v3556, %v4242
        %v4283 = vadd.f32 %v3557, %v4247
        %v4284 = vadd.f32 %v3558, %v4250
        %v4285 = vld [vmem:[%s3200] sm:$0xe]
        %v4286 = vld [vmem:[%s3200 + $0xc] sm:$0xe]
        %v4287 = vld [vmem:[%s3200 + $0x18] sm:$0xe]
        %v4288 = vld [vmem:[%s3200 + $0x24] sm:$0xe]
        %v4289 = vld [vmem:[%s3200 + $0x30] sm:$0xe]
        %v4290 = vld [vmem:[%s3200 + $0x3c] sm:$0xe]
        %v4291 = vld [vmem:[%s3200 + $0x48] sm:$0xe]
        %v4292 = vld [vmem:[%s3200 + $0x54] sm:$0xe]
        %v4293 = vld [vmem:[%s3200 + $0x60] sm:$0xe]
        %v4294 = vld [vmem:[%s3200 + $0x6c] sm:$0xe]
        %v4295 = vld [vmem:[%s3200 + $0x78] sm:$0xe]
        %v4296 = vld [vmem:[%s3200 + $0x84] sm:$0xe]
        %v4297 = vld [vmem:[%s3200 + $0x90] sm:$0xe]
        %v4298 = vld [vmem:[%s3200 + $0x9c] sm:$0xe]
        %v4299 = vld [vmem:[%s3200 + $0xa8] sm:$0xe]
        %v4300 = vld [vmem:[%s3200 + $0xb4] sm:$0xe]
        %v4349 = vrot.slane %v4285, 5
        %v4350 = vrot.slane %v4349, 4
        %v4351 = vrot.slane %v3560, 5
        %v4352 = vsel %vm1232, %v4350, %v4351
        %v4353 = vrot.slane %v4351, 4
        %v4354 = vrot.slane %v3561, 5
        %v4355 = vsel %vm1232, %v4353, %v4354
        %v4356 = vrot.slane %v4286, 5
        %v4357 = vrot.slane %v4356, 4
        %v4358 = vrot.slane %v3563, 5
        %v4359 = vsel %vm1232, %v4357, %v4358
        %v4360 = vrot.slane %v4358, 4
        %v4361 = vrot.slane %v3564, 5
        %v4362 = vsel %vm1232, %v4360, %v4361
        %v4363 = vrot.slane %v4287, 5
        %v4364 = vrot.slane %v4363, 4
        %v4365 = vrot.slane %v3566, 5
        %v4366 = vsel %vm1232, %v4364, %v4365
        %v4367 = vrot.slane %v4365, 4
        %v4368 = vrot.slane %v3567, 5
        %v4369 = vsel %vm1232, %v4367, %v4368
        %v4370 = vrot.slane %v4288, 5
        %v4371 = vrot.slane %v4370, 4
        %v4372 = vrot.slane %v3569, 5
        %v4373 = vsel %vm1232, %v4371, %v4372
        %v4374 = vrot.slane %v4372, 4
        %v4375 = vrot.slane %v3570, 5
        %v4376 = vsel %vm1232, %v4374, %v4375
        %v4377 = vrot.slane %v4289, 5
        %v4378 = vrot.slane %v4377, 4
        %v4379 = vrot.slane %v3572, 5
        %v4380 = vsel %vm1232, %v4378, %v4379
        %v4381 = vrot.slane %v4379, 4
        %v4382 = vrot.slane %v3573, 5
        %v4383 = vsel %vm1232, %v4381, %v4382
        %v4384 = vrot.slane %v4290, 5
        %v4385 = vrot.slane %v4384, 4
        %v4386 = vrot.slane %v3575, 5
        %v4387 = vsel %vm1232, %v4385, %v4386
        %v4388 = vrot.slane %v4386, 4
        %v4389 = vrot.slane %v3576, 5
        %v4390 = vsel %vm1232, %v4388, %v4389
        %v4391 = vrot.slane %v4291, 5
        %v4392 = vrot.slane %v4391, 4
        %v4393 = vrot.slane %v3578, 5
        %v4394 = vsel %vm1232, %v4392, %v4393
        %v4395 = vrot.slane %v4393, 4
        %v4396 = vrot.slane %v3579, 5
        %v4397 = vsel %vm1232, %v4395, %v4396
        %v4398 = vrot.slane %v4292, 5
        %v4399 = vrot.slane %v4398, 4
        %v4400 = vrot.slane %v3581, 5
        %v4401 = vsel %vm1232, %v4399, %v4400
        %v4402 = vrot.slane %v4400, 4
        %v4403 = vrot.slane %v3582, 5
        %v4404 = vsel %vm1232, %v4402, %v4403
        %v4405 = vrot.slane %v4293, 5
        %v4406 = vrot.slane %v4405, 4
        %v4407 = vrot.slane %v3584, 5
        %v4408 = vsel %vm1232, %v4406, %v4407
        %v4409 = vrot.slane %v4407, 4
        %v4410 = vrot.slane %v3585, 5
        %v4411 = vsel %vm1232, %v4409, %v4410
        %v4412 = vrot.slane %v4294, 5
        %v4413 = vrot.slane %v4412, 4
        %v4414 = vrot.slane %v3587, 5
        %v4415 = vsel %vm1232, %v4413, %v4414
        %v4416 = vrot.slane %v4414, 4
        %v4417 = vrot.slane %v3588, 5
        %v4418 = vsel %vm1232, %v4416, %v4417
        %v4419 = vrot.slane %v4295, 5
        %v4420 = vrot.slane %v4419, 4
        %v4421 = vrot.slane %v3590, 5
        %v4422 = vsel %vm1232, %v4420, %v4421
        %v4423 = vrot.slane %v4421, 4
        %v4424 = vrot.slane %v3591, 5
        %v4425 = vsel %vm1232, %v4423, %v4424
        %v4426 = vrot.slane %v4296, 5
        %v4427 = vrot.slane %v4426, 4
        %v4428 = vrot.slane %v3593, 5
        %v4429 = vsel %vm1232, %v4427, %v4428
        %v4430 = vrot.slane %v4428, 4
        %v4431 = vrot.slane %v3594, 5
        %v4432 = vsel %vm1232, %v4430, %v4431
        %v4433 = vrot.slane %v4297, 5
        %v4434 = vrot.slane %v4433, 4
        %v4435 = vrot.slane %v3596, 5
        %v4436 = vsel %vm1232, %v4434, %v4435
        %v4437 = vrot.slane %v4435, 4
        %v4438 = vrot.slane %v3597, 5
        %v4439 = vsel %vm1232, %v4437, %v4438
        %v4440 = vrot.slane %v4298, 5
        %v4441 = vrot.slane %v4440, 4
        %v4442 = vrot.slane %v3599, 5
        %v4443 = vsel %vm1232, %v4441, %v4442
        %v4444 = vrot.slane %v4442, 4
        %v4445 = vrot.slane %v3600, 5
        %v4446 = vsel %vm1232, %v4444, %v4445
        %v4447 = vrot.slane %v4299, 5
        %v4448 = vrot.slane %v4447, 4
        %v4449 = vrot.slane %v3602, 5
        %v4450 = vsel %vm1232, %v4448, %v4449
        %v4451 = vrot.slane %v4449, 4
        %v4452 = vrot.slane %v3603, 5
        %v4453 = vsel %vm1232, %v4451, %v4452
        %v4454 = vrot.slane %v4300, 5
        %v4455 = vrot.slane %v4454, 4
        %v4456 = vrot.slane %v3605, 5
        %v4457 = vsel %vm1232, %v4455, %v4456
        %v4458 = vrot.slane %v4456, 4
        %v4459 = vrot.slane %v3606, 5
        %v4460 = vsel %vm1232, %v4458, %v4459
        %s4461 = scalar_lea.vmem %s1, 16
        %v4462 = vld [vmem:[%s4461] sm:$0x3]
        %v4463 = vunpack.c.l.b16 %v4352
        %v4464 = vunpack.c.l.b16 %v4355
        %v4465 = vunpack.c.l.b16 %v4359
        %v4466 = vunpack.c.l.b16 %v4362
        %v4467 = vunpack.c.l.b16 %v4366
        %v4468 = vunpack.c.l.b16 %v4369
        %v4469 = vunpack.c.l.b16 %v4373
        %v4470 = vunpack.c.l.b16 %v4376
        %v4471 = vunpack.c.l.b16 %v4380
        %v4472 = vunpack.c.l.b16 %v4383
        %v4473 = vunpack.c.l.b16 %v4387
        %v4474 = vunpack.c.l.b16 %v4390
        %v4475 = vunpack.c.l.b16 %v4394
        %v4476 = vunpack.c.l.b16 %v4397
        %v4477 = vunpack.c.l.b16 %v4401
        %v4478 = vunpack.c.l.b16 %v4404
        %v4479 = vunpack.c.l.b16 %v4408
        %v4480 = vunpack.c.l.b16 %v4411
        %v4481 = vunpack.c.l.b16 %v4415
        %v4482 = vunpack.c.l.b16 %v4418
        %v4483 = vunpack.c.l.b16 %v4422
        %v4484 = vunpack.c.l.b16 %v4425
        %v4485 = vunpack.c.l.b16 %v4429
        %v4486 = vunpack.c.l.b16 %v4432
        %v4487 = vunpack.c.l.b16 %v4436
        %v4488 = vunpack.c.l.b16 %v4439
        %v4489 = vunpack.c.l.b16 %v4443
        %v4490 = vunpack.c.l.b16 %v4446
        %v4491 = vunpack.c.l.b16 %v4450
        %v4492 = vunpack.c.l.b16 %v4453
        %v4493 = vunpack.c.l.b16 %v4457
        %v4494 = vunpack.c.l.b16 %v4460
        %v4495 = vpack.c.b16 %v4464, %v4463
        %v4496 = vpack.c.b16 %v4466, %v4465
        %v4497 = vpack.c.b16 %v4468, %v4467
        %v4498 = vpack.c.b16 %v4470, %v4469
        %v4499 = vpack.c.b16 %v4472, %v4471
        %v4500 = vpack.c.b16 %v4474, %v4473
        %v4501 = vpack.c.b16 %v4476, %v4475
        %v4502 = vpack.c.b16 %v4478, %v4477
        %v4503 = vpack.c.b16 %v4480, %v4479
        %v4504 = vpack.c.b16 %v4482, %v4481
        %v4505 = vpack.c.b16 %v4484, %v4483
        %v4506 = vpack.c.b16 %v4486, %v4485
        %v4507 = vpack.c.b16 %v4488, %v4487
        %v4508 = vpack.c.b16 %v4490, %v4489
        %v4509 = vpack.c.b16 %v4492, %v4491
        %v4510 = vpack.c.b16 %v4494, %v4493
        %v4512 = vsel %vm676, %v4495, 0
        %v4515 = vsel %vm676, %v4496, 0
        %v4518 = vsel %vm676, %v4497, 0
        %v4521 = vsel %vm676, %v4498, 0
        %v4524 = vsel %vm676, %v4499, 0
        %v4527 = vsel %vm676, %v4500, 0
        %v4530 = vsel %vm676, %v4501, 0
        %v4533 = vsel %vm676, %v4502, 0
        %v4536 = vsel %vm676, %v4503, 0
        %v4539 = vsel %vm676, %v4504, 0
        %v4542 = vsel %vm676, %v4505, 0
        %v4545 = vsel %vm676, %v4506, 0
        %v4548 = vsel %vm676, %v4507, 0
        %v4551 = vsel %vm676, %v4508, 0
        %v4554 = vsel %vm676, %v4509, 0
        %v4557 = vsel %vm676, %v4510, 0
        %v4560 = vsel %vm725, %v4462, 0
        %4562 = vmatprep.subr.bf16.mxu0 0
        %4563 = vmatpush1.bf16.msra.mxu0 %v4560
        %4564 = vmatprep.subr.bf16.mxu0 0
        %4565 = vmatpush1.bf16.msra.mxu0 0
        %4566 = vmatprep.subr.bf16.mxu0 0
        %4567 = vmatpush1.bf16.msra.mxu0 0
        %4568 = vmatprep.subr.bf16.mxu0 0
        %4569 = vmatpush1.bf16.msra.mxu0 0
        %4570 = vmatprep.subr.bf16.mxu0 0
        %4571 = vmatpush1.bf16.msra.mxu0 0
        %4572 = vmatprep.subr.bf16.mxu0 0
        %4573 = vmatpush1.bf16.msra.mxu0 0
        %4574 = vmatprep.subr.bf16.mxu0 0
        %4575 = vmatpush1.bf16.msra.mxu0 0
        %4576 = vmatprep.subr.bf16.mxu0 0
        %4577 = vmatpush1.bf16.msra.mxu0 0
        %4578 = vmatprep.subr.bf16.mxu0 0
        %4579 = vmatpush1.bf16.msra.mxu0 0
        %4580 = vmatprep.subr.bf16.mxu0 0
        %4581 = vmatpush1.bf16.msra.mxu0 0
        %4582 = vmatprep.subr.bf16.mxu0 0
        %4583 = vmatpush1.bf16.msra.mxu0 0
        %4584 = vmatprep.subr.bf16.mxu0 0
        %4585 = vmatpush1.bf16.msra.mxu0 0
        %4586 = vmatprep.subr.bf16.mxu0 0
        %4587 = vmatpush1.bf16.msra.mxu0 0
        %4588 = vmatprep.subr.bf16.mxu0 0
        %4589 = vmatpush1.bf16.msra.mxu0 0
        %4590 = vmatprep.subr.bf16.mxu0 0
        %4591 = vmatpush1.bf16.msra.mxu0 0
        %4592 = vmatprep.subr.bf16.mxu0 0
        %4593 = vmatpush1.bf16.msra.mxu0 0
        %4594 = vmatprep.mubr.bf16.mxu0 0
        %4595 = vmatmul.mubr.bf16.gmra.mrb[0].mxu0 %v4512
        %v4596 = vpop.f32.mrb[0].mxu0
        %v4597 = vadd.f32 0.0, %v4596
        %v4598 = vpop.f32.mrb[0].mxu0
        %v4599 = vpop.f32.mrb[0].mxu0
        %v4600 = vadd.f32 0.0, %v4599
        %v4601 = vpop.f32.mrb[0].mxu0
        %4602 = vmatprep.mubr.bf16.mxu0 0
        %4603 = vmatmul.mubr.bf16.gmra.mrb[0].mxu0 %v4515
        %v4604 = vpop.f32.mrb[0].mxu0
        %v4605 = vadd.f32 0.0, %v4604
        %v4606 = vpop.f32.mrb[0].mxu0
        %v4607 = vpop.f32.mrb[0].mxu0
        %v4608 = vadd.f32 0.0, %v4607
        %v4609 = vpop.f32.mrb[0].mxu0
        %4610 = vmatprep.mubr.bf16.mxu0 0
        %4611 = vmatmul.mubr.bf16.gmra.mrb[0].mxu0 %v4518
        %v4612 = vpop.f32.mrb[0].mxu0
        %v4613 = vadd.f32 0.0, %v4612
        %v4614 = vpop.f32.mrb[0].mxu0
        %v4615 = vpop.f32.mrb[0].mxu0
        %v4616 = vadd.f32 0.0, %v4615
        %v4617 = vpop.f32.mrb[0].mxu0
        %4618 = vmatprep.mubr.bf16.mxu0 0
        %4619 = vmatmul.mubr.bf16.gmra.mrb[0].mxu0 %v4521
        %v4620 = vpop.f32.mrb[0].mxu0
        %v4621 = vadd.f32 0.0, %v4620
        %v4622 = vpop.f32.mrb[0].mxu0
        %v4623 = vpop.f32.mrb[0].mxu0
        %v4624 = vadd.f32 0.0, %v4623
        %v4625 = vpop.f32.mrb[0].mxu0
        %4626 = vmatprep.mubr.bf16.mxu0 0
        %4627 = vmatmul.mubr.bf16.gmra.mrb[0].mxu0 %v4524
        %v4628 = vpop.f32.mrb[0].mxu0
        %v4629 = vadd.f32 0.0, %v4628
        %v4630 = vpop.f32.mrb[0].mxu0
        %v4631 = vpop.f32.mrb[0].mxu0
        %v4632 = vadd.f32 0.0, %v4631
        %v4633 = vpop.f32.mrb[0].mxu0
        %4634 = vmatprep.mubr.bf16.mxu0 0
        %4635 = vmatmul.mubr.bf16.gmra.mrb[0].mxu0 %v4527
        %v4636 = vpop.f32.mrb[0].mxu0
        %v4637 = vadd.f32 0.0, %v4636
        %v4638 = vpop.f32.mrb[0].mxu0
        %v4639 = vpop.f32.mrb[0].mxu0
        %v4640 = vadd.f32 0.0, %v4639
        %v4641 = vpop.f32.mrb[0].mxu0
        %4642 = vmatprep.mubr.bf16.mxu0 0
        %4643 = vmatmul.mubr.bf16.gmra.mrb[0].mxu0 %v4530
        %v4644 = vpop.f32.mrb[0].mxu0
        %v4645 = vadd.f32 0.0, %v4644
        %v4646 = vpop.f32.mrb[0].mxu0
        %v4647 = vpop.f32.mrb[0].mxu0
        %v4648 = vadd.f32 0.0, %v4647
        %v4649 = vpop.f32.mrb[0].mxu0
        %4650 = vmatprep.mubr.bf16.mxu0 0
        %4651 = vmatmul.mubr.bf16.gmra.mrb[0].mxu0 %v4533
        %v4652 = vpop.f32.mrb[0].mxu0
        %v4653 = vadd.f32 0.0, %v4652
        %v4654 = vpop.f32.mrb[0].mxu0
        %v4655 = vpop.f32.mrb[0].mxu0
        %v4656 = vadd.f32 0.0, %v4655
        %v4657 = vpop.f32.mrb[0].mxu0
        %4658 = vmatprep.mubr.bf16.mxu0 0
        %4659 = vmatmul.mubr.bf16.gmra.mrb[0].mxu0 %v4536
        %v4660 = vpop.f32.mrb[0].mxu0
        %v4661 = vadd.f32 0.0, %v4660
        %v4662 = vpop.f32.mrb[0].mxu0
        %v4663 = vpop.f32.mrb[0].mxu0
        %v4664 = vadd.f32 0.0, %v4663
        %v4665 = vpop.f32.mrb[0].mxu0
        %4666 = vmatprep.mubr.bf16.mxu0 0
        %4667 = vmatmul.mubr.bf16.gmra.mrb[0].mxu0 %v4539
        %v4668 = vpop.f32.mrb[0].mxu0
        %v4669 = vadd.f32 0.0, %v4668
        %v4670 = vpop.f32.mrb[0].mxu0
        %v4671 = vpop.f32.mrb[0].mxu0
        %v4672 = vadd.f32 0.0, %v4671
        %v4673 = vpop.f32.mrb[0].mxu0
        %4674 = vmatprep.mubr.bf16.mxu0 0
        %4675 = vmatmul.mubr.bf16.gmra.mrb[0].mxu0 %v4542
        %v4676 = vpop.f32.mrb[0].mxu0
        %v4677 = vadd.f32 0.0, %v4676
        %v4678 = vpop.f32.mrb[0].mxu0
        %v4679 = vpop.f32.mrb[0].mxu0
        %v4680 = vadd.f32 0.0, %v4679
        %v4681 = vpop.f32.mrb[0].mxu0
        %4682 = vmatprep.mubr.bf16.mxu0 0
        %4683 = vmatmul.mubr.bf16.gmra.mrb[0].mxu0 %v4545
        %v4684 = vpop.f32.mrb[0].mxu0
        %v4685 = vadd.f32 0.0, %v4684
        %v4686 = vpop.f32.mrb[0].mxu0
        %v4687 = vpop.f32.mrb[0].mxu0
        %v4688 = vadd.f32 0.0, %v4687
        %v4689 = vpop.f32.mrb[0].mxu0
        %4690 = vmatprep.mubr.bf16.mxu0 0
        %4691 = vmatmul.mubr.bf16.gmra.mrb[0].mxu0 %v4548
        %v4692 = vpop.f32.mrb[0].mxu0
        %v4693 = vadd.f32 0.0, %v4692
        %v4694 = vpop.f32.mrb[0].mxu0
        %v4695 = vpop.f32.mrb[0].mxu0
        %v4696 = vadd.f32 0.0, %v4695
        %v4697 = vpop.f32.mrb[0].mxu0
        %4698 = vmatprep.mubr.bf16.mxu0 0
        %4699 = vmatmul.mubr.bf16.gmra.mrb[0].mxu0 %v4551
        %v4700 = vpop.f32.mrb[0].mxu0
        %v4701 = vadd.f32 0.0, %v4700
        %v4702 = vpop.f32.mrb[0].mxu0
        %v4703 = vpop.f32.mrb[0].mxu0
        %v4704 = vadd.f32 0.0, %v4703
        %v4705 = vpop.f32.mrb[0].mxu0
        %4706 = vmatprep.mubr.bf16.mxu0 0
        %4707 = vmatmul.mubr.bf16.gmra.mrb[0].mxu0 %v4554
        %v4708 = vpop.f32.mrb[0].mxu0
        %v4709 = vadd.f32 0.0, %v4708
        %v4710 = vpop.f32.mrb[0].mxu0
        %v4711 = vpop.f32.mrb[0].mxu0
        %v4712 = vadd.f32 0.0, %v4711
        %v4713 = vpop.f32.mrb[0].mxu0
        %4714 = vmatprep.mubr.bf16.mxu0 0
        %4715 = vmatmul.mubr.bf16.gmra.mrb[0].mxu0 %v4557
        %v4716 = vpop.f32.mrb[0].mxu0
        %v4717 = vadd.f32 0.0, %v4716
        %v4718 = vpop.f32.mrb[0].mxu0
        %v4719 = vpop.f32.mrb[0].mxu0
        %v4720 = vadd.f32 0.0, %v4719
        %v4721 = vpop.f32.mrb[0].mxu0
        %4722 = vdwg.mxu0
        %v4723 = vadd.f32 %v4253, %v4597
        %v4724 = vadd.f32 %v4254, %v4600
        %v4725 = vadd.f32 %v4255, %v4605
        %v4726 = vadd.f32 %v4256, %v4608
        %v4727 = vadd.f32 %v4257, %v4613
        %v4728 = vadd.f32 %v4258, %v4616
        %v4729 = vadd.f32 %v4259, %v4621
        %v4730 = vadd.f32 %v4260, %v4624
        %v4731 = vadd.f32 %v4261, %v4629
        %v4732 = vadd.f32 %v4262, %v4632
        %v4733 = vadd.f32 %v4263, %v4637
        %v4734 = vadd.f32 %v4264, %v4640
        %v4735 = vadd.f32 %v4265, %v4645
        %v4736 = vadd.f32 %v4266, %v4648
        %v4737 = vadd.f32 %v4267, %v4653
        %v4738 = vadd.f32 %v4268, %v4656
        %v4739 = vadd.f32 %v4269, %v4661
        %v4740 = vadd.f32 %v4270, %v4664
        %v4741 = vadd.f32 %v4271, %v4669
        %v4742 = vadd.f32 %v4272, %v4672
        %v4743 = vadd.f32 %v4273, %v4677
        %v4744 = vadd.f32 %v4274, %v4680
        %v4745 = vadd.f32 %v4275, %v4685
        %v4746 = vadd.f32 %v4276, %v4688
        %v4747 = vadd.f32 %v4277, %v4693
        %v4748 = vadd.f32 %v4278, %v4696
        %v4749 = vadd.f32 %v4279, %v4701
        %v4750 = vadd.f32 %v4280, %v4704
        %v4751 = vadd.f32 %v4281, %v4709
        %v4752 = vadd.f32 %v4282, %v4712
        %v4753 = vadd.f32 %v4283, %v4717
        %v4754 = vadd.f32 %v4284, %v4720
        %v4756 = vlaneseq
        %v4757 = vshrl.u32 %v4756, 7
        %v4758 = vsub.s32 0, %v4757
        %v4759 = vrot.slane %v186, %v4758
        %v4761 = vadd.f32 %v4723, %v4759
        %v4762 = vadd.f32 %v4724, %v4759
        %v4763 = vadd.f32 %v4725, %v4759
        %v4764 = vadd.f32 %v4726, %v4759
        %v4765 = vadd.f32 %v4727, %v4759
        %v4766 = vadd.f32 %v4728, %v4759
        %v4767 = vadd.f32 %v4729, %v4759
        %v4768 = vadd.f32 %v4730, %v4759
        %v4769 = vadd.f32 %v4731, %v4759
        %v4770 = vadd.f32 %v4732, %v4759
        %v4771 = vadd.f32 %v4733, %v4759
        %v4772 = vadd.f32 %v4734, %v4759
        %v4773 = vadd.f32 %v4735, %v4759
        %v4774 = vadd.f32 %v4736, %v4759
        %v4775 = vadd.f32 %v4737, %v4759
        %v4776 = vadd.f32 %v4738, %v4759
        %v4777 = vadd.f32 %v4739, %v4759
        %v4778 = vadd.f32 %v4740, %v4759
        %v4779 = vadd.f32 %v4741, %v4759
        %v4780 = vadd.f32 %v4742, %v4759
        %v4781 = vadd.f32 %v4743, %v4759
        %v4782 = vadd.f32 %v4744, %v4759
        %v4783 = vadd.f32 %v4745, %v4759
        %v4784 = vadd.f32 %v4746, %v4759
        %v4785 = vadd.f32 %v4747, %v4759
        %v4786 = vadd.f32 %v4748, %v4759
        %v4787 = vadd.f32 %v4749, %v4759
        %v4788 = vadd.f32 %v4750, %v4759
        %v4789 = vadd.f32 %v4751, %v4759
        %v4790 = vadd.f32 %v4752, %v4759
        %v4791 = vadd.f32 %v4753, %v4759
        %v4792 = vadd.f32 %v4754, %v4759
        %v4793 = vpack.c.bf16 %v4762, %v4761
        %v4794 = vpack.c.bf16 %v4764, %v4763
        %v4795 = vpack.c.bf16 %v4766, %v4765
        %v4796 = vpack.c.bf16 %v4768, %v4767
        %v4797 = vpack.c.bf16 %v4770, %v4769
        %v4798 = vpack.c.bf16 %v4772, %v4771
        %v4799 = vpack.c.bf16 %v4774, %v4773
        %v4800 = vpack.c.bf16 %v4776, %v4775
        %v4801 = vpack.c.bf16 %v4778, %v4777
        %v4802 = vpack.c.bf16 %v4780, %v4779
        %v4803 = vpack.c.bf16 %v4782, %v4781
        %v4804 = vpack.c.bf16 %v4784, %v4783
        %v4805 = vpack.c.bf16 %v4786, %v4785
        %v4806 = vpack.c.bf16 %v4788, %v4787
        %v4807 = vpack.c.bf16 %v4790, %v4789
        %v4808 = vpack.c.bf16 %v4792, %v4791
        %v4825 = vunpack.c.l.b16 %v4793
        %v4826 = vunpack.c.h.b16 %v4793
        %v4827 = vunpack.c.l.b16 %v4794
        %v4828 = vunpack.c.h.b16 %v4794
        %v4829 = vunpack.c.l.b16 %v4795
        %v4830 = vunpack.c.h.b16 %v4795
        %v4831 = vunpack.c.l.b16 %v4796
        %v4832 = vunpack.c.h.b16 %v4796
        %v4833 = vunpack.c.l.b16 %v4797
        %v4834 = vunpack.c.h.b16 %v4797
        %v4835 = vunpack.c.l.b16 %v4798
        %v4836 = vunpack.c.h.b16 %v4798
        %v4837 = vunpack.c.l.b16 %v4799
        %v4838 = vunpack.c.h.b16 %v4799
        %v4839 = vunpack.c.l.b16 %v4800
        %v4840 = vunpack.c.h.b16 %v4800
        %v4841 = vunpack.c.l.b16 %v4801
        %v4842 = vunpack.c.h.b16 %v4801
        %v4843 = vunpack.c.l.b16 %v4802
        %v4844 = vunpack.c.h.b16 %v4802
        %v4845 = vunpack.c.l.b16 %v4803
        %v4846 = vunpack.c.h.b16 %v4803
        %v4847 = vunpack.c.l.b16 %v4804
        %v4848 = vunpack.c.h.b16 %v4804
        %v4849 = vunpack.c.l.b16 %v4805
        %v4850 = vunpack.c.h.b16 %v4805
        %v4851 = vunpack.c.l.b16 %v4806
        %v4852 = vunpack.c.h.b16 %v4806
        %v4853 = vunpack.c.l.b16 %v4807
        %v4854 = vunpack.c.h.b16 %v4807
        %v4855 = vunpack.c.l.b16 %v4808
        %v4856 = vunpack.c.h.b16 %v4808
        %v4857 = vpack.c.b16 %v4825, %v4825
        %v4858 = vpack.c.b16 %v4826, %v4826
        %v4859 = vpack.c.b16 %v4827, %v4827
        %v4860 = vpack.c.b16 %v4828, %v4828
        %v4861 = vpack.c.b16 %v4829, %v4829
        %v4862 = vpack.c.b16 %v4830, %v4830
        %v4863 = vpack.c.b16 %v4831, %v4831
        %v4864 = vpack.c.b16 %v4832, %v4832
        %v4865 = vpack.c.b16 %v4833, %v4833
        %v4866 = vpack.c.b16 %v4834, %v4834
        %v4867 = vpack.c.b16 %v4835, %v4835
        %v4868 = vpack.c.b16 %v4836, %v4836
        %v4869 = vpack.c.b16 %v4837, %v4837
        %v4870 = vpack.c.b16 %v4838, %v4838
        %v4871 = vpack.c.b16 %v4839, %v4839
        %v4872 = vpack.c.b16 %v4840, %v4840
        %v4873 = vpack.c.b16 %v4841, %v4841
        %v4874 = vpack.c.b16 %v4842, %v4842
        %v4875 = vpack.c.b16 %v4843, %v4843
        %v4876 = vpack.c.b16 %v4844, %v4844
        %v4877 = vpack.c.b16 %v4845, %v4845
        %v4878 = vpack.c.b16 %v4846, %v4846
        %v4879 = vpack.c.b16 %v4847, %v4847
        %v4880 = vpack.c.b16 %v4848, %v4848
        %v4881 = vpack.c.b16 %v4849, %v4849
        %v4882 = vpack.c.b16 %v4850, %v4850
        %v4883 = vpack.c.b16 %v4851, %v4851
        %v4884 = vpack.c.b16 %v4852, %v4852
        %v4885 = vpack.c.b16 %v4853, %v4853
        %v4886 = vpack.c.b16 %v4854, %v4854
        %v4887 = vpack.c.b16 %v4855, %v4855
        %v4888 = vpack.c.b16 %v4856, %v4856
        %vm4921 = vcmask 125952
        %4922 = vst.msk [vmem:[%s177] sm:$0xf] %vm4921, %v4857
        %4923 = vst.msk [vmem:[%s177 + $0x4] sm:$0xf] %vm4921, %v4858
        %4924 = vst.msk [vmem:[%s177 + $0x8] sm:$0xf] %vm4921, %v4859
        %4925 = vst.msk [vmem:[%s177 + $0xc] sm:$0xf] %vm4921, %v4860
        %4926 = vst.msk [vmem:[%s177 + $0x10] sm:$0xf] %vm4921, %v4861
        %4927 = vst.msk [vmem:[%s177 + $0x14] sm:$0xf] %vm4921, %v4862
        %4928 = vst.msk [vmem:[%s177 + $0x18] sm:$0xf] %vm4921, %v4863
        %4929 = vst.msk [vmem:[%s177 + $0x1c] sm:$0xf] %vm4921, %v4864
        %4930 = vst.msk [vmem:[%s177 + $0x20] sm:$0xf] %vm4921, %v4865
        %4931 = vst.msk [vmem:[%s177 + $0x24] sm:$0xf] %vm4921, %v4866
        %4932 = vst.msk [vmem:[%s177 + $0x28] sm:$0xf] %vm4921, %v4867
        %4933 = vst.msk [vmem:[%s177 + $0x2c] sm:$0xf] %vm4921, %v4868
        %4934 = vst.msk [vmem:[%s177 + $0x30] sm:$0xf] %vm4921, %v4869
        %4935 = vst.msk [vmem:[%s177 + $0x34] sm:$0xf] %vm4921, %v4870
        %4936 = vst.msk [vmem:[%s177 + $0x38] sm:$0xf] %vm4921, %v4871
        %4937 = vst.msk [vmem:[%s177 + $0x3c] sm:$0xf] %vm4921, %v4872
        %4938 = vst.msk [vmem:[%s177 + $0x40] sm:$0xf] %vm4921, %v4873
        %4939 = vst.msk [vmem:[%s177 + $0x44] sm:$0xf] %vm4921, %v4874
        %4940 = vst.msk [vmem:[%s177 + $0x48] sm:$0xf] %vm4921, %v4875
        %4941 = vst.msk [vmem:[%s177 + $0x4c] sm:$0xf] %vm4921, %v4876
        %4942 = vst.msk [vmem:[%s177 + $0x50] sm:$0xf] %vm4921, %v4877
        %4943 = vst.msk [vmem:[%s177 + $0x54] sm:$0xf] %vm4921, %v4878
        %4944 = vst.msk [vmem:[%s177 + $0x58] sm:$0xf] %vm4921, %v4879
        %4945 = vst.msk [vmem:[%s177 + $0x5c] sm:$0xf] %vm4921, %v4880
        %4946 = vst.msk [vmem:[%s177 + $0x60] sm:$0xf] %vm4921, %v4881
        %4947 = vst.msk [vmem:[%s177 + $0x64] sm:$0xf] %vm4921, %v4882
        %4948 = vst.msk [vmem:[%s177 + $0x68] sm:$0xf] %vm4921, %v4883
        %4949 = vst.msk [vmem:[%s177 + $0x6c] sm:$0xf] %vm4921, %v4884
        %4950 = vst.msk [vmem:[%s177 + $0x70] sm:$0xf] %vm4921, %v4885
        %4951 = vst.msk [vmem:[%s177 + $0x74] sm:$0xf] %vm4921, %v4886
        %4952 = vst.msk [vmem:[%s177 + $0x78] sm:$0xf] %vm4921, %v4887
        %4953 = vst.msk [vmem:[%s177 + $0x7c] sm:$0xf] %vm4921, %v4888
        %s4954 = sand.u32 %s107, 1
        %s4955 = scalar_lea.sflag [#allocation3], %s4954
        %s4956 = sand.u32 %s107, 1
        %s4957 = smul.addr %s4956, 128
        %s4958 = scalar_lea.vmem [#allocation2], %s4957
        // Predicated region
        $region33: #{tpu_custom_call.1} parent=31 // pred_check
          %p4959 = pneg %p117
        $region34: #{tpu_custom_call.1} parent=31 // pred_check_branch
          %4961 = sbr.rel (%p4959) target = $region36
        $region35: #{tpu_custom_call.1} parent=31 // pred_region
          %s4962 = smul.u32 16, %s22
          %s4964 = ssub.s32 2048, 2048
          %4965 = vsyncadd %s4955, %s4964
          %s4966 = smul.addr %s4962, 2
          %s4967 = smul.addr %s21, 32
          %s4968 = sadd.s32 %s4966, %s4967
          %s4969 = smul.addr %s4968, 64
          %s4970 = scalar_lea.hbm %s3, %s4969
          %s4971 = sshll.u32 %s4958, 4
          %s4972 = int_to_ptr.vmem [resolvable:$true] %s4971
          %4977 = dma.vmem_to_hbm [thread:$0]  %s4972, 2048, %s4970, %s4955, 64, 64, 4
        $region36: #{tpu_custom_call.1} parent=31 // pred_fallthru
          _
      $region32: #{tpu_custom_call.1} parent=5 // pred_fallthru
        _
      %p4978 = scmp.le.s32.totalorder 2, %s12
      // Predicated region
      $region37: #{tpu_custom_call.1} parent=5 // pred_check
        %p4979 = pneg %p4978
      $region38: #{tpu_custom_call.1} parent=5 // pred_check_branch
        %4981 = sbr.rel (%p4979) target = $region40
      $region39: #{tpu_custom_call.1} parent=5 // pred_region
        %s4982 = ssub.s32 %s12, 2
        // Predicated region
        $region41: #{tpu_custom_call.1} parent=39 // pred_check
          %p4983 = pneg %p123
        $region42: #{tpu_custom_call.1} parent=39 // pred_check_branch
          %4985 = sbr.rel (%p4983) target = $region44
        $region43: #{tpu_custom_call.1} parent=39 // pred_region
          %s4986 = sand.u32 %s108, 1
          %s4987 = scalar_lea.sflag [#allocation3], %s4986
          %s4988 = sand.u32 %s108, 1
          %s4989 = smul.addr %s4988, 128
          %s4990 = scalar_lea.vmem [#allocation2], %s4989
          %4991 = dma.done %s4987, 2048
        $region44: #{tpu_custom_call.1} parent=39 // pred_fallthru
          _
      $region40: #{tpu_custom_call.1} parent=5 // pred_fallthru
        _
    $region6: #{tpu_custom_call.1} parent=1 // loop_footer
      %s16 = sadd.s32 1, %s12
    $region7: #{tpu_custom_call.1} parent=1 // loop_footer_branch
      %11 = sbr.rel target = $region3
    $region8: #{tpu_custom_call.1} parent=1 // loop_exit
      _
    %4992 = vsyncpa [#allocation3], 1
    %s4993 = scalar_lea.sflag [#allocation3], 1
    %4994 = vsyncpa %s4993, 1

</llo_original>
